<compile_context>
chip_gen: v7x
topology: tpu7x:2x2x1
jax: 0.10.0
libtpu: 0.0.40
codegen_flags: <defaults>
</compile_context>

<pallas_src>
import functools

import numpy as np
import jax
import jax.numpy as jnp
from jax import lax
from jax.experimental import pallas as pl
from jax.experimental.pallas import tpu as pltpu


# ---------------------------------------------------------------------------
# Kernel 1: fused head (conv3x3+BN+ReLU -> convT+BN+ReLU -> convT), both
# branches at once.  One grid step = one (batch, row-tile).
# ---------------------------------------------------------------------------
def _head_kernel(xa_ref, xb_ref, w1_ref, s1_ref, t1_ref,
                 w2p_ref, s2p_ref, t2p_ref, w2t_ref, s2t_ref, t2t_ref,
                 w3_ref, b3_ref, w3s_ref, prob_ref, tsum_ref,
                 *, tile_h, width, cin, co):
    # assemble the (tile_h+2)-row halo window from the two blocked streams
    xw = jnp.concatenate([xa_ref[0], xb_ref[0]], axis=0)  # (tile_h+2, W+2, Cin)

    m = tile_h * width
    w1 = w1_ref[...]                                       # (9*Cin, 2*Co) bf16

    # Conv2d(k=3, pad=1): nine accumulating MXU dots (no im2col concat)
    y1 = None
    for dh in range(3):
        for dw in range(3):
            k = dh * 3 + dw
            tap = xw[dh:dh + tile_h, dw:dw + width, :].reshape(m, cin)
            part = jnp.dot(tap, w1[k * cin:(k + 1) * cin, :],
                           preferred_element_type=jnp.float32)
            y1 = part if y1 is None else y1 + part         # (M, 2*Co) f32

    # folded BN1 + ReLU, then split prob / thresh lanes
    y1 = jnp.maximum(y1 * s1_ref[...] + t1_ref[...], 0.0)
    y1p = y1[:, :co].astype(jnp.bfloat16)
    y1t = y1[:, co:].astype(jnp.bfloat16)

    # ConvTranspose2d(Co, Co, 2, 2) + folded BN2 + ReLU (per branch)
    y2p = jnp.dot(y1p, w2p_ref[...], preferred_element_type=jnp.float32)
    y2p = jnp.maximum(y2p * s2p_ref[...] + t2p_ref[...], 0.0)        # (M, 4Co)
    y2t = jnp.dot(y1t, w2t_ref[...], preferred_element_type=jnp.float32)
    y2t = jnp.maximum(y2t * s2t_ref[...] + t2t_ref[...], 0.0)        # (M, 4Co)

    # prob branch: composed ConvTranspose2d(Co, 1, 2, 2) -> 16 subpixels/pixel
    # (column order cs-major: col = 4*cs + rs) + Sigmoid
    y3 = jnp.dot(y2p.astype(jnp.bfloat16), w3_ref[...],
                 preferred_element_type=jnp.float32) + b3_ref[...]
    y3 = jax.nn.sigmoid(y3)                                           # (M, 16)

    # lane-dense quarter-pixel layout: probq[h, 4*cs+rs, w].  Kernel 2's resize
    # matrices absorb this permutation, so no pixel-shuffle pass is needed.
    y3t = y3.T.astype(prob_ref.dtype)                                 # (16, M)
    for h in range(tile_h):
        prob_ref[0, h] = y3t[:, h * width:(h + 1) * width]

    # thresh branch: AdaptiveAvgPool(1) folded into a per-tile partial sum of
    # the 16 composed outputs (convT2 bias is added in the wrapper).
    ts = jnp.sum(y2t * w3s_ref[...])
    tsum_ref[...] = jnp.broadcast_to(ts, (1, 1, 1, 1))


# ---------------------------------------------------------------------------
# Kernel 2: bilinear resize (from the quarter-pixel layout) + differentiable
# binarization + 9x9/stride-1/pad-4 max-pool, one batch element per grid step.
# ---------------------------------------------------------------------------
def _resize_bin_pool_kernel(probq_ref, wh_ref, wwt_ref, thr_ref,
                            prob_ref, bin_ref, *, H, W, hs, ws):
    pq = probq_ref[0]                                      # (H, 16, W) bf16

    # column resize: contract (w, cs) with 4 accumulating bf16 matmuls
    u = None
    for cs in range(4):
        b2d = pq[:, 4 * cs:4 * cs + 4, :].reshape(4 * H, W)           # (4H, W)
        part = jnp.dot(b2d, wwt_ref[cs], preferred_element_type=jnp.float32)
        u = part if u is None else u + part                           # (4H, Ws)

    # row resize
    p = jnp.dot(wh_ref[...], u.astype(jnp.bfloat16),
                preferred_element_type=jnp.float32)                   # (Hs, Ws)
    prob_ref[0] = p

    # 1/(1+exp(-50*(p - t))) == sigmoid(50*(p - t)); threshold scalar in SMEM
    b = jax.nn.sigmoid(50.0 * (p - thr_ref[0, 0, 0]))

    # 9x9 max pool (stride 1, pad 4): log-tree of shifted maxima per axis
    neg = jnp.float32(-jnp.inf)
    xw = jnp.concatenate([jnp.full((hs, 4), neg, jnp.float32), b,
                          jnp.full((hs, 4), neg, jnp.float32)], axis=1)
    a = jnp.maximum(xw[:, :-1], xw[:, 1:])        # window 2
    a = jnp.maximum(a[:, :-2], a[:, 2:])          # window 4
    a = jnp.maximum(a[:, :-4], a[:, 4:])          # window 8
    rowm = jnp.maximum(a[:, :-1], xw[:, 8:])      # window 9 -> (Hs, Ws)

    xh = jnp.concatenate([jnp.full((4, ws), neg, jnp.float32), rowm,
                          jnp.full((4, ws), neg, jnp.float32)], axis=0)
    a = jnp.maximum(xh[:-1, :], xh[1:, :])
    a = jnp.maximum(a[:-2, :], a[2:, :])
    a = jnp.maximum(a[:-4, :], a[4:, :])
    bin_ref[0] = jnp.maximum(a[:-1, :], xh[8:, :])                    # (Hs, Ws)


# ---------------------------------------------------------------------------
# Weight preparation (BN folding, convT composition, branch fusion)
# ---------------------------------------------------------------------------
def _fold_bn(gamma, beta, mean, var, conv_bias, eps=1e-5):
    scale = gamma / jnp.sqrt(var + eps)
    shift = beta + (conv_bias - mean) * scale
    return scale, shift


def _branch_matrices(p):
    co, cin = p["conv1_w"].shape[0], p["conv1_w"].shape[1]
    # conv3x3: (Co, Cin, 3, 3) -> (9*Cin, Co), row order (dh, dw, cin)
    w1 = jnp.transpose(p["conv1_w"], (2, 3, 1, 0)).reshape(9 * cin, co)
    s1, t1 = _fold_bn(p["bn1_gamma"], p["bn1_beta"], p["bn1_mean"],
                      p["bn1_var"], p["conv1_b"])
    # convT1: (Ci, Co, 2, 2) -> (Ci, 4*Co), column order (kh, kw, co)
    w2 = jnp.transpose(p["convT1_w"], (0, 2, 3, 1)).reshape(co, 4 * co)
    s2, t2 = _fold_bn(p["bn2_gamma"], p["bn2_beta"], p["bn2_mean"],
                      p["bn2_var"], p["convT1_b"])
    s2 = jnp.tile(s2, 4)
    t2 = jnp.tile(t2, 4)
    # convT2 (Co, 1, 2, 2) composed with convT1's 2x2 positions -> (4*Co, 16),
    # output column order cs-major: col = 4*(2*kw+kw2) + (2*kh+kh2)
    small = p["convT2_w"][:, 0]                         # (Co, 2, 2)
    w3 = jnp.zeros((4 * co, 16), jnp.float32)
    for kh in range(2):
        for kw in range(2):
            blk = kh * 2 + kw
            for kh2 in range(2):
                for kw2 in range(2):
                    col = (kw * 2 + kw2) * 4 + (kh * 2 + kh2)
                    w3 = w3.at[blk * co:(blk + 1) * co, col].set(small[:, kh2, kw2])
    # column-sum of the composed convT2 map (avg-pooled thresh branch)
    w3s = jnp.tile(jnp.sum(small, axis=(1, 2)), 4)      # (4*Co,)
    return dict(w1=w1, s1=s1, t1=t1, w2=w2, s2=s2, t2=t2, w3=w3, w3s=w3s,
                b_out=p["convT2_b"][0])


def _fused_head_weights(params):
    pm = _branch_matrices(params["prob"])
    tm = _branch_matrices(params["thresh"])
    co = params["prob"]["conv1_w"].shape[0]
    w1 = jnp.concatenate([pm["w1"], tm["w1"]], axis=1).astype(jnp.bfloat16)
    s1 = jnp.concatenate([pm["s1"], tm["s1"]]).reshape(1, 2 * co)
    t1 = jnp.concatenate([pm["t1"], tm["t1"]]).reshape(1, 2 * co)
    w2p = pm["w2"].astype(jnp.bfloat16)
    w2t = tm["w2"].astype(jnp.bfloat16)
    s2p = pm["s2"].reshape(1, 4 * co)
    t2p = pm["t2"].reshape(1, 4 * co)
    s2t = tm["s2"].reshape(1, 4 * co)
    t2t = tm["t2"].reshape(1, 4 * co)
    w3 = pm["w3"].astype(jnp.bfloat16)
    b3 = jnp.full((1, 16), pm["b_out"], jnp.float32)
    w3s = tm["w3s"].reshape(1, 4 * co)
    return (w1, s1, t1, w2p, s2p, t2p, w2t, s2t, t2t, w3, b3, w3s), tm["b_out"]


def _bilinear_matrix(out_size, in_size):
    # PyTorch F.interpolate(mode='bilinear', align_corners=False) index rule
    scale = in_size / out_size
    i = np.arange(out_size, dtype=np.float64)
    s = np.maximum((i + 0.5) * scale - 0.5, 0.0)
    i0 = np.floor(s).astype(np.int64)
    lam = s - i0
    i1 = np.minimum(i0 + 1, in_size - 1)
    i0 = np.minimum(i0, in_size - 1)
    w = np.zeros((out_size, in_size), np.float32)
    w[np.arange(out_size), i0] += (1.0 - lam).astype(np.float32)
    w[np.arange(out_size), i1] += lam.astype(np.float32)
    return w


def _pick_tile_h(H, W, cin, co, budget_bytes=8 * 1024 * 1024, max_tile=64):
    """Largest even row tile whose per-step working set (accounting for 128-lane
    / 8-sublane VMEM padding) fits a conservative budget that is safe on v5e/v6e
    (128 MiB) and v7x (64 MiB).  Falls back to the smallest even divisor of H.
    On v5e/v6e the caller may pass a larger explicit tile_h to amortize the
    ~0.35us per-grid-step overhead."""
    def lanes(n):
        return ((n + 127) // 128) * 128

    def subl(n):
        return ((n + 7) // 8) * 8

    smallest = None
    for t in range(H, 0, -1):
        if H % t or t % 2 or t > max_tile:
            continue
        smallest = t
        m = t * W
        est = 0
        # double-buffered bf16 input streams (t body rows + 2 halo rows)
        est += 2 * 2 * (t + 2) * subl(W + 2) * lanes(cin)
        # in-kernel halo concat + live im2col taps (bf16)
        est += 2 * (t + 2) * subl(W + 2) * lanes(cin)
        est += 2 * 2 * subl(m) * lanes(cin)
        # f32 activations y1 / y2p / y2t / y3 / y3^T
        est += 4 * subl(m) * lanes(2 * co)
        est += 2 * 4 * subl(m) * lanes(4 * co)
        est += 4 * subl(m) * lanes(16) + 4 * subl(16) * lanes(m)
        # double-buffered bf16 prob output block (t, 16, W)
        est += 2 * 2 * t * subl(16) * lanes(W)
        if est <= budget_bytes:
            return t
    if smallest is None:
        raise ValueError("H must be even for halo row tiling")
    return smallest


# ---------------------------------------------------------------------------
# Forward
# ---------------------------------------------------------------------------
@functools.partial(jax.jit, static_argnames=("shape", "tile_h"))
def db_head_forward(x_nchw, params, shape, tile_h=None):
    N, cin, H, W = x_nchw.shape
    co = params["prob"]["conv1_w"].shape[0]
    hs, ws = int(shape[0]), int(shape[1])

    # layout prep: NCHW -> NHWC, cast to bf16 ONCE, then +1 spatial halo pad
    x_nhwc = jnp.transpose(x_nchw, (0, 2, 3, 1)).astype(jnp.bfloat16)
    x_pad = jnp.pad(x_nhwc, ((0, 0), (1, 1), (1, 1), (0, 0)))

    if tile_h is None:
        tile_h = _pick_tile_h(H, W, cin, co)
    assert H % tile_h == 0 and tile_h % 2 == 0, \
        "tile_h must be an even divisor of H"
    tiles_h = H // tile_h
    half_th = tile_h // 2

    (w1, s1, t1, w2p, s2p, t2p, w2t, s2t, t2t, w3, b3, w3s), thresh_bias = \
        _fused_head_weights(params)

    def _bcast_spec(shp):
        zeros = (0,) * len(shp)
        return pl.BlockSpec(shp, lambda n, t: zeros)

    kern = functools.partial(_head_kernel, tile_h=tile_h, width=W, cin=cin, co=co)
    probq, tsum = pl.pallas_call(
        kern,
        out_shape=(jax.ShapeDtypeStruct((N, H, 16, W), jnp.bfloat16),
                   jax.ShapeDtypeStruct((N, tiles_h, 1, 1), jnp.float32)),
        grid=(N, tiles_h),
        in_specs=[
            # body rows [t*tile_h, (t+1)*tile_h) of the padded input
            pl.BlockSpec((1, tile_h, W + 2, cin), lambda n, t: (n, t, 0, 0)),
            # 2-row bottom halo [(t+1)*tile_h, (t+1)*tile_h + 2)
            pl.BlockSpec((1, 2, W + 2, cin),
                         lambda n, t: (n, (t + 1) * half_th, 0, 0)),
            _bcast_spec((9 * cin, 2 * co)),
            _bcast_spec((1, 2 * co)),
            _bcast_spec((1, 2 * co)),
            _bcast_spec((co, 4 * co)),
            _bcast_spec((1, 4 * co)),
            _bcast_spec((1, 4 * co)),
            _bcast_spec((co, 4 * co)),
            _bcast_spec((1, 4 * co)),
            _bcast_spec((1, 4 * co)),
            _bcast_spec((4 * co, 16)),
            _bcast_spec((1, 16)),
            _bcast_spec((1, 4 * co)),
        ],
        out_specs=(
            pl.BlockSpec((1, tile_h, 16, W), lambda n, t: (n, t, 0, 0)),
            pl.BlockSpec((1, 1, 1, 1), lambda n, t: (n, t, 0, 0)),
        ),
        compiler_params=pltpu.CompilerParams(
            dimension_semantics=("parallel", "parallel"),
            vmem_limit_bytes=32 * 1024 * 1024),
    )(x_pad, x_pad, w1, s1, t1, w2p, s2p, t2p, w2t, s2t, t2t, w3, b3, w3s)

    # thresh scalar: AdaptiveAvgPool(1)+Sigmoid from the fused partial sums
    n_elem = 16.0 * H * W
    total = jnp.sum(tsum[:, :, 0, 0], axis=1) + n_elem * thresh_bias
    thresh_val = jax.nn.sigmoid(total / n_elem).reshape(N, 1, 1)       # (N,1,1)

    # bilinear resize matrices (PyTorch align_corners=False), permuted to the
    # quarter-pixel layout: wh is canonical (columns = 4h+rs); the column-resize
    # matrix is split per column-subpixel cs.
    wh = jnp.asarray(_bilinear_matrix(hs, 4 * H), jnp.bfloat16)        # (Hs,4H)
    ww = _bilinear_matrix(ws, 4 * W)                                   # (Ws,4W)
    wwt_all = jnp.asarray(
        np.stack([ww[:, cs::4].T for cs in range(4)], axis=0), jnp.bfloat16)

    kern2 = functools.partial(_resize_bin_pool_kernel, H=H, W=W, hs=hs, ws=ws)
    prob_map, binary_map = pl.pallas_call(
        kern2,
        out_shape=(jax.ShapeDtypeStruct((N, hs, ws), jnp.float32),
                   jax.ShapeDtypeStruct((N, hs, ws), jnp.float32)),
        grid=(N,),
        in_specs=[
            pl.BlockSpec((1, H, 16, W), lambda n: (n, 0, 0, 0)),
            pl.BlockSpec((hs, 4 * H), lambda n: (0, 0)),
            pl.BlockSpec((4, W, ws), lambda n: (0, 0, 0)),
            pl.BlockSpec((1, 1, 1), lambda n: (n, 0, 0),
                         memory_space=pltpu.MemorySpace.SMEM),
        ],
        out_specs=(
            pl.BlockSpec((1, hs, ws), lambda n: (n, 0, 0)),
            pl.BlockSpec((1, hs, ws), lambda n: (n, 0, 0)),
        ),
        compiler_params=pltpu.CompilerParams(
            dimension_semantics=("parallel",),
            vmem_limit_bytes=32 * 1024 * 1024),
    )(probq, wh, wwt_all, thresh_val)

    return {"probMap": prob_map[:, None, :, :],
            "binaryMap": binary_map[:, None, :, :]}


# ---------------------------------------------------------------------------
# Plain-XLA reference (for a numerical sanity check)
# ---------------------------------------------------------------------------
def _bn_eval_ref(x, gamma, beta, mean, var, eps=1e-5):
    inv = gamma / jnp.sqrt(var + eps)
    return (x - mean[None, :, None, None]) * inv[None, :, None, None] \
        + beta[None, :, None, None]


def _convT2x2_ref(x, w, b):
    y = jnp.einsum('nchw,cokl->nohwkl', x, w, precision=lax.Precision.HIGHEST)
    n, c, h, wdt = y.shape[:4]
    y = y.transpose(0, 1, 2, 4, 3, 5).reshape(n, c, 2 * h, 2 * wdt)
    return y + b[None, :, None, None]


def _branch_ref(x, p):
    y = lax.conv_general_dilated(x, p["conv1_w"], (1, 1), ((1, 1), (1, 1)),
                                 dimension_numbers=("NCHW", "OIHW", "NCHW"),
                                 precision=lax.Precision.HIGHEST)
    y = y + p["conv1_b"][None, :, None, None]
    y = jnp.maximum(_bn_eval_ref(y, p["bn1_gamma"], p["bn1_beta"],
                                 p["bn1_mean"], p["bn1_var"]), 0.0)
    y = _convT2x2_ref(y, p["convT1_w"], p["convT1_b"])
    y = jnp.maximum(_bn_eval_ref(y, p["bn2_gamma"], p["bn2_beta"],
                                 p["bn2_mean"], p["bn2_var"]), 0.0)
    return _convT2x2_ref(y, p["convT2_w"], p["convT2_b"])


def _reference_forward(x, shape, params):
    pr = jax.nn.sigmoid(_branch_ref(x, params["prob"]))
    th = jax.nn.sigmoid(jnp.mean(_branch_ref(x, params["thresh"]),
                                 axis=(2, 3), keepdims=True))
    hs, ws = shape
    wh = _bilinear_matrix(hs, pr.shape[2])
    ww = _bilinear_matrix(ws, pr.shape[3])
    pm = jnp.einsum('hk,nckw->nchw', wh, pr, precision=lax.Precision.HIGHEST)
    pm = jnp.einsum('nchk,wk->nchw', pm, ww, precision=lax.Precision.HIGHEST)
    bm = jax.nn.sigmoid(50.0 * (pm - th))
    bm = lax.reduce_window(bm, -jnp.inf, lax.max, (1, 1, 9, 9), (1, 1, 1, 1),
                           ((0, 0), (0, 0), (4, 4), (4, 4)))
    return pm, bm


# ---------------------------------------------------------------------------
# Deterministic parameter init (torch-native shapes) + demo
# ---------------------------------------------------------------------------
def init_branch_params(key, exp, exp_out):
    ks = jax.random.split(key, 14)

    def nrm(k, shp, s=0.1):
        return s * jax.random.normal(k, shp, jnp.float32)

    return dict(
        conv1_w=nrm(ks[0], (exp_out, exp, 3, 3)),
        conv1_b=nrm(ks[1], (exp_out,)),
        bn1_gamma=1.0 + nrm(ks[2], (exp_out,)),
        bn1_beta=nrm(ks[3], (exp_out,)),
        bn1_mean=nrm(ks[4], (exp_out,)),
        bn1_var=1.0 + 0.1 * jax.random.uniform(ks[5], (exp_out,), jnp.float32),
        convT1_w=nrm(ks[6], (exp_out, exp_out, 2, 2)),
        convT1_b=nrm(ks[7], (exp_out,)),
        bn2_gamma=1.0 + nrm(ks[8], (exp_out,)),
        bn2_beta=nrm(ks[9], (exp_out,)),
        bn2_mean=nrm(ks[10], (exp_out,)),
        bn2_var=1.0 + 0.1 * jax.random.uniform(ks[11], (exp_out,), jnp.float32),
        convT2_w=nrm(ks[12], (exp_out, 1, 2, 2)),
        convT2_b=nrm(ks[13], (1,)),
    )


if __name__ == "__main__":
    key = jax.random.PRNGKey(0)
    exp = 16                          # DBHead(exp=16) -> exp_output = 4
    N, H, W = 2, 16, 16
    out_shape = (24, 24)

    kx, kp, kt = jax.random.split(key, 3)
    x = jax.random.normal(kx, (N, exp, H, W), jnp.float32)      # NCHW like torch
    params = {
        "prob": init_branch_params(kp, exp, exp // 4),
        "thresh": init_branch_params(kt, exp, exp // 4),
    }

    out = db_head_forward(x, params, shape=out_shape, tile_h=8)
    out = jax.block_until_ready(out)

    assert out["probMap"].shape == (N, 1, out_shape[0], out_shape[1])
    assert out["binaryMap"].shape == (N, 1, out_shape[0], out_shape[1])
    assert bool(jnp.all(jnp.isfinite(out["probMap"])))
    assert bool(jnp.all(jnp.isfinite(out["binaryMap"])))

    # numerical check vs a plain-XLA reference (kernel matmuls and the prob
    # intermediate run in bf16; binarization amplifies errors ~50x)
    ref_p, ref_b = _reference_forward(x, out_shape, params)
    assert float(jnp.max(jnp.abs(out["probMap"] - ref_p))) < 5e-2
    assert float(jnp.max(jnp.abs(out["binaryMap"] - ref_b))) < 3e-1
    print("KERNEL_OK")
</pallas_src>

<mosaic_0001>
module attributes {stable_mosaic.version = 11 : i64} {
  func.func @_resize_bin_pool_kernel(%arg0: i32, %arg1: memref<1x16x16x16xbf16, #tpu.memory_space<vmem>>, %arg2: memref<24x64xbf16, #tpu.memory_space<vmem>>, %arg3: memref<4x16x24xbf16, #tpu.memory_space<vmem>>, %arg4: memref<1x1x1xf32, #tpu.memory_space<smem>>, %arg5: memref<1x24x24xf32, #tpu.memory_space<vmem>>, %arg6: memref<1x24x24xf32, #tpu.memory_space<vmem>>) attributes {dimension_semantics = [#tpu.dimension_semantics<parallel>], iteration_bounds = array<i64: 2>, scalar_prefetch = 0 : i64, scratch_operands = 0 : i64, tpu.core_type = #tpu.core_type<tc>, window_params = [{transform_indices = @transform_0, window_bounds = array<i64: 1, 16, 16, 16>}, {pipeline_mode = #tpu.pipeline_mode<synchronous>, transform_indices = @transform_1, window_bounds = array<i64: 24, 64>}, {pipeline_mode = #tpu.pipeline_mode<synchronous>, transform_indices = @transform_2, window_bounds = array<i64: 4, 16, 24>}, {transform_indices = @transform_3, window_bounds = array<i64: 1, 1, 1>}, {transform_indices = @transform_4, window_bounds = array<i64: 1, 24, 24>}, {transform_indices = @transform_5, window_bounds = array<i64: 1, 24, 24>}]} {
    %c0 = arith.constant 0 : index
    %c0_0 = arith.constant 0 : index
    %c0_1 = arith.constant 0 : index
    %c0_2 = arith.constant 0 : index
    %0 = vector.load %arg1[%c0, %c0_0, %c0_1, %c0_2] : memref<1x16x16x16xbf16, #tpu.memory_space<vmem>>, vector<1x16x16x16xbf16>
    %1 = vector.shape_cast %0 : vector<1x16x16x16xbf16> to vector<16x16x16xbf16>
    %2 = vector.extract_strided_slice %1 {offsets = [0, 0, 0], sizes = [16, 4, 16], strides = [1, 1, 1]} : vector<16x16x16xbf16> to vector<16x4x16xbf16>
    %3 = vector.shape_cast %2 : vector<16x4x16xbf16> to vector<64x16xbf16>
    %c0_3 = arith.constant 0 : index
    %c0_4 = arith.constant 0 : index
    %c0_5 = arith.constant 0 : index
    %4 = vector.load %arg3[%c0_3, %c0_4, %c0_5] : memref<4x16x24xbf16, #tpu.memory_space<vmem>>, vector<1x16x24xbf16>
    %5 = vector.shape_cast %4 : vector<1x16x24xbf16> to vector<16x24xbf16>
    %cst = arith.constant dense<0.000000e+00> : vector<64x24xf32>
    %6 = tpu.matmul %3, %5, %cst {dimension_numbers = #tpu.dot_dimension_numbers<[1], [0], [0], [1], [0, 0, 1, 1], [], []>} : vector<64x16xbf16>, vector<16x24xbf16>, vector<64x24xf32> -> vector<64x24xf32>
    %7 = vector.extract_strided_slice %1 {offsets = [0, 4, 0], sizes = [16, 4, 16], strides = [1, 1, 1]} : vector<16x16x16xbf16> to vector<16x4x16xbf16>
    %8 = vector.shape_cast %7 : vector<16x4x16xbf16> to vector<64x16xbf16>
    %c1 = arith.constant 1 : index
    %c0_6 = arith.constant 0 : index
    %c0_7 = arith.constant 0 : index
    %9 = vector.load %arg3[%c1, %c0_6, %c0_7] : memref<4x16x24xbf16, #tpu.memory_space<vmem>>, vector<1x16x24xbf16>
    %10 = vector.shape_cast %9 : vector<1x16x24xbf16> to vector<16x24xbf16>
    %cst_8 = arith.constant dense<0.000000e+00> : vector<64x24xf32>
    %11 = tpu.matmul %8, %10, %cst_8 {dimension_numbers = #tpu.dot_dimension_numbers<[1], [0], [0], [1], [0, 0, 1, 1], [], []>} : vector<64x16xbf16>, vector<16x24xbf16>, vector<64x24xf32> -> vector<64x24xf32>
    %12 = arith.addf %6, %11 : vector<64x24xf32>
    %13 = vector.extract_strided_slice %1 {offsets = [0, 8, 0], sizes = [16, 4, 16], strides = [1, 1, 1]} : vector<16x16x16xbf16> to vector<16x4x16xbf16>
    %14 = vector.shape_cast %13 : vector<16x4x16xbf16> to vector<64x16xbf16>
    %c2 = arith.constant 2 : index
    %c0_9 = arith.constant 0 : index
    %c0_10 = arith.constant 0 : index
    %15 = vector.load %arg3[%c2, %c0_9, %c0_10] : memref<4x16x24xbf16, #tpu.memory_space<vmem>>, vector<1x16x24xbf16>
    %16 = vector.shape_cast %15 : vector<1x16x24xbf16> to vector<16x24xbf16>
    %cst_11 = arith.constant dense<0.000000e+00> : vector<64x24xf32>
    %17 = tpu.matmul %14, %16, %cst_11 {dimension_numbers = #tpu.dot_dimension_numbers<[1], [0], [0], [1], [0, 0, 1, 1], [], []>} : vector<64x16xbf16>, vector<16x24xbf16>, vector<64x24xf32> -> vector<64x24xf32>
    %18 = arith.addf %12, %17 : vector<64x24xf32>
    %19 = vector.extract_strided_slice %1 {offsets = [0, 12, 0], sizes = [16, 4, 16], strides = [1, 1, 1]} : vector<16x16x16xbf16> to vector<16x4x16xbf16>
    %20 = vector.shape_cast %19 : vector<16x4x16xbf16> to vector<64x16xbf16>
    %c3 = arith.constant 3 : index
    %c0_12 = arith.constant 0 : index
    %c0_13 = arith.constant 0 : index
    %21 = vector.load %arg3[%c3, %c0_12, %c0_13] : memref<4x16x24xbf16, #tpu.memory_space<vmem>>, vector<1x16x24xbf16>
    %22 = vector.shape_cast %21 : vector<1x16x24xbf16> to vector<16x24xbf16>
    %cst_14 = arith.constant dense<0.000000e+00> : vector<64x24xf32>
    %23 = tpu.matmul %20, %22, %cst_14 {dimension_numbers = #tpu.dot_dimension_numbers<[1], [0], [0], [1], [0, 0, 1, 1], [], []>} : vector<64x16xbf16>, vector<16x24xbf16>, vector<64x24xf32> -> vector<64x24xf32>
    %24 = arith.addf %18, %23 : vector<64x24xf32>
    %c0_15 = arith.constant 0 : index
    %c0_16 = arith.constant 0 : index
    %25 = vector.load %arg2[%c0_15, %c0_16] : memref<24x64xbf16, #tpu.memory_space<vmem>>, vector<24x64xbf16>
    %26 = arith.truncf %24 : vector<64x24xf32> to vector<64x24xbf16>
    %cst_17 = arith.constant dense<0.000000e+00> : vector<24x24xf32>
    %27 = tpu.matmul %25, %26, %cst_17 {dimension_numbers = #tpu.dot_dimension_numbers<[1], [0], [0], [1], [0, 0, 1, 1], [], []>} : vector<24x64xbf16>, vector<64x24xbf16>, vector<24x24xf32> -> vector<24x24xf32>
    %c0_18 = arith.constant 0 : index
    %c0_19 = arith.constant 0 : index
    %c0_20 = arith.constant 0 : index
    %28 = vector.load %arg5[%c0_18, %c0_19, %c0_20] : memref<1x24x24xf32, #tpu.memory_space<vmem>>, vector<1x24x24xf32>
    %29 = vector.shape_cast %28 : vector<1x24x24xf32> to vector<24x24xf32>
    %30 = vector.shape_cast %27 : vector<24x24xf32> to vector<1x24x24xf32>
    tpu.vector_store %arg5[%c0_18, %c0_19, %c0_20], %30 {strides = array<i32>} : memref<1x24x24xf32, #tpu.memory_space<vmem>>, vector<1x24x24xf32>,
    %c0_21 = arith.constant 0 : index
    %c0_22 = arith.constant 0 : index
    %c0_23 = arith.constant 0 : index
    %31 = memref.load %arg4[%c0_21, %c0_22, %c0_23] : memref<1x1x1xf32, #tpu.memory_space<smem>>
    %32 = vector.broadcast %31 : f32 to vector<24x24xf32>
    %33 = arith.subf %27, %32 : vector<24x24xf32>
    %cst_24 = arith.constant 5.000000e+01 : f32
    %34 = vector.broadcast %cst_24 : f32 to vector<24x24xf32>
    %35 = arith.mulf %34, %33 : vector<24x24xf32>
    %36 = arith.negf %35 : vector<24x24xf32>
    %37 = math.exp %36 : vector<24x24xf32>
    %cst_25 = arith.constant 1.000000e+00 : f32
    %38 = vector.broadcast %cst_25 : f32 to vector<24x24xf32>
    %39 = arith.addf %38, %37 : vector<24x24xf32>
    %40 = arith.divf %38, %39 : vector<24x24xf32>
    %cst_26 = arith.constant 0xFF800000 : f32
    %41 = vector.broadcast %cst_26 : f32 to vector<24x4xf32>
    %cst_27 = arith.constant 0xFF800000 : f32
    %42 = vector.broadcast %cst_27 : f32 to vector<24x4xf32>
    %43 = tpu.concatenate %41, %40, %42 in 1 : vector<24x4xf32>, vector<24x24xf32>, vector<24x4xf32> -> vector<24x32xf32>
    %44 = vector.extract_strided_slice %43 {offsets = [0, 0], sizes = [24, 31], strides = [1, 1]} : vector<24x32xf32> to vector<24x31xf32>
    %45 = vector.extract_strided_slice %43 {offsets = [0, 1], sizes = [24, 31], strides = [1, 1]} : vector<24x32xf32> to vector<24x31xf32>
    %46 = arith.maximumf %44, %45 : vector<24x31xf32>
    %47 = vector.extract_strided_slice %46 {offsets = [0, 0], sizes = [24, 29], strides = [1, 1]} : vector<24x31xf32> to vector<24x29xf32>
    %48 = vector.extract_strided_slice %46 {offsets = [0, 2], sizes = [24, 29], strides = [1, 1]} : vector<24x31xf32> to vector<24x29xf32>
    %49 = arith.maximumf %47, %48 : vector<24x29xf32>
    %50 = vector.extract_strided_slice %49 {offsets = [0, 0], sizes = [24, 25], strides = [1, 1]} : vector<24x29xf32> to vector<24x25xf32>
    %51 = vector.extract_strided_slice %49 {offsets = [0, 4], sizes = [24, 25], strides = [1, 1]} : vector<24x29xf32> to vector<24x25xf32>
    %52 = arith.maximumf %50, %51 : vector<24x25xf32>
    %53 = vector.extract_strided_slice %52 {offsets = [0, 0], sizes = [24, 24], strides = [1, 1]} : vector<24x25xf32> to vector<24x24xf32>
    %54 = vector.extract_strided_slice %43 {offsets = [0, 8], sizes = [24, 24], strides = [1, 1]} : vector<24x32xf32> to vector<24x24xf32>
    %55 = arith.maximumf %53, %54 : vector<24x24xf32>
    %cst_28 = arith.constant 0xFF800000 : f32
    %56 = vector.broadcast %cst_28 : f32 to vector<4x24xf32>
    %cst_29 = arith.constant 0xFF800000 : f32
    %57 = vector.broadcast %cst_29 : f32 to vector<4x24xf32>
    %58 = tpu.concatenate %56, %55, %57 in 0 : vector<4x24xf32>, vector<24x24xf32>, vector<4x24xf32> -> vector<32x24xf32>
    %59 = vector.extract_strided_slice %58 {offsets = [0, 0], sizes = [31, 24], strides = [1, 1]} : vector<32x24xf32> to vector<31x24xf32>
    %60 = vector.extract_strided_slice %58 {offsets = [1, 0], sizes = [31, 24], strides = [1, 1]} : vector<32x24xf32> to vector<31x24xf32>
    %61 = arith.maximumf %59, %60 : vector<31x24xf32>
    %62 = vector.extract_strided_slice %61 {offsets = [0, 0], sizes = [29, 24], strides = [1, 1]} : vector<31x24xf32> to vector<29x24xf32>
    %63 = vector.extract_strided_slice %61 {offsets = [2, 0], sizes = [29, 24], strides = [1, 1]} : vector<31x24xf32> to vector<29x24xf32>
    %64 = arith.maximumf %62, %63 : vector<29x24xf32>
    %65 = vector.extract_strided_slice %64 {offsets = [0, 0], sizes = [25, 24], strides = [1, 1]} : vector<29x24xf32> to vector<25x24xf32>
    %66 = vector.extract_strided_slice %64 {offsets = [4, 0], sizes = [25, 24], strides = [1, 1]} : vector<29x24xf32> to vector<25x24xf32>
    %67 = arith.maximumf %65, %66 : vector<25x24xf32>
    %68 = vector.extract_strided_slice %67 {offsets = [0, 0], sizes = [24, 24], strides = [1, 1]} : vector<25x24xf32> to vector<24x24xf32>
    %69 = vector.extract_strided_slice %58 {offsets = [8, 0], sizes = [24, 24], strides = [1, 1]} : vector<32x24xf32> to vector<24x24xf32>
    %70 = arith.maximumf %68, %69 : vector<24x24xf32>
    %c0_30 = arith.constant 0 : index
    %c0_31 = arith.constant 0 : index
    %c0_32 = arith.constant 0 : index
    %71 = vector.load %arg6[%c0_30, %c0_31, %c0_32] : memref<1x24x24xf32, #tpu.memory_space<vmem>>, vector<1x24x24xf32>
    %72 = vector.shape_cast %71 : vector<1x24x24xf32> to vector<24x24xf32>
    %73 = vector.shape_cast %70 : vector<24x24xf32> to vector<1x24x24xf32>
    tpu.vector_store %arg6[%c0_30, %c0_31, %c0_32], %73 {strides = array<i32>} : memref<1x24x24xf32, #tpu.memory_space<vmem>>, vector<1x24x24xf32>,
    return
  }
  func.func @transform_0(%arg0: i32) -> (i32, i32, i32, i32) {
    %c0_i32 = arith.constant 0 : i32
    %c0_i32_0 = arith.constant 0 : i32
    %c0_i32_1 = arith.constant 0 : i32
    %c0_i32_2 = arith.constant 0 : i32
    return %arg0, %c0_i32, %c0_i32_0, %c0_i32_1 : i32, i32, i32, i32
  }
  func.func @transform_1(%arg0: i32) -> (i32, i32) {
    %c0_i32 = arith.constant 0 : i32
    %c0_i32_0 = arith.constant 0 : i32
    %c0_i32_1 = arith.constant 0 : i32
    return %c0_i32, %c0_i32_0 : i32, i32
  }
  func.func @transform_2(%arg0: i32) -> (i32, i32, i32) {
    %c0_i32 = arith.constant 0 : i32
    %c0_i32_0 = arith.constant 0 : i32
    %c0_i32_1 = arith.constant 0 : i32
    %c0_i32_2 = arith.constant 0 : i32
    return %c0_i32, %c0_i32_0, %c0_i32_1 : i32, i32, i32
  }
  func.func @transform_3(%arg0: i32) -> (i32, i32, i32) {
    %c0_i32 = arith.constant 0 : i32
    %c0_i32_0 = arith.constant 0 : i32
    %c0_i32_1 = arith.constant 0 : i32
    return %arg0, %c0_i32, %c0_i32_0 : i32, i32, i32
  }
  func.func @transform_4(%arg0: i32) -> (i32, i32, i32) {
    %c0_i32 = arith.constant 0 : i32
    %c0_i32_0 = arith.constant 0 : i32
    %c0_i32_1 = arith.constant 0 : i32
    return %arg0, %c0_i32, %c0_i32_0 : i32, i32, i32
  }
  func.func @transform_5(%arg0: i32) -> (i32, i32, i32) {
    %c0_i32 = arith.constant 0 : i32
    %c0_i32_0 = arith.constant 0 : i32
    %c0_i32_1 = arith.constant 0 : i32
    return %arg0, %c0_i32, %c0_i32_0 : i32, i32, i32
  }
}

module attributes {stable_mosaic.version = 11 : i64} {
  func.func @_head_kernel(%arg0: i32, %arg1: i32, %arg2: memref<1x8x18x16xbf16, #tpu.memory_space<vmem>>, %arg3: memref<1x2x18x16xbf16, #tpu.memory_space<vmem>>, %arg4: memref<144x8xbf16, #tpu.memory_space<vmem>>, %arg5: memref<1x8xf32, #tpu.memory_space<vmem>>, %arg6: memref<1x8xf32, #tpu.memory_space<vmem>>, %arg7: memref<4x16xbf16, #tpu.memory_space<vmem>>, %arg8: memref<1x16xf32, #tpu.memory_space<vmem>>, %arg9: memref<1x16xf32, #tpu.memory_space<vmem>>, %arg10: memref<4x16xbf16, #tpu.memory_space<vmem>>, %arg11: memref<1x16xf32, #tpu.memory_space<vmem>>, %arg12: memref<1x16xf32, #tpu.memory_space<vmem>>, %arg13: memref<16x16xbf16, #tpu.memory_space<vmem>>, %arg14: memref<1x16xf32, #tpu.memory_space<vmem>>, %arg15: memref<1x16xf32, #tpu.memory_space<vmem>>, %arg16: memref<1x8x16x16xbf16, #tpu.memory_space<vmem>>, %arg17: memref<1x1x1x1xf32, #tpu.memory_space<vmem>>) attributes {dimension_semantics = [#tpu.dimension_semantics<parallel>, #tpu.dimension_semantics<parallel>], iteration_bounds = array<i64: 2, 2>, scalar_prefetch = 0 : i64, scratch_operands = 0 : i64, tpu.core_type = #tpu.core_type<tc>, window_params = [{transform_indices = @transform_0, window_bounds = array<i64: 1, 8, 18, 16>}, {transform_indices = @transform_1, window_bounds = array<i64: 1, 2, 18, 16>}, {pipeline_mode = #tpu.pipeline_mode<synchronous>, transform_indices = @transform_2, window_bounds = array<i64: 144, 8>}, {pipeline_mode = #tpu.pipeline_mode<synchronous>, transform_indices = @transform_3, window_bounds = array<i64: 1, 8>}, {pipeline_mode = #tpu.pipeline_mode<synchronous>, transform_indices = @transform_4, window_bounds = array<i64: 1, 8>}, {pipeline_mode = #tpu.pipeline_mode<synchronous>, transform_indices = @transform_5, window_bounds = array<i64: 4, 16>}, {pipeline_mode = #tpu.pipeline_mode<synchronous>, transform_indices = @transform_6, window_bounds = array<i64: 1, 16>}, {pipeline_mode = #tpu.pipeline_mode<synchronous>, transform_indices = @transform_7, window_bounds = array<i64: 1, 16>}, {pipeline_mode = #tpu.pipeline_mode<synchronous>, transform_indices = @transform_8, window_bounds = array<i64: 4, 16>}, {pipeline_mode = #tpu.pipeline_mode<synchronous>, transform_indices = @transform_9, window_bounds = array<i64: 1, 16>}, {pipeline_mode = #tpu.pipeline_mode<synchronous>, transform_indices = @transform_10, window_bounds = array<i64: 1, 16>}, {pipeline_mode = #tpu.pipeline_mode<synchronous>, transform_indices = @transform_11, window_bounds = array<i64: 16, 16>}, {pipeline_mode = #tpu.pipeline_mode<synchronous>, transform_indices = @transform_12, window_bounds = array<i64: 1, 16>}, {pipeline_mode = #tpu.pipeline_mode<synchronous>, transform_indices = @transform_13, window_bounds = array<i64: 1, 16>}, {transform_indices = @transform_14, window_bounds = array<i64: 1, 8, 16, 16>}, {transform_indices = @transform_15, window_bounds = array<i64: 1, 1, 1, 1>}]} {
    %c0 = arith.constant 0 : index
    %c0_0 = arith.constant 0 : index
    %c0_1 = arith.constant 0 : index
    %c0_2 = arith.constant 0 : index
    %0 = vector.load %arg2[%c0, %c0_0, %c0_1, %c0_2] : memref<1x8x18x16xbf16, #tpu.memory_space<vmem>>, vector<1x8x18x16xbf16>
    %1 = vector.shape_cast %0 : vector<1x8x18x16xbf16> to vector<8x18x16xbf16>
    %c0_3 = arith.constant 0 : index
    %c0_4 = arith.constant 0 : index
    %c0_5 = arith.constant 0 : index
    %c0_6 = arith.constant 0 : index
    %2 = vector.load %arg3[%c0_3, %c0_4, %c0_5, %c0_6] : memref<1x2x18x16xbf16, #tpu.memory_space<vmem>>, vector<1x2x18x16xbf16>
    %3 = vector.shape_cast %2 : vector<1x2x18x16xbf16> to vector<2x18x16xbf16>
    %4 = tpu.concatenate %1, %3 in 0 : vector<8x18x16xbf16>, vector<2x18x16xbf16> -> vector<10x18x16xbf16>
    %c0_7 = arith.constant 0 : index
    %c0_8 = arith.constant 0 : index
    %5 = vector.load %arg4[%c0_7, %c0_8] : memref<144x8xbf16, #tpu.memory_space<vmem>>, vector<144x8xbf16>
    %6 = vector.extract_strided_slice %4 {offsets = [0, 0, 0], sizes = [8, 16, 16], strides = [1, 1, 1]} : vector<10x18x16xbf16> to vector<8x16x16xbf16>
    %7 = vector.shape_cast %6 : vector<8x16x16xbf16> to vector<128x16xbf16>
    %8 = vector.extract_strided_slice %5 {offsets = [0, 0], sizes = [16, 8], strides = [1, 1]} : vector<144x8xbf16> to vector<16x8xbf16>
    %cst = arith.constant dense<0.000000e+00> : vector<128x8xf32>
    %9 = tpu.matmul %7, %8, %cst {dimension_numbers = #tpu.dot_dimension_numbers<[1], [0], [0], [1], [0, 0, 1, 1], [], []>} : vector<128x16xbf16>, vector<16x8xbf16>, vector<128x8xf32> -> vector<128x8xf32>
    %10 = vector.extract_strided_slice %4 {offsets = [0, 1, 0], sizes = [8, 16, 16], strides = [1, 1, 1]} : vector<10x18x16xbf16> to vector<8x16x16xbf16>
    %11 = vector.shape_cast %10 : vector<8x16x16xbf16> to vector<128x16xbf16>
    %12 = vector.extract_strided_slice %5 {offsets = [16, 0], sizes = [16, 8], strides = [1, 1]} : vector<144x8xbf16> to vector<16x8xbf16>
    %cst_9 = arith.constant dense<0.000000e+00> : vector<128x8xf32>
    %13 = tpu.matmul %11, %12, %cst_9 {dimension_numbers = #tpu.dot_dimension_numbers<[1], [0], [0], [1], [0, 0, 1, 1], [], []>} : vector<128x16xbf16>, vector<16x8xbf16>, vector<128x8xf32> -> vector<128x8xf32>
    %14 = arith.addf %9, %13 : vector<128x8xf32>
    %15 = vector.extract_strided_slice %4 {offsets = [0, 2, 0], sizes = [8, 16, 16], strides = [1, 1, 1]} : vector<10x18x16xbf16> to vector<8x16x16xbf16>
    %16 = vector.shape_cast %15 : vector<8x16x16xbf16> to vector<128x16xbf16>
    %17 = vector.extract_strided_slice %5 {offsets = [32, 0], sizes = [16, 8], strides = [1, 1]} : vector<144x8xbf16> to vector<16x8xbf16>
    %cst_10 = arith.constant dense<0.000000e+00> : vector<128x8xf32>
    %18 = tpu.matmul %16, %17, %cst_10 {dimension_numbers = #tpu.dot_dimension_numbers<[1], [0], [0], [1], [0, 0, 1, 1], [], []>} : vector<128x16xbf16>, vector<16x8xbf16>, vector<128x8xf32> -> vector<128x8xf32>
    %19 = arith.addf %14, %18 : vector<128x8xf32>
    %20 = vector.extract_strided_slice %4 {offsets = [1, 0, 0], sizes = [8, 16, 16], strides = [1, 1, 1]} : vector<10x18x16xbf16> to vector<8x16x16xbf16>
    %21 = vector.shape_cast %20 : vector<8x16x16xbf16> to vector<128x16xbf16>
    %22 = vector.extract_strided_slice %5 {offsets = [48, 0], sizes = [16, 8], strides = [1, 1]} : vector<144x8xbf16> to vector<16x8xbf16>
    %cst_11 = arith.constant dense<0.000000e+00> : vector<128x8xf32>
    %23 = tpu.matmul %21, %22, %cst_11 {dimension_numbers = #tpu.dot_dimension_numbers<[1], [0], [0], [1], [0, 0, 1, 1], [], []>} : vector<128x16xbf16>, vector<16x8xbf16>, vector<128x8xf32> -> vector<128x8xf32>
    %24 = arith.addf %19, %23 : vector<128x8xf32>
    %25 = vector.extract_strided_slice %4 {offsets = [1, 1, 0], sizes = [8, 16, 16], strides = [1, 1, 1]} : vector<10x18x16xbf16> to vector<8x16x16xbf16>
    %26 = vector.shape_cast %25 : vector<8x16x16xbf16> to vector<128x16xbf16>
    %27 = vector.extract_strided_slice %5 {offsets = [64, 0], sizes = [16, 8], strides = [1, 1]} : vector<144x8xbf16> to vector<16x8xbf16>
    %cst_12 = arith.constant dense<0.000000e+00> : vector<128x8xf32>
    %28 = tpu.matmul %26, %27, %cst_12 {dimension_numbers = #tpu.dot_dimension_numbers<[1], [0], [0], [1], [0, 0, 1, 1], [], []>} : vector<128x16xbf16>, vector<16x8xbf16>, vector<128x8xf32> -> vector<128x8xf32>
    %29 = arith.addf %24, %28 : vector<128x8xf32>
    %30 = vector.extract_strided_slice %4 {offsets = [1, 2, 0], sizes = [8, 16, 16], strides = [1, 1, 1]} : vector<10x18x16xbf16> to vector<8x16x16xbf16>
    %31 = vector.shape_cast %30 : vector<8x16x16xbf16> to vector<128x16xbf16>
    %32 = vector.extract_strided_slice %5 {offsets = [80, 0], sizes = [16, 8], strides = [1, 1]} : vector<144x8xbf16> to vector<16x8xbf16>
    %cst_13 = arith.constant dense<0.000000e+00> : vector<128x8xf32>
    %33 = tpu.matmul %31, %32, %cst_13 {dimension_numbers = #tpu.dot_dimension_numbers<[1], [0], [0], [1], [0, 0, 1, 1], [], []>} : vector<128x16xbf16>, vector<16x8xbf16>, vector<128x8xf32> -> vector<128x8xf32>
    %34 = arith.addf %29, %33 : vector<128x8xf32>
    %35 = vector.extract_strided_slice %4 {offsets = [2, 0, 0], sizes = [8, 16, 16], strides = [1, 1, 1]} : vector<10x18x16xbf16> to vector<8x16x16xbf16>
    %36 = vector.shape_cast %35 : vector<8x16x16xbf16> to vector<128x16xbf16>
    %37 = vector.extract_strided_slice %5 {offsets = [96, 0], sizes = [16, 8], strides = [1, 1]} : vector<144x8xbf16> to vector<16x8xbf16>
    %cst_14 = arith.constant dense<0.000000e+00> : vector<128x8xf32>
    %38 = tpu.matmul %36, %37, %cst_14 {dimension_numbers = #tpu.dot_dimension_numbers<[1], [0], [0], [1], [0, 0, 1, 1], [], []>} : vector<128x16xbf16>, vector<16x8xbf16>, vector<128x8xf32> -> vector<128x8xf32>
    %39 = arith.addf %34, %38 : vector<128x8xf32>
    %40 = vector.extract_strided_slice %4 {offsets = [2, 1, 0], sizes = [8, 16, 16], strides = [1, 1, 1]} : vector<10x18x16xbf16> to vector<8x16x16xbf16>
    %41 = vector.shape_cast %40 : vector<8x16x16xbf16> to vector<128x16xbf16>
    %42 = vector.extract_strided_slice %5 {offsets = [112, 0], sizes = [16, 8], strides = [1, 1]} : vector<144x8xbf16> to vector<16x8xbf16>
    %cst_15 = arith.constant dense<0.000000e+00> : vector<128x8xf32>
    %43 = tpu.matmul %41, %42, %cst_15 {dimension_numbers = #tpu.dot_dimension_numbers<[1], [0], [0], [1], [0, 0, 1, 1], [], []>} : vector<128x16xbf16>, vector<16x8xbf16>, vector<128x8xf32> -> vector<128x8xf32>
    %44 = arith.addf %39, %43 : vector<128x8xf32>
    %45 = vector.extract_strided_slice %4 {offsets = [2, 2, 0], sizes = [8, 16, 16], strides = [1, 1, 1]} : vector<10x18x16xbf16> to vector<8x16x16xbf16>
    %46 = vector.shape_cast %45 : vector<8x16x16xbf16> to vector<128x16xbf16>
    %47 = vector.extract_strided_slice %5 {offsets = [128, 0], sizes = [16, 8], strides = [1, 1]} : vector<144x8xbf16> to vector<16x8xbf16>
    %cst_16 = arith.constant dense<0.000000e+00> : vector<128x8xf32>
    %48 = tpu.matmul %46, %47, %cst_16 {dimension_numbers = #tpu.dot_dimension_numbers<[1], [0], [0], [1], [0, 0, 1, 1], [], []>} : vector<128x16xbf16>, vector<16x8xbf16>, vector<128x8xf32> -> vector<128x8xf32>
    %49 = arith.addf %44, %48 : vector<128x8xf32>
    %c0_17 = arith.constant 0 : index
    %c0_18 = arith.constant 0 : index
    %50 = vector.load %arg5[%c0_17, %c0_18] : memref<1x8xf32, #tpu.memory_space<vmem>>, vector<1x8xf32>
    %51 = vector.broadcast %50 : vector<1x8xf32> to vector<128x8xf32>
    %52 = arith.mulf %49, %51 : vector<128x8xf32>
    %c0_19 = arith.constant 0 : index
    %c0_20 = arith.constant 0 : index
    %53 = vector.load %arg6[%c0_19, %c0_20] : memref<1x8xf32, #tpu.memory_space<vmem>>, vector<1x8xf32>
    %54 = vector.broadcast %53 : vector<1x8xf32> to vector<128x8xf32>
    %55 = arith.addf %52, %54 : vector<128x8xf32>
    %cst_21 = arith.constant 0.000000e+00 : f32
    %56 = vector.broadcast %cst_21 : f32 to vector<128x8xf32>
    %57 = arith.maximumf %55, %56 : vector<128x8xf32>
    %58 = vector.extract_strided_slice %57 {offsets = [0, 0], sizes = [128, 4], strides = [1, 1]} : vector<128x8xf32> to vector<128x4xf32>
    %59 = arith.truncf %58 : vector<128x4xf32> to vector<128x4xbf16>
    %60 = vector.extract_strided_slice %57 {offsets = [0, 4], sizes = [128, 4], strides = [1, 1]} : vector<128x8xf32> to vector<128x4xf32>
    %61 = arith.truncf %60 : vector<128x4xf32> to vector<128x4xbf16>
    %c0_22 = arith.constant 0 : index
    %c0_23 = arith.constant 0 : index
    %62 = vector.load %arg7[%c0_22, %c0_23] : memref<4x16xbf16, #tpu.memory_space<vmem>>, vector<4x16xbf16>
    %cst_24 = arith.constant dense<0.000000e+00> : vector<128x16xf32>
    %63 = tpu.matmul %59, %62, %cst_24 {dimension_numbers = #tpu.dot_dimension_numbers<[1], [0], [0], [1], [0, 0, 1, 1], [], []>} : vector<128x4xbf16>, vector<4x16xbf16>, vector<128x16xf32> -> vector<128x16xf32>
    %c0_25 = arith.constant 0 : index
    %c0_26 = arith.constant 0 : index
    %64 = vector.load %arg8[%c0_25, %c0_26] : memref<1x16xf32, #tpu.memory_space<vmem>>, vector<1x16xf32>
    %65 = vector.broadcast %64 : vector<1x16xf32> to vector<128x16xf32>
    %66 = arith.mulf %63, %65 : vector<128x16xf32>
    %c0_27 = arith.constant 0 : index
    %c0_28 = arith.constant 0 : index
    %67 = vector.load %arg9[%c0_27, %c0_28] : memref<1x16xf32, #tpu.memory_space<vmem>>, vector<1x16xf32>
    %68 = vector.broadcast %67 : vector<1x16xf32> to vector<128x16xf32>
    %69 = arith.addf %66, %68 : vector<128x16xf32>
    %cst_29 = arith.constant 0.000000e+00 : f32
    %70 = vector.broadcast %cst_29 : f32 to vector<128x16xf32>
    %71 = arith.maximumf %69, %70 : vector<128x16xf32>
    %c0_30 = arith.constant 0 : index
    %c0_31 = arith.constant 0 : index
    %72 = vector.load %arg10[%c0_30, %c0_31] : memref<4x16xbf16, #tpu.memory_space<vmem>>, vector<4x16xbf16>
    %cst_32 = arith.constant dense<0.000000e+00> : vector<128x16xf32>
    %73 = tpu.matmul %61, %72, %cst_32 {dimension_numbers = #tpu.dot_dimension_numbers<[1], [0], [0], [1], [0, 0, 1, 1], [], []>} : vector<128x4xbf16>, vector<4x16xbf16>, vector<128x16xf32> -> vector<128x16xf32>
    %c0_33 = arith.constant 0 : index
    %c0_34 = arith.constant 0 : index
    %74 = vector.load %arg11[%c0_33, %c0_34] : memref<1x16xf32, #tpu.memory_space<vmem>>, vector<1x16xf32>
    %75 = vector.broadcast %74 : vector<1x16xf32> to vector<128x16xf32>
    %76 = arith.mulf %73, %75 : vector<128x16xf32>
    %c0_35 = arith.constant 0 : index
    %c0_36 = arith.constant 0 : index
    %77 = vector.load %arg12[%c0_35, %c0_36] : memref<1x16xf32, #tpu.memory_space<vmem>>, vector<1x16xf32>
    %78 = vector.broadcast %77 : vector<1x16xf32> to vector<128x16xf32>
    %79 = arith.addf %76, %78 : vector<128x16xf32>
    %cst_37 = arith.constant 0.000000e+00 : f32
    %80 = vector.broadcast %cst_37 : f32 to vector<128x16xf32>
    %81 = arith.maximumf %79, %80 : vector<128x16xf32>
    %82 = arith.truncf %71 : vector<128x16xf32> to vector<128x16xbf16>
    %c0_38 = arith.constant 0 : index
    %c0_39 = arith.constant 0 : index
    %83 = vector.load %arg13[%c0_38, %c0_39] : memref<16x16xbf16, #tpu.memory_space<vmem>>, vector<16x16xbf16>
    %cst_40 = arith.constant dense<0.000000e+00> : vector<128x16xf32>
    %84 = tpu.matmul %82, %83, %cst_40 {dimension_numbers = #tpu.dot_dimension_numbers<[1], [0], [0], [1], [0, 0, 1, 1], [], []>} : vector<128x16xbf16>, vector<16x16xbf16>, vector<128x16xf32> -> vector<128x16xf32>
    %c0_41 = arith.constant 0 : index
    %c0_42 = arith.constant 0 : index
    %85 = vector.load %arg14[%c0_41, %c0_42] : memref<1x16xf32, #tpu.memory_space<vmem>>, vector<1x16xf32>
    %86 = vector.broadcast %85 : vector<1x16xf32> to vector<128x16xf32>
    %87 = arith.addf %84, %86 : vector<128x16xf32>
    %88 = arith.negf %87 : vector<128x16xf32>
    %89 = math.exp %88 : vector<128x16xf32>
    %cst_43 = arith.constant 1.000000e+00 : f32
    %90 = vector.broadcast %cst_43 : f32 to vector<128x16xf32>
    %91 = arith.addf %90, %89 : vector<128x16xf32>
    %92 = arith.divf %90, %91 : vector<128x16xf32>
    %93 = tpu.transpose %92, [1, 0] : vector<128x16xf32> -> vector<16x128xf32>
    %94 = arith.truncf %93 : vector<16x128xf32> to vector<16x128xbf16>
    %95 = vector.extract_strided_slice %94 {offsets = [0, 0], sizes = [16, 16], strides = [1, 1]} : vector<16x128xbf16> to vector<16x16xbf16>
    %c0_44 = arith.constant 0 : index
    %c0_45 = arith.constant 0 : index
    %c0_46 = arith.constant 0 : index
    %c0_47 = arith.constant 0 : index
    %96 = vector.load %arg16[%c0_44, %c0_45, %c0_46, %c0_47] : memref<1x8x16x16xbf16, #tpu.memory_space<vmem>>, vector<1x1x16x16xbf16>
    %97 = vector.shape_cast %96 : vector<1x1x16x16xbf16> to vector<16x16xbf16>
    %98 = vector.shape_cast %95 : vector<16x16xbf16> to vector<1x1x16x16xbf16>
    tpu.vector_store %arg16[%c0_44, %c0_45, %c0_46, %c0_47], %98 {strides = array<i32>} : memref<1x8x16x16xbf16, #tpu.memory_space<vmem>>, vector<1x1x16x16xbf16>,
    %99 = vector.extract_strided_slice %94 {offsets = [0, 16], sizes = [16, 16], strides = [1, 1]} : vector<16x128xbf16> to vector<16x16xbf16>
    %c0_48 = arith.constant 0 : index
    %c1 = arith.constant 1 : index
    %c0_49 = arith.constant 0 : index
    %c0_50 = arith.constant 0 : index
    %100 = vector.load %arg16[%c0_48, %c1, %c0_49, %c0_50] : memref<1x8x16x16xbf16, #tpu.memory_space<vmem>>, vector<1x1x16x16xbf16>
    %101 = vector.shape_cast %100 : vector<1x1x16x16xbf16> to vector<16x16xbf16>
    %102 = vector.shape_cast %99 : vector<16x16xbf16> to vector<1x1x16x16xbf16>
    tpu.vector_store %arg16[%c0_48, %c1, %c0_49, %c0_50], %102 {strides = array<i32>} : memref<1x8x16x16xbf16, #tpu.memory_space<vmem>>, vector<1x1x16x16xbf16>,
    %103 = vector.extract_strided_slice %94 {offsets = [0, 32], sizes = [16, 16], strides = [1, 1]} : vector<16x128xbf16> to vector<16x16xbf16>
    %c0_51 = arith.constant 0 : index
    %c2 = arith.constant 2 : index
    %c0_52 = arith.constant 0 : index
    %c0_53 = arith.constant 0 : index
    %104 = vector.load %arg16[%c0_51, %c2, %c0_52, %c0_53] : memref<1x8x16x16xbf16, #tpu.memory_space<vmem>>, vector<1x1x16x16xbf16>
    %105 = vector.shape_cast %104 : vector<1x1x16x16xbf16> to vector<16x16xbf16>
    %106 = vector.shape_cast %103 : vector<16x16xbf16> to vector<1x1x16x16xbf16>
    tpu.vector_store %arg16[%c0_51, %c2, %c0_52, %c0_53], %106 {strides = array<i32>} : memref<1x8x16x16xbf16, #tpu.memory_space<vmem>>, vector<1x1x16x16xbf16>,
    %107 = vector.extract_strided_slice %94 {offsets = [0, 48], sizes = [16, 16], strides = [1, 1]} : vector<16x128xbf16> to vector<16x16xbf16>
    %c0_54 = arith.constant 0 : index
    %c3 = arith.constant 3 : index
    %c0_55 = arith.constant 0 : index
    %c0_56 = arith.constant 0 : index
    %108 = vector.load %arg16[%c0_54, %c3, %c0_55, %c0_56] : memref<1x8x16x16xbf16, #tpu.memory_space<vmem>>, vector<1x1x16x16xbf16>
    %109 = vector.shape_cast %108 : vector<1x1x16x16xbf16> to vector<16x16xbf16>
    %110 = vector.shape_cast %107 : vector<16x16xbf16> to vector<1x1x16x16xbf16>
    tpu.vector_store %arg16[%c0_54, %c3, %c0_55, %c0_56], %110 {strides = array<i32>} : memref<1x8x16x16xbf16, #tpu.memory_space<vmem>>, vector<1x1x16x16xbf16>,
    %111 = vector.extract_strided_slice %94 {offsets = [0, 64], sizes = [16, 16], strides = [1, 1]} : vector<16x128xbf16> to vector<16x16xbf16>
    %c0_57 = arith.constant 0 : index
    %c4 = arith.constant 4 : index
    %c0_58 = arith.constant 0 : index
    %c0_59 = arith.constant 0 : index
    %112 = vector.load %arg16[%c0_57, %c4, %c0_58, %c0_59] : memref<1x8x16x16xbf16, #tpu.memory_space<vmem>>, vector<1x1x16x16xbf16>
    %113 = vector.shape_cast %112 : vector<1x1x16x16xbf16> to vector<16x16xbf16>
    %114 = vector.shape_cast %111 : vector<16x16xbf16> to vector<1x1x16x16xbf16>
    tpu.vector_store %arg16[%c0_57, %c4, %c0_58, %c0_59], %114 {strides = array<i32>} : memref<1x8x16x16xbf16, #tpu.memory_space<vmem>>, vector<1x1x16x16xbf16>,
    %115 = vector.extract_strided_slice %94 {offsets = [0, 80], sizes = [16, 16], strides = [1, 1]} : vector<16x128xbf16> to vector<16x16xbf16>
    %c0_60 = arith.constant 0 : index
    %c5 = arith.constant 5 : index
    %c0_61 = arith.constant 0 : index
    %c0_62 = arith.constant 0 : index
    %116 = vector.load %arg16[%c0_60, %c5, %c0_61, %c0_62] : memref<1x8x16x16xbf16, #tpu.memory_space<vmem>>, vector<1x1x16x16xbf16>
    %117 = vector.shape_cast %116 : vector<1x1x16x16xbf16> to vector<16x16xbf16>
    %118 = vector.shape_cast %115 : vector<16x16xbf16> to vector<1x1x16x16xbf16>
    tpu.vector_store %arg16[%c0_60, %c5, %c0_61, %c0_62], %118 {strides = array<i32>} : memref<1x8x16x16xbf16, #tpu.memory_space<vmem>>, vector<1x1x16x16xbf16>,
    %119 = vector.extract_strided_slice %94 {offsets = [0, 96], sizes = [16, 16], strides = [1, 1]} : vector<16x128xbf16> to vector<16x16xbf16>
    %c0_63 = arith.constant 0 : index
    %c6 = arith.constant 6 : index
    %c0_64 = arith.constant 0 : index
    %c0_65 = arith.constant 0 : index
    %120 = vector.load %arg16[%c0_63, %c6, %c0_64, %c0_65] : memref<1x8x16x16xbf16, #tpu.memory_space<vmem>>, vector<1x1x16x16xbf16>
    %121 = vector.shape_cast %120 : vector<1x1x16x16xbf16> to vector<16x16xbf16>
    %122 = vector.shape_cast %119 : vector<16x16xbf16> to vector<1x1x16x16xbf16>
    tpu.vector_store %arg16[%c0_63, %c6, %c0_64, %c0_65], %122 {strides = array<i32>} : memref<1x8x16x16xbf16, #tpu.memory_space<vmem>>, vector<1x1x16x16xbf16>,
    %123 = vector.extract_strided_slice %94 {offsets = [0, 112], sizes = [16, 16], strides = [1, 1]} : vector<16x128xbf16> to vector<16x16xbf16>
    %c0_66 = arith.constant 0 : index
    %c7 = arith.constant 7 : index
    %c0_67 = arith.constant 0 : index
    %c0_68 = arith.constant 0 : index
    %124 = vector.load %arg16[%c0_66, %c7, %c0_67, %c0_68] : memref<1x8x16x16xbf16, #tpu.memory_space<vmem>>, vector<1x1x16x16xbf16>
    %125 = vector.shape_cast %124 : vector<1x1x16x16xbf16> to vector<16x16xbf16>
    %126 = vector.shape_cast %123 : vector<16x16xbf16> to vector<1x1x16x16xbf16>
    tpu.vector_store %arg16[%c0_66, %c7, %c0_67, %c0_68], %126 {strides = array<i32>} : memref<1x8x16x16xbf16, #tpu.memory_space<vmem>>, vector<1x1x16x16xbf16>,
    %c0_69 = arith.constant 0 : index
    %c0_70 = arith.constant 0 : index
    %127 = vector.load %arg15[%c0_69, %c0_70] : memref<1x16xf32, #tpu.memory_space<vmem>>, vector<1x16xf32>
    %128 = vector.broadcast %127 : vector<1x16xf32> to vector<128x16xf32>
    %129 = arith.mulf %81, %128 : vector<128x16xf32>
    %130 = vector.shape_cast %129 : vector<128x16xf32> to vector<1x128x16xf32>
    %cst_71 = arith.constant dense<0.000000e+00> : vector<1xf32>
    %131 = vector.multi_reduction <add>, %130, %cst_71 [1, 2] : vector<1x128x16xf32> to vector<1xf32>
    %132 = vector.shape_cast %131 : vector<1xf32> to vector<1x1x1xf32>
    %133 = vector.extract %132[0, 0, 0] : f32 from vector<1x1x1xf32>
    %134 = vector.broadcast %133 : f32 to vector<1x1x1x1xf32>
    %c0_72 = arith.constant 0 : index
    %c0_73 = arith.constant 0 : index
    %c0_74 = arith.constant 0 : index
    %c0_75 = arith.constant 0 : index
    %135 = vector.load %arg17[%c0_72, %c0_73, %c0_74, %c0_75] : memref<1x1x1x1xf32, #tpu.memory_space<vmem>>, vector<1x1x1x1xf32>
    tpu.vector_store %arg17[%c0_72, %c0_73, %c0_74, %c0_75], %134 {strides = array<i32>} : memref<1x1x1x1xf32, #tpu.memory_space<vmem>>, vector<1x1x1x1xf32>,
    return
  }
  func.func @transform_0(%arg0: i32, %arg1: i32) -> (i32, i32, i32, i32) {
    %c0_i32 = arith.constant 0 : i32
    %c0_i32_0 = arith.constant 0 : i32
    %c0_i32_1 = arith.constant 0 : i32
    return %arg0, %arg1, %c0_i32, %c0_i32_0 : i32, i32, i32, i32
  }
  func.func @transform_1(%arg0: i32, %arg1: i32) -> (i32, i32, i32, i32) {
    %c1_i32 = arith.constant 1 : i32
    %0 = arith.addi %arg1, %c1_i32 : i32
    %c4_i32 = arith.constant 4 : i32
    %1 = arith.muli %0, %c4_i32 : i32
    %c0_i32 = arith.constant 0 : i32
    %c0_i32_0 = arith.constant 0 : i32
    %c0_i32_1 = arith.constant 0 : i32
    return %arg0, %1, %c0_i32, %c0_i32_0 : i32, i32, i32, i32
  }
  func.func @transform_2(%arg0: i32, %arg1: i32) -> (i32, i32) {
    %c0_i32 = arith.constant 0 : i32
    %c0_i32_0 = arith.constant 0 : i32
    %c0_i32_1 = arith.constant 0 : i32
    return %c0_i32, %c0_i32_0 : i32, i32
  }
  func.func @transform_3(%arg0: i32, %arg1: i32) -> (i32, i32) {
    %c0_i32 = arith.constant 0 : i32
    %c0_i32_0 = arith.constant 0 : i32
    %c0_i32_1 = arith.constant 0 : i32
    return %c0_i32, %c0_i32_0 : i32, i32
  }
  func.func @transform_4(%arg0: i32, %arg1: i32) -> (i32, i32) {
    %c0_i32 = arith.constant 0 : i32
    %c0_i32_0 = arith.constant 0 : i32
    %c0_i32_1 = arith.constant 0 : i32
    return %c0_i32, %c0_i32_0 : i32, i32
  }
  func.func @transform_5(%arg0: i32, %arg1: i32) -> (i32, i32) {
    %c0_i32 = arith.constant 0 : i32
    %c0_i32_0 = arith.constant 0 : i32
    %c0_i32_1 = arith.constant 0 : i32
    return %c0_i32, %c0_i32_0 : i32, i32
  }
  func.func @transform_6(%arg0: i32, %arg1: i32) -> (i32, i32) {
    %c0_i32 = arith.constant 0 : i32
    %c0_i32_0 = arith.constant 0 : i32
    %c0_i32_1 = arith.constant 0 : i32
    return %c0_i32, %c0_i32_0 : i32, i32
  }
  func.func @transform_7(%arg0: i32, %arg1: i32) -> (i32, i32) {
    %c0_i32 = arith.constant 0 : i32
    %c0_i32_0 = arith.constant 0 : i32
    %c0_i32_1 = arith.constant 0 : i32
    return %c0_i32, %c0_i32_0 : i32, i32
  }
  func.func @transform_8(%arg0: i32, %arg1: i32) -> (i32, i32) {
    %c0_i32 = arith.constant 0 : i32
    %c0_i32_0 = arith.constant 0 : i32
    %c0_i32_1 = arith.constant 0 : i32
    return %c0_i32, %c0_i32_0 : i32, i32
  }
  func.func @transform_9(%arg0: i32, %arg1: i32) -> (i32, i32) {
    %c0_i32 = arith.constant 0 : i32
    %c0_i32_0 = arith.constant 0 : i32
    %c0_i32_1 = arith.constant 0 : i32
    return %c0_i32, %c0_i32_0 : i32, i32
  }
  func.func @transform_10(%arg0: i32, %arg1: i32) -> (i32, i32) {
    %c0_i32 = arith.constant 0 : i32
    %c0_i32_0 = arith.constant 0 : i32
    %c0_i32_1 = arith.constant 0 : i32
    return %c0_i32, %c0_i32_0 : i32, i32
  }
  func.func @transform_11(%arg0: i32, %arg1: i32) -> (i32, i32) {
    %c0_i32 = arith.constant 0 : i32
    %c0_i32_0 = arith.constant 0 : i32
    %c0_i32_1 = arith.constant 0 : i32
    return %c0_i32, %c0_i32_0 : i32, i32
  }
  func.func @transform_12(%arg0: i32, %arg1: i32) -> (i32, i32) {
    %c0_i32 = arith.constant 0 : i32
    %c0_i32_0 = arith.constant 0 : i32
    %c0_i32_1 = arith.constant 0 : i32
    return %c0_i32, %c0_i32_0 : i32, i32
  }
  func.func @transform_13(%arg0: i32, %arg1: i32) -> (i32, i32) {
    %c0_i32 = arith.constant 0 : i32
    %c0_i32_0 = arith.constant 0 : i32
    %c0_i32_1 = arith.constant 0 : i32
    return %c0_i32, %c0_i32_0 : i32, i32
  }
  func.func @transform_14(%arg0: i32, %arg1: i32) -> (i32, i32, i32, i32) {
    %c0_i32 = arith.constant 0 : i32
    %c0_i32_0 = arith.constant 0 : i32
    %c0_i32_1 = arith.constant 0 : i32
    return %arg0, %arg1, %c0_i32, %c0_i32_0 : i32, i32, i32, i32
  }
  func.func @transform_15(%arg0: i32, %arg1: i32) -> (i32, i32, i32, i32) {
    %c0_i32 = arith.constant 0 : i32
    %c0_i32_0 = arith.constant 0 : i32
    %c0_i32_1 = arith.constant 0 : i32
    return %arg0, %arg1, %c0_i32, %c0_i32_0 : i32, i32, i32, i32
  }
}

</mosaic_0001>

<llo_original>
// kernel: tile.28
$region0: #{tile.28}
  #allocation0 [shape = 's32[1]{0}', space=sflag, size = 0x4, scoped, tag = 'scoped memory for tile.28']
  %s0 = inlined_call_operand.vmem [shape: f32[4], index: 0, kind: input, shape index: {}]
  %s1 = inlined_call_operand.vmem [shape: f32[4,4], index: 1, kind: output, shape index: {}]
  // Predicated region
  $region2: #{tile.28} parent=0 // pred_check
    _
  $region3: #{tile.28} parent=0 // pred_check_branch
    %3 = sbr.rel (0) target = $region5
  $region4: #{tile.28} parent=0 // pred_region
    _
  $region5: #{tile.28} parent=0 // pred_fallthru
    _
  %v4 = vld [vmem:[%s0] ss:$0 sm:$0xff]
  %5 = vst [vmem:[%s1] sm:$0xf] %v4

// kernel: tile.45
$region0: #{tile.45}
  %s0 = inlined_call_operand.vmem [shape: f32[4,4], index: 0, kind: input, shape index: {}]
  %s1 = inlined_call_operand.vmem [shape: f32[1,16], index: 1, kind: output, shape index: {}]
  $region1: #{tile.45} parent=0
    #allocation0 [shape = 'u8[4096]{0}', space=vmem, size = 0x1000, scoped, tag = 'scoped mem for output reshape']
    #allocation1 [shape = 'u8[4096]{0}', space=vmem, size = 0x1000, scoped, tag = 'scoped mem for input reshape']
    %s3 = sshllo.u32 0, 4
    %v4 = vld [vmem:[%s0] sm:%s3]
    %5 = vst [vmem:[#allocation1] sm:%s3] %v4
    %v6 = vld [vmem:[#allocation1] sm:$0x1]
    %vm7 = vcmask 31744
    %8 = vst.msk [vmem:[#allocation0] sm:$0x1] %vm7, %v6
    %s9 = scalar_lea.vmem [#allocation1], 3
    %v10 = vld [vmem:[%s9] sm:$0x1]
    %11 = vrot.lane.b32.xlu0 %v10, 12
    %v12 = vpop.permute.xlu0 %11
    %vm13 = vcmask 130144
    %14 = vst.msk [vmem:[#allocation0] sm:$0x1] %vm13, %v12
    %s15 = scalar_lea.vmem [#allocation1], 2
    %v16 = vld [vmem:[%s15] sm:$0x1]
    %17 = vrot.lane.b32.xlu0 %v16, 8
    %v18 = vpop.permute.xlu0 %17
    %vm19 = vcmask 97344
    %20 = vst.msk [vmem:[#allocation0] sm:$0x1] %vm19, %v18
    %s21 = scalar_lea.vmem [#allocation1], 1
    %v22 = vld [vmem:[%s21] sm:$0x1]
    %23 = vrot.lane.b32.xlu0 %v22, 4
    %v24 = vpop.permute.xlu0 %23
    %vm25 = vcmask 64544
    %26 = vst.msk [vmem:[#allocation0] sm:$0x1] %vm25, %v24
    %s28 = sshllo.u32 0, 1
    %v30 = vld [vmem:[#allocation0] sm:%s28]
    %s31 = sshllo.u32 0, 1
    %32 = vst [vmem:[%s1] sm:%s31] %v30

// kernel: db_head_forward.3
$region0: #{db_head_forward.3}
  #allocation0 [shape = 'u32[]', space=smem, size = 0x4, offset = 0x4, fixed_abs, tag = 'smem constant byte address 0x4 - core index']
  #allocation1 [shape = 'u32[144,128]{1,0:T(1,128)}', space=vmem, size = 0x12000, scoped, tag = 'internal scratch']
  %s0 = inlined_call_operand.vmem [shape: bf16[2,16,16,16], index: 0, kind: input, shape index: {}]
  %s1 = inlined_call_operand.vmem [shape: bf16[24,64], index: 1, kind: input, shape index: {}]
  %s2 = inlined_call_operand.vmem [shape: bf16[4,16,24], index: 2, kind: input, shape index: {}]
  %s3 = inlined_call_operand.vmem [shape: f32[2,1,1], index: 3, kind: input, shape index: {}]
  %s4 = inlined_call_operand.hbm [shape: f32[2,24,24], index: 4, kind: output, shape index: {0}]
  %s5 = inlined_call_operand.hbm [shape: f32[2,24,24], index: 5, kind: output, shape index: {1}]
  %6 = xla_tuple %s4, %s5
  %s7 = sld [smem:[#allocation0]]
  $region61: #{db_head_forward.3} parent=0
    _
  %s9 = ssub.s32 1, %s7
  %s10 = scalar_select 0, %s9, %s7
  $region1: #{db_head_forward.3} parent=0
    #allocation2 [shape = 'u8[1024]{0}', space=smem, size = 0x400, scoped, tag = 'input window, operand 3']
    #allocation3 [shape = 's32[2]{0}', space=sflag, size = 0x8, scoped, tag = 'scoped memory for db_head_forward.3']
    #allocation4 [shape = 's32[2]{0}', space=sflag, size = 0x8, scoped, tag = 'scoped memory for db_head_forward.3']
    #allocation5 [shape = 'u8[24576]{0}', space=vmem, size = 0x6000, scoped, tag = 'output window, operand 0']
    #allocation6 [shape = 'u8[24576]{0}', space=vmem, size = 0x6000, scoped, tag = 'output window, operand 1']
    #allocation7 [shape = 's32[2]{0}', space=sflag, size = 0x8, scoped, tag = 'scoped memory for db_head_forward.3']
    %11 = vsyncpa [#allocation4], 0
    %s12 = scalar_lea.sflag [#allocation4], 1
    %13 = vsyncpa %s12, 0
    %14 = vsyncpa [#allocation3], 0
    %s15 = scalar_lea.sflag [#allocation3], 1
    %16 = vsyncpa %s15, 0
    %17 = vsyncpa [#allocation7], 0
    %s18 = scalar_lea.sflag [#allocation7], 1
    %19 = vsyncpa %s18, 0
    loop: start=0, step=1, limit=4
    $region2: #{db_head_forward.3} parent=1 // loop_pre_header
      _
    $region3: #{db_head_forward.3} parent=1 // loop_header
      %s21 = sphi 0, %s25
      %p22 = scmp.ge.s32.totalorder %s21, 4
      %s31 = sphi 0, %s33
      %s34 = sphi 0, %s31
      %s35 = sphi 0, %s34
      %s51 = sphi 0, %s35
      %s55 = sphi 0, %s55
      %s57 = sphi 0, %s55
      %s58 = sphi 0, %s57
      %s72 = sphi 0, %s58
      %s76 = sphi 0, %s76
      %s78 = sphi 0, %s76
      %s79 = sphi 0, %s78
      %s93 = sphi 0, %s79
      %s99 = sphi 0, %s101
      %s102 = sphi 0, %s99
      %s103 = sphi 0, %s102
      %s119 = sphi 0, %s103
      %s125 = sphi 0, %s127
      %s128 = sphi 0, %s125
      %s129 = sphi 0, %s128
      %s145 = sphi 0, %s129
      %s151 = sphi 0, %s153
      %s154 = sphi 0, %s151
      %s155 = sphi 0, %s154
      %s171 = sphi 0, %s155
    $region4: #{db_head_forward.3} parent=1 // loop_header_branch
      %24 = sbr.rel (%p22) target = $region8
    $region5: #{db_head_forward.3} parent=1 // loop_body
      %s26 = ssub.s32 %s21, 1
      %s27 = ssub.s32 %s21, 2
      %s28 = sadd.s32 %s21, 1
      %s29 = ssub.s32 %s21, %s28
      %p30 = scmp.eq.s32.totalorder %s29, 0
      %s32 = sadd.s32 %s31, 1
      %s33 = scalar_select %p30, %s31, %s32
      %p36 = pneg %p30
      %p37 = scmp.eq.s32.totalorder %s21, 1
      %p38 = por %p36, %p37
      %p39 = scmp.ne.s32.totalorder %s31, %s34
      %p40 = scmp.eq.s32.totalorder %s21, 0
      %p41 = por %p39, %p40
      %p42 = scmp.ne.s32.totalorder %s31, %s34
      %p43 = scmp.eq.s32.totalorder %s26, 1
      %p44 = por %p42, %p43
      %p45 = scmp.ne.s32.totalorder %s34, %s35
      %p46 = scmp.eq.s32.totalorder %s26, 0
      %p47 = por %p45, %p46
      %p48 = scmp.ne.s32.totalorder %s34, %s35
      %p49 = scmp.eq.s32.totalorder %s27, 1
      %p50 = por %p48, %p49
      %p52 = scmp.ne.s32.totalorder %s35, %s51
      %p53 = scmp.eq.s32.totalorder %s27, 0
      %p54 = por %p52, %p53
      %s56 = sadd.s32 %s55, 1
      %p59 = scmp.eq.s32.totalorder %s21, 1
      %p60 = scmp.ne.s32.totalorder %s55, %s57
      %p61 = scmp.eq.s32.totalorder %s21, 0
      %p62 = por %p60, %p61
      %p63 = scmp.ne.s32.totalorder %s55, %s57
      %p64 = scmp.eq.s32.totalorder %s26, 1
      %p65 = por %p63, %p64
      %p66 = scmp.ne.s32.totalorder %s57, %s58
      %p67 = scmp.eq.s32.totalorder %s26, 0
      %p68 = por %p66, %p67
      %p69 = scmp.ne.s32.totalorder %s57, %s58
      %p70 = scmp.eq.s32.totalorder %s27, 1
      %p71 = por %p69, %p70
      %p73 = scmp.ne.s32.totalorder %s58, %s72
      %p74 = scmp.eq.s32.totalorder %s27, 0
      %p75 = por %p73, %p74
      %s77 = sadd.s32 %s76, 1
      %p80 = scmp.eq.s32.totalorder %s21, 1
      %p81 = scmp.ne.s32.totalorder %s76, %s78
      %p82 = scmp.eq.s32.totalorder %s21, 0
      %p83 = por %p81, %p82
      %p84 = scmp.ne.s32.totalorder %s76, %s78
      %p85 = scmp.eq.s32.totalorder %s26, 1
      %p86 = por %p84, %p85
      %p87 = scmp.ne.s32.totalorder %s78, %s79
      %p88 = scmp.eq.s32.totalorder %s26, 0
      %p89 = por %p87, %p88
      %p90 = scmp.ne.s32.totalorder %s78, %s79
      %p91 = scmp.eq.s32.totalorder %s27, 1
      %p92 = por %p90, %p91
      %p94 = scmp.ne.s32.totalorder %s79, %s93
      %p95 = scmp.eq.s32.totalorder %s27, 0
      %p96 = por %p94, %p95
      %s97 = ssub.s32 %s21, %s28
      %p98 = scmp.eq.s32.totalorder %s97, 0
      %s100 = sadd.s32 %s99, 1
      %s101 = scalar_select %p98, %s99, %s100
      %p104 = pneg %p98
      %p105 = scmp.eq.s32.totalorder %s21, 1
      %p106 = por %p104, %p105
      %p107 = scmp.ne.s32.totalorder %s99, %s102
      %p108 = scmp.eq.s32.totalorder %s21, 0
      %p109 = por %p107, %p108
      %p110 = scmp.ne.s32.totalorder %s99, %s102
      %p111 = scmp.eq.s32.totalorder %s26, 1
      %p112 = por %p110, %p111
      %p113 = scmp.ne.s32.totalorder %s102, %s103
      %p114 = scmp.eq.s32.totalorder %s26, 0
      %p115 = por %p113, %p114
      %p116 = scmp.ne.s32.totalorder %s102, %s103
      %p117 = scmp.eq.s32.totalorder %s27, 1
      %p118 = por %p116, %p117
      %p120 = scmp.ne.s32.totalorder %s103, %s119
      %p121 = scmp.eq.s32.totalorder %s27, 0
      %p122 = por %p120, %p121
      %s123 = ssub.s32 %s21, %s28
      %p124 = scmp.eq.s32.totalorder %s123, 0
      %s126 = sadd.s32 %s125, 1
      %s127 = scalar_select %p124, %s125, %s126
      %p130 = pneg %p124
      %p131 = scmp.eq.s32.totalorder %s21, 1
      %p132 = por %p130, %p131
      %p133 = scmp.ne.s32.totalorder %s125, %s128
      %p134 = scmp.eq.s32.totalorder %s21, 0
      %p135 = por %p133, %p134
      %p136 = scmp.ne.s32.totalorder %s125, %s128
      %p137 = scmp.eq.s32.totalorder %s26, 1
      %p138 = por %p136, %p137
      %p139 = scmp.ne.s32.totalorder %s128, %s129
      %p140 = scmp.eq.s32.totalorder %s26, 0
      %p141 = por %p139, %p140
      %p142 = scmp.ne.s32.totalorder %s128, %s129
      %p143 = scmp.eq.s32.totalorder %s27, 1
      %p144 = por %p142, %p143
      %p146 = scmp.ne.s32.totalorder %s129, %s145
      %p147 = scmp.eq.s32.totalorder %s27, 0
      %p148 = por %p146, %p147
      %s149 = ssub.s32 %s21, %s28
      %p150 = scmp.eq.s32.totalorder %s149, 0
      %s152 = sadd.s32 %s151, 1
      %s153 = scalar_select %p150, %s151, %s152
      %p156 = pneg %p150
      %p157 = scmp.eq.s32.totalorder %s21, 1
      %p158 = por %p156, %p157
      %p159 = scmp.ne.s32.totalorder %s151, %s154
      %p160 = scmp.eq.s32.totalorder %s21, 0
      %p161 = por %p159, %p160
      %p162 = scmp.ne.s32.totalorder %s151, %s154
      %p163 = scmp.eq.s32.totalorder %s26, 1
      %p164 = por %p162, %p163
      %p165 = scmp.ne.s32.totalorder %s154, %s155
      %p166 = scmp.eq.s32.totalorder %s26, 0
      %p167 = por %p165, %p166
      %p168 = scmp.ne.s32.totalorder %s154, %s155
      %p169 = scmp.eq.s32.totalorder %s27, 1
      %p170 = por %p168, %p169
      %p172 = scmp.ne.s32.totalorder %s155, %s171
      %p173 = scmp.eq.s32.totalorder %s27, 0
      %p174 = por %p172, %p173
      %p175 = scmp.le.s32.totalorder 1, %s21
      %p176 = scmp.lt.s32.totalorder %s21, 3
      %p177 = pnand %p175, %p176
      %p178 = pneg %p177
      // Predicated region
      $region9: #{db_head_forward.3} parent=5 // pred_check
        _
      $region10: #{db_head_forward.3} parent=5 // pred_check_branch
        %180 = sbr.rel (%p177) target = $region12
      $region11: #{db_head_forward.3} parent=5 // pred_region
        %s181 = ssub.s32 %s21, 1
        // Predicated region
        $region13: #{db_head_forward.3} parent=11 // pred_check
          %p182 = pneg %p68
        $region14: #{db_head_forward.3} parent=11 // pred_check_branch
          %184 = sbr.rel (%p182) target = $region16
        $region15: #{db_head_forward.3} parent=11 // pred_region
          _
        $region16: #{db_head_forward.3} parent=11 // pred_fallthru
          _
        // Predicated region
        $region17: #{db_head_forward.3} parent=11 // pred_check
          %p185 = pneg %p89
        $region18: #{db_head_forward.3} parent=11 // pred_check_branch
          %187 = sbr.rel (%p185) target = $region20
        $region19: #{db_head_forward.3} parent=11 // pred_region
          _
        $region20: #{db_head_forward.3} parent=11 // pred_fallthru
          _
      $region12: #{db_head_forward.3} parent=5 // pred_fallthru
        _
      %p188 = scmp.lt.s32.totalorder %s21, 2
      // Predicated region
      $region21: #{db_head_forward.3} parent=5 // pred_check
        %p189 = pneg %p188
      $region22: #{db_head_forward.3} parent=5 // pred_check_branch
        %191 = sbr.rel (%p189) target = $region24
      $region23: #{db_head_forward.3} parent=5 // pred_region
        // Predicated region
        $region25: #{db_head_forward.3} parent=23 // pred_check
          %p192 = pneg %p41
        $region26: #{db_head_forward.3} parent=23 // pred_check_branch
          %194 = sbr.rel (%p192) target = $region28
        $region27: #{db_head_forward.3} parent=23 // pred_region
          %p195 = scmp.lt.s32.totalorder %s21, 1
          %s196 = scalar_select %p195, %s21, 1
          %s197 = smul.addr %s196, 32
          %s198 = smul.addr %s197, 4
          %s199 = scalar_lea.vmem %s0, %s198
        $region28: #{db_head_forward.3} parent=23 // pred_fallthru
          _
        // Predicated region
        $region29: #{db_head_forward.3} parent=23 // pred_check
          %p200 = pneg %p109
        $region30: #{db_head_forward.3} parent=23 // pred_check_branch
          %202 = sbr.rel (%p200) target = $region32
        $region31: #{db_head_forward.3} parent=23 // pred_region
          %s203 = sand.u32 %s99, 1
          %s204 = scalar_lea.sflag [#allocation4], %s203
          %s205 = sand.u32 %s99, 1
          %s206 = smul.addr %s205, 128
          %s207 = scalar_lea.smem [#allocation2], %s206
          %s209 = ssub.s32 16, 16
          %210 = vsyncadd %s204, %s209
          %s211 = scalar_lea.vmem %s3, %s21
          %s213 = sshll.u32 %s211, 4
          %s214 = int_to_ptr.vmem [resolvable:$true] %s213
          %216 = dma.vmem_to_smem %s214, 16, %s207, %s204
        $region32: #{db_head_forward.3} parent=23 // pred_fallthru
          _
      $region24: #{db_head_forward.3} parent=5 // pred_fallthru
        _
      %p217 = scmp.le.s32.totalorder 1, %s21
      %p218 = scmp.lt.s32.totalorder %s21, 3
      %p219 = pnand %p217, %p218
      %p220 = pneg %p219
      // Predicated region
      $region33: #{db_head_forward.3} parent=5 // pred_check
        _
      $region34: #{db_head_forward.3} parent=5 // pred_check_branch
        %222 = sbr.rel (%p219) target = $region36
      $region35: #{db_head_forward.3} parent=5 // pred_region
        %s223 = ssub.s32 %s21, 1
        %s224 = sand.u32 %s102, 1
        %s225 = scalar_lea.sflag [#allocation4], %s224
        %s226 = sand.u32 %s102, 1
        %s227 = smul.addr %s226, 128
        %s228 = scalar_lea.smem [#allocation2], %s227
        // Predicated region
        $region37: #{db_head_forward.3} parent=35 // pred_check
          %p229 = pneg %p115
        $region38: #{db_head_forward.3} parent=35 // pred_check_branch
          %231 = sbr.rel (%p229) target = $region40
        $region39: #{db_head_forward.3} parent=35 // pred_region
          %232 = dma.done %s225, 16
        $region40: #{db_head_forward.3} parent=35 // pred_fallthru
          _
        %233 = sfence
        %p234 = scmp.lt.s32.totalorder %s26, 1
        %s235 = scalar_select %p234, %s26, 1
        %s236 = smul.addr %s235, 32
        %s237 = smul.addr %s236, 4
        %s238 = scalar_lea.vmem %s0, %s237
        %p239 = pneg %p47
        %p240 = pneg %p44
        %p241 = pneg %p68
        %p242 = pneg %p65
        %p243 = pneg %p89
        %p244 = pneg %p86
        %s245 = sand.u32 %s102, 1
        %s246 = scalar_lea.sflag [#allocation4], %s245
        %s247 = sand.u32 %s102, 1
        %s248 = smul.addr %s247, 128
        %s249 = scalar_lea.smem [#allocation2], %s248
        %p250 = pneg %p115
        %p251 = pneg %p112
        %p252 = pneg %p141
        %p253 = pneg %p138
        %s254 = sand.u32 %s128, 1
        %s255 = scalar_lea.sflag [#allocation3], %s254
        %s256 = sand.u32 %s128, 1
        %s257 = smul.addr %s256, 24
        %s258 = scalar_lea.vmem [#allocation5], %s257
        %p259 = pneg %p167
        %p260 = pneg %p164
        %s261 = sand.u32 %s154, 1
        %s262 = scalar_lea.sflag [#allocation7], %s261
        %s263 = sand.u32 %s154, 1
        %s264 = smul.addr %s263, 24
        %s265 = scalar_lea.vmem [#allocation6], %s264
        %p266 = scmp.lt.s32.totalorder %s26, 1
        %s267 = scalar_select %p266, %s26, 1
        %s268 = smul.addr %s267, 32
        %s269 = smul.addr %s268, 4
        %s270 = scalar_lea.vmem %s0, %s269
        %v272 = vld [vmem:[%s270] sm:$0xf]
        %v273 = vld [vmem:[%s270 + $0x4] sm:$0xf]
        %v274 = vld [vmem:[%s270 + $0x8] sm:$0xf]
        %v275 = vld [vmem:[%s270 + $0xc] sm:$0xf]
        %v276 = vld [vmem:[%s270 + $0x10] sm:$0xf]
        %v277 = vld [vmem:[%s270 + $0x14] sm:$0xf]
        %v278 = vld [vmem:[%s270 + $0x18] sm:$0xf]
        %v279 = vld [vmem:[%s270 + $0x1c] sm:$0xf]
        %v280 = vld [vmem:[%s270 + $0x20] sm:$0xf]
        %v281 = vld [vmem:[%s270 + $0x24] sm:$0xf]
        %v282 = vld [vmem:[%s270 + $0x28] sm:$0xf]
        %v283 = vld [vmem:[%s270 + $0x2c] sm:$0xf]
        %v284 = vld [vmem:[%s270 + $0x30] sm:$0xf]
        %v285 = vld [vmem:[%s270 + $0x34] sm:$0xf]
        %v286 = vld [vmem:[%s270 + $0x38] sm:$0xf]
        %v287 = vld [vmem:[%s270 + $0x3c] sm:$0xf]
        %v288 = vld [vmem:[%s270 + $0x40] sm:$0xf]
        %v289 = vld [vmem:[%s270 + $0x44] sm:$0xf]
        %v290 = vld [vmem:[%s270 + $0x48] sm:$0xf]
        %v291 = vld [vmem:[%s270 + $0x4c] sm:$0xf]
        %v292 = vld [vmem:[%s270 + $0x50] sm:$0xf]
        %v293 = vld [vmem:[%s270 + $0x54] sm:$0xf]
        %v294 = vld [vmem:[%s270 + $0x58] sm:$0xf]
        %v295 = vld [vmem:[%s270 + $0x5c] sm:$0xf]
        %v296 = vld [vmem:[%s270 + $0x60] sm:$0xf]
        %v297 = vld [vmem:[%s270 + $0x64] sm:$0xf]
        %v298 = vld [vmem:[%s270 + $0x68] sm:$0xf]
        %v299 = vld [vmem:[%s270 + $0x6c] sm:$0xf]
        %v300 = vld [vmem:[%s270 + $0x70] sm:$0xf]
        %v301 = vld [vmem:[%s270 + $0x74] sm:$0xf]
        %v302 = vld [vmem:[%s270 + $0x78] sm:$0xf]
        %v303 = vld [vmem:[%s270 + $0x7c] sm:$0xf]
        %v304 = vld [vmem:[%s2] sm:$0xf]
        %v305 = vld [vmem:[%s2 + $0x4] sm:$0xf]
        %v323 = vunpack.c.l.s4 1983009808
        %v324 = vunpack.c.0.s8 %v323
        %v325 = vlaneseq
        %v326 = vshrl.u32 %v325, 7
        %v327 = vsub.s32 %v324, %v326
        %v328 = vrot.slane %v272, %v327
        %v329 = vcombine.high %v328, %v328
        %v331 = vunpack.c.l.s4 1983009808
        %v332 = vunpack.c.0.s8 %v331
        %v333 = vlaneseq
        %v334 = vshrl.u32 %v333, 7
        %v335 = vsub.s32 %v332, %v334
        %v336 = vrot.slane %v274, %v335
        %v337 = vcombine.high %v336, %v336
        %v339 = vunpack.c.l.s4 1983009808
        %v340 = vunpack.c.0.s8 %v339
        %v341 = vlaneseq
        %v342 = vshrl.u32 %v341, 7
        %v343 = vsub.s32 %v340, %v342
        %v344 = vrot.slane %v276, %v343
        %v345 = vcombine.high %v344, %v344
        %v347 = vunpack.c.l.s4 1983009808
        %v348 = vunpack.c.0.s8 %v347
        %v349 = vlaneseq
        %v350 = vshrl.u32 %v349, 7
        %v351 = vsub.s32 %v348, %v350
        %v352 = vrot.slane %v278, %v351
        %v353 = vcombine.high %v352, %v352
        %v355 = vunpack.c.l.s4 1983009808
        %v356 = vunpack.c.0.s8 %v355
        %v357 = vlaneseq
        %v358 = vshrl.u32 %v357, 7
        %v359 = vsub.s32 %v356, %v358
        %v360 = vrot.slane %v280, %v359
        %v361 = vcombine.high %v360, %v360
        %v363 = vunpack.c.l.s4 1983009808
        %v364 = vunpack.c.0.s8 %v363
        %v365 = vlaneseq
        %v366 = vshrl.u32 %v365, 7
        %v367 = vsub.s32 %v364, %v366
        %v368 = vrot.slane %v282, %v367
        %v369 = vcombine.high %v368, %v368
        %v371 = vunpack.c.l.s4 1983009808
        %v372 = vunpack.c.0.s8 %v371
        %v373 = vlaneseq
        %v374 = vshrl.u32 %v373, 7
        %v375 = vsub.s32 %v372, %v374
        %v376 = vrot.slane %v284, %v375
        %v377 = vcombine.high %v376, %v376
        %v379 = vunpack.c.l.s4 1983009808
        %v380 = vunpack.c.0.s8 %v379
        %v381 = vlaneseq
        %v382 = vshrl.u32 %v381, 7
        %v383 = vsub.s32 %v380, %v382
        %v384 = vrot.slane %v286, %v383
        %v385 = vcombine.high %v384, %v384
        %v387 = vunpack.c.l.s4 1983009808
        %v388 = vunpack.c.0.s8 %v387
        %v389 = vlaneseq
        %v390 = vshrl.u32 %v389, 7
        %v391 = vsub.s32 %v388, %v390
        %v392 = vrot.slane %v288, %v391
        %v393 = vcombine.high %v392, %v392
        %v395 = vunpack.c.l.s4 1983009808
        %v396 = vunpack.c.0.s8 %v395
        %v397 = vlaneseq
        %v398 = vshrl.u32 %v397, 7
        %v399 = vsub.s32 %v396, %v398
        %v400 = vrot.slane %v290, %v399
        %v401 = vcombine.high %v400, %v400
        %v403 = vunpack.c.l.s4 1983009808
        %v404 = vunpack.c.0.s8 %v403
        %v405 = vlaneseq
        %v406 = vshrl.u32 %v405, 7
        %v407 = vsub.s32 %v404, %v406
        %v408 = vrot.slane %v292, %v407
        %v409 = vcombine.high %v408, %v408
        %v411 = vunpack.c.l.s4 1983009808
        %v412 = vunpack.c.0.s8 %v411
        %v413 = vlaneseq
        %v414 = vshrl.u32 %v413, 7
        %v415 = vsub.s32 %v412, %v414
        %v416 = vrot.slane %v294, %v415
        %v417 = vcombine.high %v416, %v416
        %v419 = vunpack.c.l.s4 1983009808
        %v420 = vunpack.c.0.s8 %v419
        %v421 = vlaneseq
        %v422 = vshrl.u32 %v421, 7
        %v423 = vsub.s32 %v420, %v422
        %v424 = vrot.slane %v296, %v423
        %v425 = vcombine.high %v424, %v424
        %v427 = vunpack.c.l.s4 1983009808
        %v428 = vunpack.c.0.s8 %v427
        %v429 = vlaneseq
        %v430 = vshrl.u32 %v429, 7
        %v431 = vsub.s32 %v428, %v430
        %v432 = vrot.slane %v298, %v431
        %v433 = vcombine.high %v432, %v432
        %v435 = vunpack.c.l.s4 1983009808
        %v436 = vunpack.c.0.s8 %v435
        %v437 = vlaneseq
        %v438 = vshrl.u32 %v437, 7
        %v439 = vsub.s32 %v436, %v438
        %v440 = vrot.slane %v300, %v439
        %v441 = vcombine.high %v440, %v440
        %v443 = vunpack.c.l.s4 1983009808
        %v444 = vunpack.c.0.s8 %v443
        %v445 = vlaneseq
        %v446 = vshrl.u32 %v445, 7
        %v447 = vsub.s32 %v444, %v446
        %v448 = vrot.slane %v302, %v447
        %v449 = vcombine.high %v448, %v448
        %s450 = scalar_lea.vmem %s2, 8
        %v451 = vld [vmem:[%s450] sm:$0xf]
        %v452 = vld [vmem:[%s450 + $0x4] sm:$0xf]
        %v453 = vcombine.low %v329, %v337
        %v454 = vcombine.low %v345, %v353
        %v456 = vunpack.c.l.s4 1983009808
        %v457 = vunpack.c.0.s8 %v456
        %v458 = vlaneseq
        %v459 = vshrl.u32 %v458, 7
        %v460 = vsub.s32 %v457, %v459
        %v461 = vrot.slane %v453, %v460
        %v463 = vunpack.c.l.s4 1983009808
        %v464 = vunpack.c.0.s8 %v463
        %v465 = vlaneseq
        %v466 = vshrl.u32 %v465, 7
        %v467 = vsub.s32 %v464, %v466
        %v468 = vrot.slane %v454, %v467
        %v469 = vcombine.low %v461, %v468
        %v470 = vcombine.low %v361, %v369
        %v471 = vcombine.low %v377, %v385
        %v473 = vunpack.c.l.s4 1983009808
        %v474 = vunpack.c.0.s8 %v473
        %v475 = vlaneseq
        %v476 = vshrl.u32 %v475, 7
        %v477 = vsub.s32 %v474, %v476
        %v478 = vrot.slane %v470, %v477
        %v480 = vunpack.c.l.s4 1983009808
        %v481 = vunpack.c.0.s8 %v480
        %v482 = vlaneseq
        %v483 = vshrl.u32 %v482, 7
        %v484 = vsub.s32 %v481, %v483
        %v485 = vrot.slane %v471, %v484
        %v486 = vcombine.low %v478, %v485
        %v487 = vcombine.low %v393, %v401
        %v488 = vcombine.low %v409, %v417
        %v490 = vunpack.c.l.s4 1983009808
        %v491 = vunpack.c.0.s8 %v490
        %v492 = vlaneseq
        %v493 = vshrl.u32 %v492, 7
        %v494 = vsub.s32 %v491, %v493
        %v495 = vrot.slane %v487, %v494
        %v497 = vunpack.c.l.s4 1983009808
        %v498 = vunpack.c.0.s8 %v497
        %v499 = vlaneseq
        %v500 = vshrl.u32 %v499, 7
        %v501 = vsub.s32 %v498, %v500
        %v502 = vrot.slane %v488, %v501
        %v503 = vcombine.low %v495, %v502
        %v504 = vcombine.low %v425, %v433
        %v505 = vcombine.low %v441, %v449
        %v507 = vunpack.c.l.s4 1983009808
        %v508 = vunpack.c.0.s8 %v507
        %v509 = vlaneseq
        %v510 = vshrl.u32 %v509, 7
        %v511 = vsub.s32 %v508, %v510
        %v512 = vrot.slane %v504, %v511
        %v514 = vunpack.c.l.s4 1983009808
        %v515 = vunpack.c.0.s8 %v514
        %v516 = vlaneseq
        %v517 = vshrl.u32 %v516, 7
        %v518 = vsub.s32 %v515, %v517
        %v519 = vrot.slane %v505, %v518
        %v520 = vcombine.low %v512, %v519
        %v523 = vunpack.c.l.b16 %v451
        %v524 = vunpack.c.l.b16 %v452
        %v525 = vpack.c.b16 %v524, %v523
        %vm527 = vcmask 130048
        %v529 = vsel %vm527, %v469, 0
        %v532 = vsel %vm527, %v486, 0
        %v535 = vsel %vm527, %v503, 0
        %v538 = vsel %vm527, %v520, 0
        %540 = vmatprep.subr.bf16.mxu0 0
        %541 = vmatpush1.bf16.msra.mxu0 %v525
        %542 = vmatprep.subr.bf16.mxu0 0
        %543 = vmatpush1.bf16.msra.mxu0 0
        %544 = vmatprep.subr.bf16.mxu0 0
        %545 = vmatpush1.bf16.msra.mxu0 0
        %546 = vmatprep.subr.bf16.mxu0 0
        %547 = vmatpush1.bf16.msra.mxu0 0
        %548 = vmatprep.subr.bf16.mxu0 0
        %549 = vmatpush1.bf16.msra.mxu0 0
        %550 = vmatprep.subr.bf16.mxu0 0
        %551 = vmatpush1.bf16.msra.mxu0 0
        %552 = vmatprep.subr.bf16.mxu0 0
        %553 = vmatpush1.bf16.msra.mxu0 0
        %554 = vmatprep.subr.bf16.mxu0 0
        %555 = vmatpush1.bf16.msra.mxu0 0
        %556 = vmatprep.subr.bf16.mxu0 0
        %557 = vmatpush1.bf16.msra.mxu0 0
        %558 = vmatprep.subr.bf16.mxu0 0
        %559 = vmatpush1.bf16.msra.mxu0 0
        %560 = vmatprep.subr.bf16.mxu0 0
        %561 = vmatpush1.bf16.msra.mxu0 0
        %562 = vmatprep.subr.bf16.mxu0 0
        %563 = vmatpush1.bf16.msra.mxu0 0
        %564 = vmatprep.subr.bf16.mxu0 0
        %565 = vmatpush1.bf16.msra.mxu0 0
        %566 = vmatprep.subr.bf16.mxu0 0
        %567 = vmatpush1.bf16.msra.mxu0 0
        %568 = vmatprep.subr.bf16.mxu0 0
        %569 = vmatpush1.bf16.msra.mxu0 0
        %570 = vmatprep.subr.bf16.mxu0 0
        %571 = vmatpush1.bf16.msra.mxu0 0
        %572 = vmatprep.mubr.bf16.mxu0 0
        %573 = vmatmul.mubr.bf16.gmra.mrb[0].mxu0 %v529
        %v574 = vpop.f32.mrb[0].mxu0
        %v575 = vadd.f32 0.0, %v574
        %v576 = vpop.f32.mrb[0].mxu0
        %v577 = vpop.f32.mrb[0].mxu0
        %v578 = vadd.f32 0.0, %v577
        %v579 = vpop.f32.mrb[0].mxu0
        %580 = vmatprep.mubr.bf16.mxu0 0
        %581 = vmatmul.mubr.bf16.gmra.mrb[0].mxu0 %v532
        %v582 = vpop.f32.mrb[0].mxu0
        %v583 = vadd.f32 0.0, %v582
        %v584 = vpop.f32.mrb[0].mxu0
        %v585 = vpop.f32.mrb[0].mxu0
        %v586 = vadd.f32 0.0, %v585
        %v587 = vpop.f32.mrb[0].mxu0
        %588 = vmatprep.mubr.bf16.mxu0 0
        %589 = vmatmul.mubr.bf16.gmra.mrb[0].mxu0 %v535
        %v590 = vpop.f32.mrb[0].mxu0
        %v591 = vadd.f32 0.0, %v590
        %v592 = vpop.f32.mrb[0].mxu0
        %v593 = vpop.f32.mrb[0].mxu0
        %v594 = vadd.f32 0.0, %v593
        %v595 = vpop.f32.mrb[0].mxu0
        %596 = vmatprep.mubr.bf16.mxu0 0
        %597 = vmatmul.mubr.bf16.gmra.mrb[0].mxu0 %v538
        %v598 = vpop.f32.mrb[0].mxu0
        %v599 = vadd.f32 0.0, %v598
        %v600 = vpop.f32.mrb[0].mxu0
        %v601 = vpop.f32.mrb[0].mxu0
        %v602 = vadd.f32 0.0, %v601
        %v603 = vpop.f32.mrb[0].mxu0
        %604 = vdwg.mxu0
        %v605 = vcombine.low %v272, %v274
        %v606 = vcombine.low %v276, %v278
        %v608 = vunpack.c.l.s4 1983009808
        %v609 = vunpack.c.0.s8 %v608
        %v610 = vlaneseq
        %v611 = vshrl.u32 %v610, 7
        %v612 = vsub.s32 %v609, %v611
        %v613 = vrot.slane %v605, %v612
        %v615 = vunpack.c.l.s4 1983009808
        %v616 = vunpack.c.0.s8 %v615
        %v617 = vlaneseq
        %v618 = vshrl.u32 %v617, 7
        %v619 = vsub.s32 %v616, %v618
        %v620 = vrot.slane %v606, %v619
        %v621 = vcombine.low %v613, %v620
        %v622 = vcombine.low %v280, %v282
        %v623 = vcombine.low %v284, %v286
        %v625 = vunpack.c.l.s4 1983009808
        %v626 = vunpack.c.0.s8 %v625
        %v627 = vlaneseq
        %v628 = vshrl.u32 %v627, 7
        %v629 = vsub.s32 %v626, %v628
        %v630 = vrot.slane %v622, %v629
        %v632 = vunpack.c.l.s4 1983009808
        %v633 = vunpack.c.0.s8 %v632
        %v634 = vlaneseq
        %v635 = vshrl.u32 %v634, 7
        %v636 = vsub.s32 %v633, %v635
        %v637 = vrot.slane %v623, %v636
        %v638 = vcombine.low %v630, %v637
        %v639 = vcombine.low %v288, %v290
        %v640 = vcombine.low %v292, %v294
        %v642 = vunpack.c.l.s4 1983009808
        %v643 = vunpack.c.0.s8 %v642
        %v644 = vlaneseq
        %v645 = vshrl.u32 %v644, 7
        %v646 = vsub.s32 %v643, %v645
        %v647 = vrot.slane %v639, %v646
        %v649 = vunpack.c.l.s4 1983009808
        %v650 = vunpack.c.0.s8 %v649
        %v651 = vlaneseq
        %v652 = vshrl.u32 %v651, 7
        %v653 = vsub.s32 %v650, %v652
        %v654 = vrot.slane %v640, %v653
        %v655 = vcombine.low %v647, %v654
        %v656 = vcombine.low %v296, %v298
        %v657 = vcombine.low %v300, %v302
        %v659 = vunpack.c.l.s4 1983009808
        %v660 = vunpack.c.0.s8 %v659
        %v661 = vlaneseq
        %v662 = vshrl.u32 %v661, 7
        %v663 = vsub.s32 %v660, %v662
        %v664 = vrot.slane %v656, %v663
        %v666 = vunpack.c.l.s4 1983009808
        %v667 = vunpack.c.0.s8 %v666
        %v668 = vlaneseq
        %v669 = vshrl.u32 %v668, 7
        %v670 = vsub.s32 %v667, %v669
        %v671 = vrot.slane %v657, %v670
        %v672 = vcombine.low %v664, %v671
        %v675 = vunpack.c.l.b16 %v304
        %v676 = vunpack.c.l.b16 %v305
        %v677 = vpack.c.b16 %v676, %v675
        %v680 = vsel %vm527, %v621, 0
        %v683 = vsel %vm527, %v638, 0
        %v686 = vsel %vm527, %v655, 0
        %v689 = vsel %vm527, %v672, 0
        %691 = vmatprep.subr.bf16.mxu0 0
        %692 = vmatpush1.bf16.msra.mxu0 %v677
        %693 = vmatprep.subr.bf16.mxu0 0
        %694 = vmatpush1.bf16.msra.mxu0 0
        %695 = vmatprep.subr.bf16.mxu0 0
        %696 = vmatpush1.bf16.msra.mxu0 0
        %697 = vmatprep.subr.bf16.mxu0 0
        %698 = vmatpush1.bf16.msra.mxu0 0
        %699 = vmatprep.subr.bf16.mxu0 0
        %700 = vmatpush1.bf16.msra.mxu0 0
        %701 = vmatprep.subr.bf16.mxu0 0
        %702 = vmatpush1.bf16.msra.mxu0 0
        %703 = vmatprep.subr.bf16.mxu0 0
        %704 = vmatpush1.bf16.msra.mxu0 0
        %705 = vmatprep.subr.bf16.mxu0 0
        %706 = vmatpush1.bf16.msra.mxu0 0
        %707 = vmatprep.subr.bf16.mxu0 0
        %708 = vmatpush1.bf16.msra.mxu0 0
        %709 = vmatprep.subr.bf16.mxu0 0
        %710 = vmatpush1.bf16.msra.mxu0 0
        %711 = vmatprep.subr.bf16.mxu0 0
        %712 = vmatpush1.bf16.msra.mxu0 0
        %713 = vmatprep.subr.bf16.mxu0 0
        %714 = vmatpush1.bf16.msra.mxu0 0
        %715 = vmatprep.subr.bf16.mxu0 0
        %716 = vmatpush1.bf16.msra.mxu0 0
        %717 = vmatprep.subr.bf16.mxu0 0
        %718 = vmatpush1.bf16.msra.mxu0 0
        %719 = vmatprep.subr.bf16.mxu0 0
        %720 = vmatpush1.bf16.msra.mxu0 0
        %721 = vmatprep.subr.bf16.mxu0 0
        %722 = vmatpush1.bf16.msra.mxu0 0
        %723 = vmatprep.mubr.bf16.mxu0 0
        %724 = vmatmul.mubr.bf16.gmra.mrb[0].mxu0 %v680
        %v725 = vpop.f32.mrb[0].mxu0
        %v726 = vadd.f32 %v575, %v725
        %v727 = vpop.f32.mrb[0].mxu0
        %v728 = vpop.f32.mrb[0].mxu0
        %v729 = vadd.f32 %v578, %v728
        %v730 = vpop.f32.mrb[0].mxu0
        %731 = vmatprep.mubr.bf16.mxu0 0
        %732 = vmatmul.mubr.bf16.gmra.mrb[0].mxu0 %v683
        %v733 = vpop.f32.mrb[0].mxu0
        %v734 = vadd.f32 %v583, %v733
        %v735 = vpop.f32.mrb[0].mxu0
        %v736 = vpop.f32.mrb[0].mxu0
        %v737 = vadd.f32 %v586, %v736
        %v738 = vpop.f32.mrb[0].mxu0
        %739 = vmatprep.mubr.bf16.mxu0 0
        %740 = vmatmul.mubr.bf16.gmra.mrb[0].mxu0 %v686
        %v741 = vpop.f32.mrb[0].mxu0
        %v742 = vadd.f32 %v591, %v741
        %v743 = vpop.f32.mrb[0].mxu0
        %v744 = vpop.f32.mrb[0].mxu0
        %v745 = vadd.f32 %v594, %v744
        %v746 = vpop.f32.mrb[0].mxu0
        %747 = vmatprep.mubr.bf16.mxu0 0
        %748 = vmatmul.mubr.bf16.gmra.mrb[0].mxu0 %v689
        %v749 = vpop.f32.mrb[0].mxu0
        %v750 = vadd.f32 %v599, %v749
        %v751 = vpop.f32.mrb[0].mxu0
        %v752 = vpop.f32.mrb[0].mxu0
        %v753 = vadd.f32 %v602, %v752
        %v754 = vpop.f32.mrb[0].mxu0
        %755 = vdwg.mxu0
        %s756 = scalar_lea.vmem %s2, 16
        %v757 = vld [vmem:[%s756] sm:$0xf]
        %v758 = vld [vmem:[%s756 + $0x4] sm:$0xf]
        %v775 = vcombine.low %v273, %v275
        %v776 = vcombine.low %v277, %v279
        %v778 = vunpack.c.l.s4 1983009808
        %v779 = vunpack.c.0.s8 %v778
        %v780 = vlaneseq
        %v781 = vshrl.u32 %v780, 7
        %v782 = vsub.s32 %v779, %v781
        %v783 = vrot.slane %v775, %v782
        %v785 = vunpack.c.l.s4 1983009808
        %v786 = vunpack.c.0.s8 %v785
        %v787 = vlaneseq
        %v788 = vshrl.u32 %v787, 7
        %v789 = vsub.s32 %v786, %v788
        %v790 = vrot.slane %v776, %v789
        %v791 = vcombine.low %v783, %v790
        %v792 = vcombine.low %v281, %v283
        %v793 = vcombine.low %v285, %v287
        %v795 = vunpack.c.l.s4 1983009808
        %v796 = vunpack.c.0.s8 %v795
        %v797 = vlaneseq
        %v798 = vshrl.u32 %v797, 7
        %v799 = vsub.s32 %v796, %v798
        %v800 = vrot.slane %v792, %v799
        %v802 = vunpack.c.l.s4 1983009808
        %v803 = vunpack.c.0.s8 %v802
        %v804 = vlaneseq
        %v805 = vshrl.u32 %v804, 7
        %v806 = vsub.s32 %v803, %v805
        %v807 = vrot.slane %v793, %v806
        %v808 = vcombine.low %v800, %v807
        %v809 = vcombine.low %v289, %v291
        %v810 = vcombine.low %v293, %v295
        %v812 = vunpack.c.l.s4 1983009808
        %v813 = vunpack.c.0.s8 %v812
        %v814 = vlaneseq
        %v815 = vshrl.u32 %v814, 7
        %v816 = vsub.s32 %v813, %v815
        %v817 = vrot.slane %v809, %v816
        %v819 = vunpack.c.l.s4 1983009808
        %v820 = vunpack.c.0.s8 %v819
        %v821 = vlaneseq
        %v822 = vshrl.u32 %v821, 7
        %v823 = vsub.s32 %v820, %v822
        %v824 = vrot.slane %v810, %v823
        %v825 = vcombine.low %v817, %v824
        %v826 = vcombine.low %v297, %v299
        %v827 = vcombine.low %v301, %v303
        %v829 = vunpack.c.l.s4 1983009808
        %v830 = vunpack.c.0.s8 %v829
        %v831 = vlaneseq
        %v832 = vshrl.u32 %v831, 7
        %v833 = vsub.s32 %v830, %v832
        %v834 = vrot.slane %v826, %v833
        %v836 = vunpack.c.l.s4 1983009808
        %v837 = vunpack.c.0.s8 %v836
        %v838 = vlaneseq
        %v839 = vshrl.u32 %v838, 7
        %v840 = vsub.s32 %v837, %v839
        %v841 = vrot.slane %v827, %v840
        %v842 = vcombine.low %v834, %v841
        %v845 = vunpack.c.l.b16 %v757
        %v846 = vunpack.c.l.b16 %v758
        %v847 = vpack.c.b16 %v846, %v845
        %v850 = vsel %vm527, %v791, 0
        %v853 = vsel %vm527, %v808, 0
        %v856 = vsel %vm527, %v825, 0
        %v859 = vsel %vm527, %v842, 0
        %861 = vmatprep.subr.bf16.mxu0 0
        %862 = vmatpush1.bf16.msra.mxu0 %v847
        %863 = vmatprep.subr.bf16.mxu0 0
        %864 = vmatpush1.bf16.msra.mxu0 0
        %865 = vmatprep.subr.bf16.mxu0 0
        %866 = vmatpush1.bf16.msra.mxu0 0
        %867 = vmatprep.subr.bf16.mxu0 0
        %868 = vmatpush1.bf16.msra.mxu0 0
        %869 = vmatprep.subr.bf16.mxu0 0
        %870 = vmatpush1.bf16.msra.mxu0 0
        %871 = vmatprep.subr.bf16.mxu0 0
        %872 = vmatpush1.bf16.msra.mxu0 0
        %873 = vmatprep.subr.bf16.mxu0 0
        %874 = vmatpush1.bf16.msra.mxu0 0
        %875 = vmatprep.subr.bf16.mxu0 0
        %876 = vmatpush1.bf16.msra.mxu0 0
        %877 = vmatprep.subr.bf16.mxu0 0
        %878 = vmatpush1.bf16.msra.mxu0 0
        %879 = vmatprep.subr.bf16.mxu0 0
        %880 = vmatpush1.bf16.msra.mxu0 0
        %881 = vmatprep.subr.bf16.mxu0 0
        %882 = vmatpush1.bf16.msra.mxu0 0
        %883 = vmatprep.subr.bf16.mxu0 0
        %884 = vmatpush1.bf16.msra.mxu0 0
        %885 = vmatprep.subr.bf16.mxu0 0
        %886 = vmatpush1.bf16.msra.mxu0 0
        %887 = vmatprep.subr.bf16.mxu0 0
        %888 = vmatpush1.bf16.msra.mxu0 0
        %889 = vmatprep.subr.bf16.mxu0 0
        %890 = vmatpush1.bf16.msra.mxu0 0
        %891 = vmatprep.subr.bf16.mxu0 0
        %892 = vmatpush1.bf16.msra.mxu0 0
        %893 = vmatprep.mubr.bf16.mxu0 0
        %894 = vmatmul.mubr.bf16.gmra.mrb[0].mxu0 %v850
        %v895 = vpop.f32.mrb[0].mxu0
        %v896 = vadd.f32 0.0, %v895
        %v897 = vpop.f32.mrb[0].mxu0
        %v898 = vpop.f32.mrb[0].mxu0
        %v899 = vadd.f32 0.0, %v898
        %v900 = vpop.f32.mrb[0].mxu0
        %901 = vmatprep.mubr.bf16.mxu0 0
        %902 = vmatmul.mubr.bf16.gmra.mrb[0].mxu0 %v853
        %v903 = vpop.f32.mrb[0].mxu0
        %v904 = vadd.f32 0.0, %v903
        %v905 = vpop.f32.mrb[0].mxu0
        %v906 = vpop.f32.mrb[0].mxu0
        %v907 = vadd.f32 0.0, %v906
        %v908 = vpop.f32.mrb[0].mxu0
        %909 = vmatprep.mubr.bf16.mxu0 0
        %910 = vmatmul.mubr.bf16.gmra.mrb[0].mxu0 %v856
        %v911 = vpop.f32.mrb[0].mxu0
        %v912 = vadd.f32 0.0, %v911
        %v913 = vpop.f32.mrb[0].mxu0
        %v914 = vpop.f32.mrb[0].mxu0
        %v915 = vadd.f32 0.0, %v914
        %v916 = vpop.f32.mrb[0].mxu0
        %917 = vmatprep.mubr.bf16.mxu0 0
        %918 = vmatmul.mubr.bf16.gmra.mrb[0].mxu0 %v859
        %v919 = vpop.f32.mrb[0].mxu0
        %v920 = vadd.f32 0.0, %v919
        %v921 = vpop.f32.mrb[0].mxu0
        %v922 = vpop.f32.mrb[0].mxu0
        %v923 = vadd.f32 0.0, %v922
        %v924 = vpop.f32.mrb[0].mxu0
        %925 = vdwg.mxu0
        %v926 = vadd.f32 %v726, %v896
        %v927 = vadd.f32 %v729, %v899
        %v928 = vadd.f32 %v734, %v904
        %v929 = vadd.f32 %v737, %v907
        %v930 = vadd.f32 %v742, %v912
        %v931 = vadd.f32 %v745, %v915
        %v932 = vadd.f32 %v750, %v920
        %v933 = vadd.f32 %v753, %v923
        %v935 = vunpack.c.l.s4 1983009808
        %v936 = vunpack.c.0.s8 %v935
        %v937 = vlaneseq
        %v938 = vshrl.u32 %v937, 7
        %v939 = vsub.s32 %v936, %v938
        %v940 = vrot.slane %v273, %v939
        %v941 = vcombine.high %v940, %v940
        %v943 = vunpack.c.l.s4 1983009808
        %v944 = vunpack.c.0.s8 %v943
        %v945 = vlaneseq
        %v946 = vshrl.u32 %v945, 7
        %v947 = vsub.s32 %v944, %v946
        %v948 = vrot.slane %v275, %v947
        %v949 = vcombine.high %v948, %v948
        %v951 = vunpack.c.l.s4 1983009808
        %v952 = vunpack.c.0.s8 %v951
        %v953 = vlaneseq
        %v954 = vshrl.u32 %v953, 7
        %v955 = vsub.s32 %v952, %v954
        %v956 = vrot.slane %v277, %v955
        %v957 = vcombine.high %v956, %v956
        %v959 = vunpack.c.l.s4 1983009808
        %v960 = vunpack.c.0.s8 %v959
        %v961 = vlaneseq
        %v962 = vshrl.u32 %v961, 7
        %v963 = vsub.s32 %v960, %v962
        %v964 = vrot.slane %v279, %v963
        %v965 = vcombine.high %v964, %v964
        %v967 = vunpack.c.l.s4 1983009808
        %v968 = vunpack.c.0.s8 %v967
        %v969 = vlaneseq
        %v970 = vshrl.u32 %v969, 7
        %v971 = vsub.s32 %v968, %v970
        %v972 = vrot.slane %v281, %v971
        %v973 = vcombine.high %v972, %v972
        %v975 = vunpack.c.l.s4 1983009808
        %v976 = vunpack.c.0.s8 %v975
        %v977 = vlaneseq
        %v978 = vshrl.u32 %v977, 7
        %v979 = vsub.s32 %v976, %v978
        %v980 = vrot.slane %v283, %v979
        %v981 = vcombine.high %v980, %v980
        %v983 = vunpack.c.l.s4 1983009808
        %v984 = vunpack.c.0.s8 %v983
        %v985 = vlaneseq
        %v986 = vshrl.u32 %v985, 7
        %v987 = vsub.s32 %v984, %v986
        %v988 = vrot.slane %v285, %v987
        %v989 = vcombine.high %v988, %v988
        %v991 = vunpack.c.l.s4 1983009808
        %v992 = vunpack.c.0.s8 %v991
        %v993 = vlaneseq
        %v994 = vshrl.u32 %v993, 7
        %v995 = vsub.s32 %v992, %v994
        %v996 = vrot.slane %v287, %v995
        %v997 = vcombine.high %v996, %v996
        %v999 = vunpack.c.l.s4 1983009808
        %v1000 = vunpack.c.0.s8 %v999
        %v1001 = vlaneseq
        %v1002 = vshrl.u32 %v1001, 7
        %v1003 = vsub.s32 %v1000, %v1002
        %v1004 = vrot.slane %v289, %v1003
        %v1005 = vcombine.high %v1004, %v1004
        %v1007 = vunpack.c.l.s4 1983009808
        %v1008 = vunpack.c.0.s8 %v1007
        %v1009 = vlaneseq
        %v1010 = vshrl.u32 %v1009, 7
        %v1011 = vsub.s32 %v1008, %v1010
        %v1012 = vrot.slane %v291, %v1011
        %v1013 = vcombine.high %v1012, %v1012
        %v1015 = vunpack.c.l.s4 1983009808
        %v1016 = vunpack.c.0.s8 %v1015
        %v1017 = vlaneseq
        %v1018 = vshrl.u32 %v1017, 7
        %v1019 = vsub.s32 %v1016, %v1018
        %v1020 = vrot.slane %v293, %v1019
        %v1021 = vcombine.high %v1020, %v1020
        %v1023 = vunpack.c.l.s4 1983009808
        %v1024 = vunpack.c.0.s8 %v1023
        %v1025 = vlaneseq
        %v1026 = vshrl.u32 %v1025, 7
        %v1027 = vsub.s32 %v1024, %v1026
        %v1028 = vrot.slane %v295, %v1027
        %v1029 = vcombine.high %v1028, %v1028
        %v1031 = vunpack.c.l.s4 1983009808
        %v1032 = vunpack.c.0.s8 %v1031
        %v1033 = vlaneseq
        %v1034 = vshrl.u32 %v1033, 7
        %v1035 = vsub.s32 %v1032, %v1034
        %v1036 = vrot.slane %v297, %v1035
        %v1037 = vcombine.high %v1036, %v1036
        %v1039 = vunpack.c.l.s4 1983009808
        %v1040 = vunpack.c.0.s8 %v1039
        %v1041 = vlaneseq
        %v1042 = vshrl.u32 %v1041, 7
        %v1043 = vsub.s32 %v1040, %v1042
        %v1044 = vrot.slane %v299, %v1043
        %v1045 = vcombine.high %v1044, %v1044
        %v1047 = vunpack.c.l.s4 1983009808
        %v1048 = vunpack.c.0.s8 %v1047
        %v1049 = vlaneseq
        %v1050 = vshrl.u32 %v1049, 7
        %v1051 = vsub.s32 %v1048, %v1050
        %v1052 = vrot.slane %v301, %v1051
        %v1053 = vcombine.high %v1052, %v1052
        %v1055 = vunpack.c.l.s4 1983009808
        %v1056 = vunpack.c.0.s8 %v1055
        %v1057 = vlaneseq
        %v1058 = vshrl.u32 %v1057, 7
        %v1059 = vsub.s32 %v1056, %v1058
        %v1060 = vrot.slane %v303, %v1059
        %v1061 = vcombine.high %v1060, %v1060
        %s1062 = scalar_lea.vmem %s2, 24
        %v1063 = vld [vmem:[%s1062] sm:$0xf]
        %v1064 = vld [vmem:[%s1062 + $0x4] sm:$0xf]
        %v1065 = vcombine.low %v941, %v949
        %v1066 = vcombine.low %v957, %v965
        %v1068 = vunpack.c.l.s4 1983009808
        %v1069 = vunpack.c.0.s8 %v1068
        %v1070 = vlaneseq
        %v1071 = vshrl.u32 %v1070, 7
        %v1072 = vsub.s32 %v1069, %v1071
        %v1073 = vrot.slane %v1065, %v1072
        %v1075 = vunpack.c.l.s4 1983009808
        %v1076 = vunpack.c.0.s8 %v1075
        %v1077 = vlaneseq
        %v1078 = vshrl.u32 %v1077, 7
        %v1079 = vsub.s32 %v1076, %v1078
        %v1080 = vrot.slane %v1066, %v1079
        %v1081 = vcombine.low %v1073, %v1080
        %v1082 = vcombine.low %v973, %v981
        %v1083 = vcombine.low %v989, %v997
        %v1085 = vunpack.c.l.s4 1983009808
        %v1086 = vunpack.c.0.s8 %v1085
        %v1087 = vlaneseq
        %v1088 = vshrl.u32 %v1087, 7
        %v1089 = vsub.s32 %v1086, %v1088
        %v1090 = vrot.slane %v1082, %v1089
        %v1092 = vunpack.c.l.s4 1983009808
        %v1093 = vunpack.c.0.s8 %v1092
        %v1094 = vlaneseq
        %v1095 = vshrl.u32 %v1094, 7
        %v1096 = vsub.s32 %v1093, %v1095
        %v1097 = vrot.slane %v1083, %v1096
        %v1098 = vcombine.low %v1090, %v1097
        %v1099 = vcombine.low %v1005, %v1013
        %v1100 = vcombine.low %v1021, %v1029
        %v1102 = vunpack.c.l.s4 1983009808
        %v1103 = vunpack.c.0.s8 %v1102
        %v1104 = vlaneseq
        %v1105 = vshrl.u32 %v1104, 7
        %v1106 = vsub.s32 %v1103, %v1105
        %v1107 = vrot.slane %v1099, %v1106
        %v1109 = vunpack.c.l.s4 1983009808
        %v1110 = vunpack.c.0.s8 %v1109
        %v1111 = vlaneseq
        %v1112 = vshrl.u32 %v1111, 7
        %v1113 = vsub.s32 %v1110, %v1112
        %v1114 = vrot.slane %v1100, %v1113
        %v1115 = vcombine.low %v1107, %v1114
        %v1116 = vcombine.low %v1037, %v1045
        %v1117 = vcombine.low %v1053, %v1061
        %v1119 = vunpack.c.l.s4 1983009808
        %v1120 = vunpack.c.0.s8 %v1119
        %v1121 = vlaneseq
        %v1122 = vshrl.u32 %v1121, 7
        %v1123 = vsub.s32 %v1120, %v1122
        %v1124 = vrot.slane %v1116, %v1123
        %v1126 = vunpack.c.l.s4 1983009808
        %v1127 = vunpack.c.0.s8 %v1126
        %v1128 = vlaneseq
        %v1129 = vshrl.u32 %v1128, 7
        %v1130 = vsub.s32 %v1127, %v1129
        %v1131 = vrot.slane %v1117, %v1130
        %v1132 = vcombine.low %v1124, %v1131
        %v1135 = vunpack.c.l.b16 %v1063
        %v1136 = vunpack.c.l.b16 %v1064
        %v1137 = vpack.c.b16 %v1136, %v1135
        %v1140 = vsel %vm527, %v1081, 0
        %v1143 = vsel %vm527, %v1098, 0
        %v1146 = vsel %vm527, %v1115, 0
        %v1149 = vsel %vm527, %v1132, 0
        %1151 = vmatprep.subr.bf16.mxu0 0
        %1152 = vmatpush1.bf16.msra.mxu0 %v1137
        %1153 = vmatprep.subr.bf16.mxu0 0
        %1154 = vmatpush1.bf16.msra.mxu0 0
        %1155 = vmatprep.subr.bf16.mxu0 0
        %1156 = vmatpush1.bf16.msra.mxu0 0
        %1157 = vmatprep.subr.bf16.mxu0 0
        %1158 = vmatpush1.bf16.msra.mxu0 0
        %1159 = vmatprep.subr.bf16.mxu0 0
        %1160 = vmatpush1.bf16.msra.mxu0 0
        %1161 = vmatprep.subr.bf16.mxu0 0
        %1162 = vmatpush1.bf16.msra.mxu0 0
        %1163 = vmatprep.subr.bf16.mxu0 0
        %1164 = vmatpush1.bf16.msra.mxu0 0
        %1165 = vmatprep.subr.bf16.mxu0 0
        %1166 = vmatpush1.bf16.msra.mxu0 0
        %1167 = vmatprep.subr.bf16.mxu0 0
        %1168 = vmatpush1.bf16.msra.mxu0 0
        %1169 = vmatprep.subr.bf16.mxu0 0
        %1170 = vmatpush1.bf16.msra.mxu0 0
        %1171 = vmatprep.subr.bf16.mxu0 0
        %1172 = vmatpush1.bf16.msra.mxu0 0
        %1173 = vmatprep.subr.bf16.mxu0 0
        %1174 = vmatpush1.bf16.msra.mxu0 0
        %1175 = vmatprep.subr.bf16.mxu0 0
        %1176 = vmatpush1.bf16.msra.mxu0 0
        %1177 = vmatprep.subr.bf16.mxu0 0
        %1178 = vmatpush1.bf16.msra.mxu0 0
        %1179 = vmatprep.subr.bf16.mxu0 0
        %1180 = vmatpush1.bf16.msra.mxu0 0
        %1181 = vmatprep.subr.bf16.mxu0 0
        %1182 = vmatpush1.bf16.msra.mxu0 0
        %1183 = vmatprep.mubr.bf16.mxu0 0
        %1184 = vmatmul.mubr.bf16.gmra.mrb[0].mxu0 %v1140
        %v1185 = vpop.f32.mrb[0].mxu0
        %v1186 = vadd.f32 0.0, %v1185
        %v1187 = vpop.f32.mrb[0].mxu0
        %v1188 = vpop.f32.mrb[0].mxu0
        %v1189 = vadd.f32 0.0, %v1188
        %v1190 = vpop.f32.mrb[0].mxu0
        %1191 = vmatprep.mubr.bf16.mxu0 0
        %1192 = vmatmul.mubr.bf16.gmra.mrb[0].mxu0 %v1143
        %v1193 = vpop.f32.mrb[0].mxu0
        %v1194 = vadd.f32 0.0, %v1193
        %v1195 = vpop.f32.mrb[0].mxu0
        %v1196 = vpop.f32.mrb[0].mxu0
        %v1197 = vadd.f32 0.0, %v1196
        %v1198 = vpop.f32.mrb[0].mxu0
        %1199 = vmatprep.mubr.bf16.mxu0 0
        %1200 = vmatmul.mubr.bf16.gmra.mrb[0].mxu0 %v1146
        %v1201 = vpop.f32.mrb[0].mxu0
        %v1202 = vadd.f32 0.0, %v1201
        %v1203 = vpop.f32.mrb[0].mxu0
        %v1204 = vpop.f32.mrb[0].mxu0
        %v1205 = vadd.f32 0.0, %v1204
        %v1206 = vpop.f32.mrb[0].mxu0
        %1207 = vmatprep.mubr.bf16.mxu0 0
        %1208 = vmatmul.mubr.bf16.gmra.mrb[0].mxu0 %v1149
        %v1209 = vpop.f32.mrb[0].mxu0
        %v1210 = vadd.f32 0.0, %v1209
        %v1211 = vpop.f32.mrb[0].mxu0
        %v1212 = vpop.f32.mrb[0].mxu0
        %v1213 = vadd.f32 0.0, %v1212
        %v1214 = vpop.f32.mrb[0].mxu0
        %1215 = vdwg.mxu0
        %v1216 = vadd.f32 %v926, %v1186
        %v1217 = vadd.f32 %v927, %v1189
        %v1218 = vadd.f32 %v928, %v1194
        %v1219 = vadd.f32 %v929, %v1197
        %v1220 = vadd.f32 %v930, %v1202
        %v1221 = vadd.f32 %v931, %v1205
        %v1222 = vadd.f32 %v932, %v1210
        %v1223 = vadd.f32 %v933, %v1213
        %v1224 = vld [vmem:[%s1] sm:$0xf]
        %v1225 = vld [vmem:[%s1 + $0x4] sm:$0xf]
        %v1226 = vld [vmem:[%s1 + $0x8] sm:$0xf]
        %v1227 = vpack.c.bf16 %v1217, %v1216
        %v1228 = vpack.c.bf16 %v1219, %v1218
        %v1229 = vpack.c.bf16 %v1221, %v1220
        %v1230 = vpack.c.bf16 %v1223, %v1222
        %v1234 = vunpack.c.l.b16 %v1224
        %v1235 = vunpack.c.l.b16 %v1225
        %v1236 = vunpack.c.l.b16 %v1226
        %v1237 = vpack.c.b16 %v1235, %v1234
        %v1238 = vpack.c.b16 %v1236, %v1236
        %vm1239 = vcmask 523264
        %v1241 = vsel %vm1239, %v1237, 0
        %v1244 = vsel %vm1239, %v1238, 0
        %1246 = vmatprep.subr.bf16.mxu0 0
        %1247 = vmatpush1.bf16.msra.mxu0 %v1227
        %1248 = vmatprep.subr.bf16.mxu0 0
        %1249 = vmatpush1.bf16.msra.mxu0 %v1228
        %1250 = vmatprep.subr.bf16.mxu0 0
        %1251 = vmatpush1.bf16.msra.mxu0 %v1229
        %1252 = vmatprep.subr.bf16.mxu0 0
        %1253 = vmatpush1.bf16.msra.mxu0 %v1230
        %1254 = vmatprep.subr.bf16.mxu0 0
        %1255 = vmatpush1.bf16.msra.mxu0 0
        %1256 = vmatprep.subr.bf16.mxu0 0
        %1257 = vmatpush1.bf16.msra.mxu0 0
        %1258 = vmatprep.subr.bf16.mxu0 0
        %1259 = vmatpush1.bf16.msra.mxu0 0
        %1260 = vmatprep.subr.bf16.mxu0 0
        %1261 = vmatpush1.bf16.msra.mxu0 0
        %1262 = vmatprep.subr.bf16.mxu0 0
        %1263 = vmatpush1.bf16.msra.mxu0 0
        %1264 = vmatprep.subr.bf16.mxu0 0
        %1265 = vmatpush1.bf16.msra.mxu0 0
        %1266 = vmatprep.subr.bf16.mxu0 0
        %1267 = vmatpush1.bf16.msra.mxu0 0
        %1268 = vmatprep.subr.bf16.mxu0 0
        %1269 = vmatpush1.bf16.msra.mxu0 0
        %1270 = vmatprep.subr.bf16.mxu0 0
        %1271 = vmatpush1.bf16.msra.mxu0 0
        %1272 = vmatprep.subr.bf16.mxu0 0
        %1273 = vmatpush1.bf16.msra.mxu0 0
        %1274 = vmatprep.subr.bf16.mxu0 0
        %1275 = vmatpush1.bf16.msra.mxu0 0
        %1276 = vmatprep.subr.bf16.mxu0 0
        %1277 = vmatpush1.bf16.msra.mxu0 0
        %1278 = vmatprep.mubr.bf16.mxu0 0
        %1279 = vmatmul.mubr.bf16.gmra.mrb[0].mxu0 %v1241
        %v1280 = vpop.f32.mrb[0].mxu0
        %v1281 = vadd.f32 0.0, %v1280
        %v1282 = vpop.f32.mrb[0].mxu0
        %v1283 = vpop.f32.mrb[0].mxu0
        %v1284 = vadd.f32 0.0, %v1283
        %v1285 = vpop.f32.mrb[0].mxu0
        %1286 = vmatprep.mubr.bf16.mxu0 0
        %1287 = vmatmul.mubr.bf16.gmra.mrb[0].mxu0 %v1244
        %v1288 = vpop.f32.mrb[0].mxu0
        %v1289 = vadd.f32 0.0, %v1288
        %v1290 = vpop.f32.mrb[0].mxu0
        %v1291 = vpop.f32.mrb[0].mxu0
        %v1292 = vpop.f32.mrb[0].mxu0
        %1293 = vdwg.mxu0
        %vm1294 = vcmask 195584
        %1295 = vst.msk [vmem:[%s258] sm:$0xff] %vm1294, %v1281
        %1296 = vst.msk [vmem:[%s258 + $0x8] sm:$0xff] %vm1294, %v1284
        %1297 = vst.msk [vmem:[%s258 + $0x10] sm:$0xff] %vm1294, %v1289
        %s1298 = sld [smem:[%s228]]
        %v1299 = vstv %s1298
        %v1300 = vsub.f32 %v1281, %v1299
        %v1301 = vsub.f32 %v1284, %v1299
        %v1302 = vsub.f32 %v1289, %v1299
        %v1303 = vmul.f32 %v1300, 50.0
        %v1304 = vmul.f32 %v1301, 50.0
        %v1305 = vmul.f32 %v1302, 50.0
        %v1306 = vxor.u32 %v1303, 2147483648
        %v1307 = vxor.u32 %v1304, 2147483648
        %v1308 = vxor.u32 %v1305, 2147483648
        %v1309 = vmul.f32 %v1306, 1.442695
        %v1310 = vpow.pop %v1309
        %v1311 = vmul.f32 %v1307, 1.442695
        %v1312 = vpow.pop %v1311
        %v1313 = vmul.f32 %v1308, 1.442695
        %v1314 = vpow.pop %v1313
        %v1315 = vadd.f32 %v1310, 1.0
        %v1316 = vadd.f32 %v1312, 1.0
        %v1317 = vadd.f32 %v1314, 1.0
        %v1318 = vrcp.pop %v1315
        %v1319 = vmul.f32 1.0, %v1318
        %v1320 = vrcp.pop %v1316
        %v1321 = vmul.f32 1.0, %v1320
        %v1322 = vrcp.pop %v1317
        %v1323 = vmul.f32 1.0, %v1322
        %1327 = vrot.lane.b32.xlu0 %v1319, 4
        %v1328 = vpop.permute.xlu0 %1327
        %1329 = vrot.lane.b32.xlu0 %v1321, 4
        %v1330 = vpop.permute.xlu0 %1329
        %1331 = vrot.lane.b32.xlu0 %v1323, 4
        %v1332 = vpop.permute.xlu0 %1331
        %vm1336 = vcmask 31744
        %v1337 = vsel %vm1336, -inf, %v1328
        %v1338 = vsel %vm1336, -inf, %v1330
        %v1339 = vsel %vm1336, -inf, %v1332
        %vm1340 = vcmask 228352
        %v1341 = vsel %vm1340, %v1337, -inf
        %v1342 = vsel %vm1340, %v1338, -inf
        %v1343 = vsel %vm1340, %v1339, -inf
        %1347 = vrot.lane.b32.xlu0 %v1341, 127
        %v1348 = vpop.permute.xlu0 %1347
        %1349 = vrot.lane.b32.xlu0 %v1342, 127
        %v1350 = vpop.permute.xlu0 %1349
        %1351 = vrot.lane.b32.xlu0 %v1343, 127
        %v1352 = vpop.permute.xlu0 %1351
        %v1356 = vmax.f32 %v1341, %v1348
        %v1357 = vmax.f32 %v1342, %v1350
        %v1358 = vmax.f32 %v1343, %v1352
        %1362 = vrot.lane.b32.xlu0 %v1356, 126
        %v1363 = vpop.permute.xlu0 %1362
        %1364 = vrot.lane.b32.xlu0 %v1357, 126
        %v1365 = vpop.permute.xlu0 %1364
        %1366 = vrot.lane.b32.xlu0 %v1358, 126
        %v1367 = vpop.permute.xlu0 %1366
        %v1371 = vmax.f32 %v1356, %v1363
        %v1372 = vmax.f32 %v1357, %v1365
        %v1373 = vmax.f32 %v1358, %v1367
        %1377 = vrot.lane.b32.xlu0 %v1371, 124
        %v1378 = vpop.permute.xlu0 %1377
        %1379 = vrot.lane.b32.xlu0 %v1372, 124
        %v1380 = vpop.permute.xlu0 %1379
        %1381 = vrot.lane.b32.xlu0 %v1373, 124
        %v1382 = vpop.permute.xlu0 %1381
        %v1386 = vmax.f32 %v1371, %v1378
        %v1387 = vmax.f32 %v1372, %v1380
        %v1388 = vmax.f32 %v1373, %v1382
        %1389 = vrot.lane.b32.xlu0 %v1341, 120
        %v1390 = vpop.permute.xlu0 %1389
        %1391 = vrot.lane.b32.xlu0 %v1342, 120
        %v1392 = vpop.permute.xlu0 %1391
        %1393 = vrot.lane.b32.xlu0 %v1343, 120
        %v1394 = vpop.permute.xlu0 %1393
        %v1398 = vmax.f32 %v1386, %v1390
        %v1399 = vmax.f32 %v1387, %v1392
        %v1400 = vmax.f32 %v1388, %v1394
        %vm1404 = vcmask 1043456
        %v1405 = vrot.slane %v1398, 4
        %v1406 = vrot.slane %v1399, 4
        %v1407 = vsel %vm1404, %v1405, %v1406
        %v1408 = vrot.slane %v1400, 4
        %v1409 = vsel %vm1404, %v1406, %v1408
        %v1414 = vsel %vm1404, -inf, %v1405
        %v1415 = vsel %vm1404, %v1408, -inf
        %vm1418 = vcmask 1046528
        %v1419 = vrot.slane %v1414, 1
        %v1420 = vrot.slane %v1407, 1
        %v1421 = vsel %vm1418, %v1419, %v1420
        %v1422 = vrot.slane %v1409, 1
        %v1423 = vsel %vm1418, %v1420, %v1422
        %v1424 = vrot.slane %v1415, 1
        %v1425 = vsel %vm1418, %v1422, %v1424
        %v1430 = vmax.f32 %v1414, %v1421
        %v1431 = vmax.f32 %v1407, %v1423
        %v1432 = vmax.f32 %v1409, %v1425
        %v1433 = vmax.f32 %v1415, %v1424
        %vm1438 = vcmask 1045504
        %v1439 = vrot.slane %v1430, 2
        %v1440 = vrot.slane %v1431, 2
        %v1441 = vsel %vm1438, %v1439, %v1440
        %v1442 = vrot.slane %v1432, 2
        %v1443 = vsel %vm1438, %v1440, %v1442
        %v1444 = vrot.slane %v1433, 2
        %v1445 = vsel %vm1438, %v1442, %v1444
        %v1450 = vmax.f32 %v1430, %v1441
        %v1451 = vmax.f32 %v1431, %v1443
        %v1452 = vmax.f32 %v1432, %v1445
        %v1453 = vmax.f32 %v1433, %v1444
        %v1458 = vrot.slane %v1450, 4
        %v1459 = vrot.slane %v1451, 4
        %v1460 = vsel %vm1404, %v1458, %v1459
        %v1461 = vrot.slane %v1452, 4
        %v1462 = vsel %vm1404, %v1459, %v1461
        %v1463 = vrot.slane %v1453, 4
        %v1464 = vsel %vm1404, %v1461, %v1463
        %v1468 = vmax.f32 %v1450, %v1460
        %v1469 = vmax.f32 %v1451, %v1462
        %v1470 = vmax.f32 %v1452, %v1464
        %v1471 = vmax.f32 %v1468, %v1407
        %v1472 = vmax.f32 %v1469, %v1409
        %v1473 = vmax.f32 %v1470, %v1415
        %1474 = vst.msk [vmem:[%s265] sm:$0xff] %vm1294, %v1471
        %1475 = vst.msk [vmem:[%s265 + $0x8] sm:$0xff] %vm1294, %v1472
        %1476 = vst.msk [vmem:[%s265 + $0x10] sm:$0xff] %vm1294, %v1473
        %s1477 = sand.u32 %s128, 1
        %s1478 = scalar_lea.sflag [#allocation3], %s1477
        %s1479 = sand.u32 %s128, 1
        %s1480 = smul.addr %s1479, 24
        %s1481 = scalar_lea.vmem [#allocation5], %s1480
        %s1482 = sand.u32 %s154, 1
        %s1483 = scalar_lea.sflag [#allocation7], %s1482
        %s1484 = sand.u32 %s154, 1
        %s1485 = smul.addr %s1484, 24
        %s1486 = scalar_lea.vmem [#allocation6], %s1485
        // Predicated region
        $region41: #{db_head_forward.3} parent=35 // pred_check
          %p1487 = pneg %p138
        $region42: #{db_head_forward.3} parent=35 // pred_check_branch
          %1489 = sbr.rel (%p1487) target = $region44
        $region43: #{db_head_forward.3} parent=35 // pred_region
          %s1491 = ssub.s32 384, 384
          %1492 = vsyncadd %s1478, %s1491
          %s1493 = smul.addr %s26, 3
          %s1494 = smul.addr %s1493, 128
          %s1495 = scalar_lea.hbm %s4, %s1494
          %s1496 = sshll.u32 %s1481, 4
          %s1497 = int_to_ptr.vmem [resolvable:$true] %s1496
          %1502 = dma.vmem_to_hbm [thread:$0]  %s1497, 384, %s1495, %s1478, 128, 128, 8
        $region44: #{db_head_forward.3} parent=35 // pred_fallthru
          _
        // Predicated region
        $region45: #{db_head_forward.3} parent=35 // pred_check
          %p1503 = pneg %p164
        $region46: #{db_head_forward.3} parent=35 // pred_check_branch
          %1505 = sbr.rel (%p1503) target = $region48
        $region47: #{db_head_forward.3} parent=35 // pred_region
          %s1507 = ssub.s32 384, 384
          %1508 = vsyncadd %s1483, %s1507
          %s1509 = smul.addr %s26, 3
          %s1510 = smul.addr %s1509, 128
          %s1511 = scalar_lea.hbm %s5, %s1510
          %s1512 = sshll.u32 %s1486, 4
          %s1513 = int_to_ptr.vmem [resolvable:$true] %s1512
          %1518 = dma.vmem_to_hbm [thread:$0]  %s1513, 384, %s1511, %s1483, 128, 128, 8
        $region48: #{db_head_forward.3} parent=35 // pred_fallthru
          _
      $region36: #{db_head_forward.3} parent=5 // pred_fallthru
        _
      %p1519 = scmp.le.s32.totalorder 2, %s21
      // Predicated region
      $region49: #{db_head_forward.3} parent=5 // pred_check
        %p1520 = pneg %p1519
      $region50: #{db_head_forward.3} parent=5 // pred_check_branch
        %1522 = sbr.rel (%p1520) target = $region52
      $region51: #{db_head_forward.3} parent=5 // pred_region
        %s1523 = ssub.s32 %s21, 2
        // Predicated region
        $region53: #{db_head_forward.3} parent=51 // pred_check
          %p1524 = pneg %p144
        $region54: #{db_head_forward.3} parent=51 // pred_check_branch
          %1526 = sbr.rel (%p1524) target = $region56
        $region55: #{db_head_forward.3} parent=51 // pred_region
          %s1527 = sand.u32 %s129, 1
          %s1528 = scalar_lea.sflag [#allocation3], %s1527
          %s1529 = sand.u32 %s129, 1
          %s1530 = smul.addr %s1529, 24
          %s1531 = scalar_lea.vmem [#allocation5], %s1530
          %1532 = dma.done %s1528, 384
        $region56: #{db_head_forward.3} parent=51 // pred_fallthru
          _
        // Predicated region
        $region57: #{db_head_forward.3} parent=51 // pred_check
          %p1533 = pneg %p170
        $region58: #{db_head_forward.3} parent=51 // pred_check_branch
          %1535 = sbr.rel (%p1533) target = $region60
        $region59: #{db_head_forward.3} parent=51 // pred_region
          %s1536 = sand.u32 %s155, 1
          %s1537 = scalar_lea.sflag [#allocation7], %s1536
          %s1538 = sand.u32 %s155, 1
          %s1539 = smul.addr %s1538, 24
          %s1540 = scalar_lea.vmem [#allocation6], %s1539
          %1541 = dma.done %s1537, 384
        $region60: #{db_head_forward.3} parent=51 // pred_fallthru
          _
      $region52: #{db_head_forward.3} parent=5 // pred_fallthru
        _
    $region6: #{db_head_forward.3} parent=1 // loop_footer
      %s25 = sadd.s32 1, %s21
    $region7: #{db_head_forward.3} parent=1 // loop_footer_branch
      %20 = sbr.rel target = $region3
    $region8: #{db_head_forward.3} parent=1 // loop_exit
      _
    %1542 = vsyncpa [#allocation3], 1
    %s1543 = scalar_lea.sflag [#allocation3], 1
    %1544 = vsyncpa %s1543, 1
    %1545 = vsyncpa [#allocation7], 1
    %s1546 = scalar_lea.sflag [#allocation7], 1
    %1547 = vsyncpa %s1546, 1
    %1548 = vsyncpa [#allocation4], 1
    %s1549 = scalar_lea.sflag [#allocation4], 1
    %1550 = vsyncpa %s1549, 1

// kernel: db_head_forward.2
$region0: #{db_head_forward.2}
  #allocation0 [shape = 'u32[]', space=smem, size = 0x4, offset = 0x4, fixed_abs, tag = 'smem constant byte address 0x4 - core index']
  #allocation1 [shape = 'u32[144,128]{1,0:T(1,128)}', space=vmem, size = 0x12000, scoped, tag = 'internal scratch']
  %s0 = inlined_call_operand.vmem [shape: bf16[2,18,18,16], index: 0, kind: input, shape index: {}, may-alias: {0,1}]
  %s1 = inlined_call_operand.vmem [shape: bf16[2,18,18,16], index: 1, kind: input, shape index: {}, may-alias: {0,1}]
  %s2 = inlined_call_operand.vmem [shape: bf16[144,8], index: 2, kind: input, shape index: {}]
  %s3 = inlined_call_operand.vmem [shape: f32[1,8], index: 3, kind: input, shape index: {}]
  %s4 = inlined_call_operand.vmem [shape: f32[1,8], index: 4, kind: input, shape index: {}]
  %s5 = inlined_call_operand.vmem [shape: bf16[4,16], index: 5, kind: input, shape index: {}]
  %s6 = inlined_call_operand.vmem [shape: f32[1,16], index: 6, kind: input, shape index: {}]
  %s7 = inlined_call_operand.vmem [shape: f32[1,16], index: 7, kind: input, shape index: {}]
  %s8 = inlined_call_operand.vmem [shape: bf16[4,16], index: 8, kind: input, shape index: {}]
  %s9 = inlined_call_operand.vmem [shape: f32[1,16], index: 9, kind: input, shape index: {}]
  %s10 = inlined_call_operand.vmem [shape: f32[1,16], index: 10, kind: input, shape index: {}]
  %s11 = inlined_call_operand.vmem [shape: bf16[16,16], index: 11, kind: input, shape index: {}]
  %s12 = inlined_call_operand.vmem [shape: f32[1,16], index: 12, kind: input, shape index: {}]
  %s13 = inlined_call_operand.vmem [shape: f32[1,16], index: 13, kind: input, shape index: {}]
  %s14 = inlined_call_operand.vmem [shape: bf16[2,16,16,16], index: 14, kind: output, shape index: {0}]
  %s15 = inlined_call_operand.vmem [shape: f32[2,2,1,1], index: 15, kind: output, shape index: {1}]
  %16 = xla_tuple %s14, %s15
  %s17 = sld [smem:[#allocation0]]
  $region97: #{db_head_forward.2} parent=0
    _
  %s19 = ssub.s32 1, %s17
  %s20 = scalar_select 0, %s19, %s17
  loop: start=0, step=1, limit=6
  $region2: #{db_head_forward.2} parent=0 // loop_pre_header
    _
  $region3: #{db_head_forward.2} parent=0 // loop_header
    %s22 = sphi 0, %s26
    %p23 = scmp.ge.s32.totalorder %s22, 6
    %s29 = sphi 0, %s41
    %s30 = sphi 0, %s37
    %s31 = sphi 0, %s29
    %s32 = sphi 0, %s30
    %s33 = sphi 0, %s31
    %s34 = sphi 0, %s32
    %s46 = sphi 0, %s48
    %s49 = sphi 0, %s46
    %s50 = sphi 0, %s49
    %s66 = sphi 0, %s50
    %s78 = sphi 0, %s80
    %s81 = sphi 0, %s78
    %s82 = sphi 0, %s81
    %s98 = sphi 0, %s82
    %s102 = sphi 0, %s102
    %s104 = sphi 0, %s102
    %s105 = sphi 0, %s104
    %s119 = sphi 0, %s105
    %s123 = sphi 0, %s123
    %s125 = sphi 0, %s123
    %s126 = sphi 0, %s125
    %s140 = sphi 0, %s126
    %s144 = sphi 0, %s144
    %s146 = sphi 0, %s144
    %s147 = sphi 0, %s146
    %s161 = sphi 0, %s147
    %s165 = sphi 0, %s165
    %s167 = sphi 0, %s165
    %s168 = sphi 0, %s167
    %s182 = sphi 0, %s168
    %s186 = sphi 0, %s186
    %s188 = sphi 0, %s186
    %s189 = sphi 0, %s188
    %s203 = sphi 0, %s189
    %s207 = sphi 0, %s207
    %s209 = sphi 0, %s207
    %s210 = sphi 0, %s209
    %s224 = sphi 0, %s210
    %s228 = sphi 0, %s228
    %s230 = sphi 0, %s228
    %s231 = sphi 0, %s230
    %s245 = sphi 0, %s231
    %s249 = sphi 0, %s249
    %s251 = sphi 0, %s249
    %s252 = sphi 0, %s251
    %s266 = sphi 0, %s252
    %s270 = sphi 0, %s270
    %s272 = sphi 0, %s270
    %s273 = sphi 0, %s272
    %s287 = sphi 0, %s273
    %s291 = sphi 0, %s291
    %s293 = sphi 0, %s291
    %s294 = sphi 0, %s293
    %s308 = sphi 0, %s294
    %s312 = sphi 0, %s312
    %s314 = sphi 0, %s312
    %s315 = sphi 0, %s314
    %s329 = sphi 0, %s315
    %s333 = sphi 0, %s333
    %s335 = sphi 0, %s333
    %s336 = sphi 0, %s335
    %s350 = sphi 0, %s336
    %s358 = sphi 0, %s360
    %s361 = sphi 0, %s358
    %s362 = sphi 0, %s361
    %s378 = sphi 0, %s362
    %s386 = sphi 0, %s388
    %s389 = sphi 0, %s386
    %s390 = sphi 0, %s389
    %s406 = sphi 0, %s390
  $region4: #{db_head_forward.2} parent=0 // loop_header_branch
    %25 = sbr.rel (%p23) target = $region8
  $region5: #{db_head_forward.2} parent=0 // loop_body
    %s27 = ssub.s32 %s22, 1
    %s28 = ssub.s32 %s22, 2
    %s35 = sadd.s32 1, %s30
    %p36 = scmp.ge.s32.totalorder %s35, 2
    %s37 = scalar_select %p36, 0, %s35
    %s38 = sadd.s32 1, %s29
    %s39 = scalar_select %p36, %s38, %s29
    %p40 = scmp.ge.s32.totalorder %s39, 2
    %s41 = scalar_select %p40, 0, %s39
    %s42 = ssub.s32 %s29, %s41
    %s43 = ssub.s32 %s30, %s37
    %s44 = sor.u32 %s42, %s43
    %p45 = scmp.eq.s32.totalorder %s44, 0
    %s47 = sadd.s32 %s46, 1
    %s48 = scalar_select %p45, %s46, %s47
    %p51 = pneg %p45
    %p52 = scmp.eq.s32.totalorder %s22, 3
    %p53 = por %p51, %p52
    %p54 = scmp.ne.s32.totalorder %s46, %s49
    %p55 = scmp.eq.s32.totalorder %s22, 0
    %p56 = por %p54, %p55
    %p57 = scmp.ne.s32.totalorder %s46, %s49
    %p58 = scmp.eq.s32.totalorder %s27, 3
    %p59 = por %p57, %p58
    %p60 = scmp.ne.s32.totalorder %s49, %s50
    %p61 = scmp.eq.s32.totalorder %s27, 0
    %p62 = por %p60, %p61
    %p63 = scmp.ne.s32.totalorder %s49, %s50
    %p64 = scmp.eq.s32.totalorder %s28, 3
    %p65 = por %p63, %p64
    %p67 = scmp.ne.s32.totalorder %s50, %s66
    %p68 = scmp.eq.s32.totalorder %s28, 0
    %p69 = por %p67, %p68
    %s70 = sadd.s32 %s30, 1
    %s71 = smul.u32 %s70, 4
    %s72 = sadd.s32 %s37, 1
    %s73 = smul.u32 %s72, 4
    %s74 = ssub.s32 %s29, %s41
    %s75 = ssub.s32 %s71, %s73
    %s76 = sor.u32 %s74, %s75
    %p77 = scmp.eq.s32.totalorder %s76, 0
    %s79 = sadd.s32 %s78, 1
    %s80 = scalar_select %p77, %s78, %s79
    %p83 = pneg %p77
    %p84 = scmp.eq.s32.totalorder %s22, 3
    %p85 = por %p83, %p84
    %p86 = scmp.ne.s32.totalorder %s78, %s81
    %p87 = scmp.eq.s32.totalorder %s22, 0
    %p88 = por %p86, %p87
    %p89 = scmp.ne.s32.totalorder %s78, %s81
    %p90 = scmp.eq.s32.totalorder %s27, 3
    %p91 = por %p89, %p90
    %p92 = scmp.ne.s32.totalorder %s81, %s82
    %p93 = scmp.eq.s32.totalorder %s27, 0
    %p94 = por %p92, %p93
    %p95 = scmp.ne.s32.totalorder %s81, %s82
    %p96 = scmp.eq.s32.totalorder %s28, 3
    %p97 = por %p95, %p96
    %p99 = scmp.ne.s32.totalorder %s82, %s98
    %p100 = scmp.eq.s32.totalorder %s28, 0
    %p101 = por %p99, %p100
    %s103 = sadd.s32 %s102, 1
    %p106 = scmp.eq.s32.totalorder %s22, 3
    %p107 = scmp.ne.s32.totalorder %s102, %s104
    %p108 = scmp.eq.s32.totalorder %s22, 0
    %p109 = por %p107, %p108
    %p110 = scmp.ne.s32.totalorder %s102, %s104
    %p111 = scmp.eq.s32.totalorder %s27, 3
    %p112 = por %p110, %p111
    %p113 = scmp.ne.s32.totalorder %s104, %s105
    %p114 = scmp.eq.s32.totalorder %s27, 0
    %p115 = por %p113, %p114
    %p116 = scmp.ne.s32.totalorder %s104, %s105
    %p117 = scmp.eq.s32.totalorder %s28, 3
    %p118 = por %p116, %p117
    %p120 = scmp.ne.s32.totalorder %s105, %s119
    %p121 = scmp.eq.s32.totalorder %s28, 0
    %p122 = por %p120, %p121
    %s124 = sadd.s32 %s123, 1
    %p127 = scmp.eq.s32.totalorder %s22, 3
    %p128 = scmp.ne.s32.totalorder %s123, %s125
    %p129 = scmp.eq.s32.totalorder %s22, 0
    %p130 = por %p128, %p129
    %p131 = scmp.ne.s32.totalorder %s123, %s125
    %p132 = scmp.eq.s32.totalorder %s27, 3
    %p133 = por %p131, %p132
    %p134 = scmp.ne.s32.totalorder %s125, %s126
    %p135 = scmp.eq.s32.totalorder %s27, 0
    %p136 = por %p134, %p135
    %p137 = scmp.ne.s32.totalorder %s125, %s126
    %p138 = scmp.eq.s32.totalorder %s28, 3
    %p139 = por %p137, %p138
    %p141 = scmp.ne.s32.totalorder %s126, %s140
    %p142 = scmp.eq.s32.totalorder %s28, 0
    %p143 = por %p141, %p142
    %s145 = sadd.s32 %s144, 1
    %p148 = scmp.eq.s32.totalorder %s22, 3
    %p149 = scmp.ne.s32.totalorder %s144, %s146
    %p150 = scmp.eq.s32.totalorder %s22, 0
    %p151 = por %p149, %p150
    %p152 = scmp.ne.s32.totalorder %s144, %s146
    %p153 = scmp.eq.s32.totalorder %s27, 3
    %p154 = por %p152, %p153
    %p155 = scmp.ne.s32.totalorder %s146, %s147
    %p156 = scmp.eq.s32.totalorder %s27, 0
    %p157 = por %p155, %p156
    %p158 = scmp.ne.s32.totalorder %s146, %s147
    %p159 = scmp.eq.s32.totalorder %s28, 3
    %p160 = por %p158, %p159
    %p162 = scmp.ne.s32.totalorder %s147, %s161
    %p163 = scmp.eq.s32.totalorder %s28, 0
    %p164 = por %p162, %p163
    %s166 = sadd.s32 %s165, 1
    %p169 = scmp.eq.s32.totalorder %s22, 3
    %p170 = scmp.ne.s32.totalorder %s165, %s167
    %p171 = scmp.eq.s32.totalorder %s22, 0
    %p172 = por %p170, %p171
    %p173 = scmp.ne.s32.totalorder %s165, %s167
    %p174 = scmp.eq.s32.totalorder %s27, 3
    %p175 = por %p173, %p174
    %p176 = scmp.ne.s32.totalorder %s167, %s168
    %p177 = scmp.eq.s32.totalorder %s27, 0
    %p178 = por %p176, %p177
    %p179 = scmp.ne.s32.totalorder %s167, %s168
    %p180 = scmp.eq.s32.totalorder %s28, 3
    %p181 = por %p179, %p180
    %p183 = scmp.ne.s32.totalorder %s168, %s182
    %p184 = scmp.eq.s32.totalorder %s28, 0
    %p185 = por %p183, %p184
    %s187 = sadd.s32 %s186, 1
    %p190 = scmp.eq.s32.totalorder %s22, 3
    %p191 = scmp.ne.s32.totalorder %s186, %s188
    %p192 = scmp.eq.s32.totalorder %s22, 0
    %p193 = por %p191, %p192
    %p194 = scmp.ne.s32.totalorder %s186, %s188
    %p195 = scmp.eq.s32.totalorder %s27, 3
    %p196 = por %p194, %p195
    %p197 = scmp.ne.s32.totalorder %s188, %s189
    %p198 = scmp.eq.s32.totalorder %s27, 0
    %p199 = por %p197, %p198
    %p200 = scmp.ne.s32.totalorder %s188, %s189
    %p201 = scmp.eq.s32.totalorder %s28, 3
    %p202 = por %p200, %p201
    %p204 = scmp.ne.s32.totalorder %s189, %s203
    %p205 = scmp.eq.s32.totalorder %s28, 0
    %p206 = por %p204, %p205
    %s208 = sadd.s32 %s207, 1
    %p211 = scmp.eq.s32.totalorder %s22, 3
    %p212 = scmp.ne.s32.totalorder %s207, %s209
    %p213 = scmp.eq.s32.totalorder %s22, 0
    %p214 = por %p212, %p213
    %p215 = scmp.ne.s32.totalorder %s207, %s209
    %p216 = scmp.eq.s32.totalorder %s27, 3
    %p217 = por %p215, %p216
    %p218 = scmp.ne.s32.totalorder %s209, %s210
    %p219 = scmp.eq.s32.totalorder %s27, 0
    %p220 = por %p218, %p219
    %p221 = scmp.ne.s32.totalorder %s209, %s210
    %p222 = scmp.eq.s32.totalorder %s28, 3
    %p223 = por %p221, %p222
    %p225 = scmp.ne.s32.totalorder %s210, %s224
    %p226 = scmp.eq.s32.totalorder %s28, 0
    %p227 = por %p225, %p226
    %s229 = sadd.s32 %s228, 1
    %p232 = scmp.eq.s32.totalorder %s22, 3
    %p233 = scmp.ne.s32.totalorder %s228, %s230
    %p234 = scmp.eq.s32.totalorder %s22, 0
    %p235 = por %p233, %p234
    %p236 = scmp.ne.s32.totalorder %s228, %s230
    %p237 = scmp.eq.s32.totalorder %s27, 3
    %p238 = por %p236, %p237
    %p239 = scmp.ne.s32.totalorder %s230, %s231
    %p240 = scmp.eq.s32.totalorder %s27, 0
    %p241 = por %p239, %p240
    %p242 = scmp.ne.s32.totalorder %s230, %s231
    %p243 = scmp.eq.s32.totalorder %s28, 3
    %p244 = por %p242, %p243
    %p246 = scmp.ne.s32.totalorder %s231, %s245
    %p247 = scmp.eq.s32.totalorder %s28, 0
    %p248 = por %p246, %p247
    %s250 = sadd.s32 %s249, 1
    %p253 = scmp.eq.s32.totalorder %s22, 3
    %p254 = scmp.ne.s32.totalorder %s249, %s251
    %p255 = scmp.eq.s32.totalorder %s22, 0
    %p256 = por %p254, %p255
    %p257 = scmp.ne.s32.totalorder %s249, %s251
    %p258 = scmp.eq.s32.totalorder %s27, 3
    %p259 = por %p257, %p258
    %p260 = scmp.ne.s32.totalorder %s251, %s252
    %p261 = scmp.eq.s32.totalorder %s27, 0
    %p262 = por %p260, %p261
    %p263 = scmp.ne.s32.totalorder %s251, %s252
    %p264 = scmp.eq.s32.totalorder %s28, 3
    %p265 = por %p263, %p264
    %p267 = scmp.ne.s32.totalorder %s252, %s266
    %p268 = scmp.eq.s32.totalorder %s28, 0
    %p269 = por %p267, %p268
    %s271 = sadd.s32 %s270, 1
    %p274 = scmp.eq.s32.totalorder %s22, 3
    %p275 = scmp.ne.s32.totalorder %s270, %s272
    %p276 = scmp.eq.s32.totalorder %s22, 0
    %p277 = por %p275, %p276
    %p278 = scmp.ne.s32.totalorder %s270, %s272
    %p279 = scmp.eq.s32.totalorder %s27, 3
    %p280 = por %p278, %p279
    %p281 = scmp.ne.s32.totalorder %s272, %s273
    %p282 = scmp.eq.s32.totalorder %s27, 0
    %p283 = por %p281, %p282
    %p284 = scmp.ne.s32.totalorder %s272, %s273
    %p285 = scmp.eq.s32.totalorder %s28, 3
    %p286 = por %p284, %p285
    %p288 = scmp.ne.s32.totalorder %s273, %s287
    %p289 = scmp.eq.s32.totalorder %s28, 0
    %p290 = por %p288, %p289
    %s292 = sadd.s32 %s291, 1
    %p295 = scmp.eq.s32.totalorder %s22, 3
    %p296 = scmp.ne.s32.totalorder %s291, %s293
    %p297 = scmp.eq.s32.totalorder %s22, 0
    %p298 = por %p296, %p297
    %p299 = scmp.ne.s32.totalorder %s291, %s293
    %p300 = scmp.eq.s32.totalorder %s27, 3
    %p301 = por %p299, %p300
    %p302 = scmp.ne.s32.totalorder %s293, %s294
    %p303 = scmp.eq.s32.totalorder %s27, 0
    %p304 = por %p302, %p303
    %p305 = scmp.ne.s32.totalorder %s293, %s294
    %p306 = scmp.eq.s32.totalorder %s28, 3
    %p307 = por %p305, %p306
    %p309 = scmp.ne.s32.totalorder %s294, %s308
    %p310 = scmp.eq.s32.totalorder %s28, 0
    %p311 = por %p309, %p310
    %s313 = sadd.s32 %s312, 1
    %p316 = scmp.eq.s32.totalorder %s22, 3
    %p317 = scmp.ne.s32.totalorder %s312, %s314
    %p318 = scmp.eq.s32.totalorder %s22, 0
    %p319 = por %p317, %p318
    %p320 = scmp.ne.s32.totalorder %s312, %s314
    %p321 = scmp.eq.s32.totalorder %s27, 3
    %p322 = por %p320, %p321
    %p323 = scmp.ne.s32.totalorder %s314, %s315
    %p324 = scmp.eq.s32.totalorder %s27, 0
    %p325 = por %p323, %p324
    %p326 = scmp.ne.s32.totalorder %s314, %s315
    %p327 = scmp.eq.s32.totalorder %s28, 3
    %p328 = por %p326, %p327
    %p330 = scmp.ne.s32.totalorder %s315, %s329
    %p331 = scmp.eq.s32.totalorder %s28, 0
    %p332 = por %p330, %p331
    %s334 = sadd.s32 %s333, 1
    %p337 = scmp.eq.s32.totalorder %s22, 3
    %p338 = scmp.ne.s32.totalorder %s333, %s335
    %p339 = scmp.eq.s32.totalorder %s22, 0
    %p340 = por %p338, %p339
    %p341 = scmp.ne.s32.totalorder %s333, %s335
    %p342 = scmp.eq.s32.totalorder %s27, 3
    %p343 = por %p341, %p342
    %p344 = scmp.ne.s32.totalorder %s335, %s336
    %p345 = scmp.eq.s32.totalorder %s27, 0
    %p346 = por %p344, %p345
    %p347 = scmp.ne.s32.totalorder %s335, %s336
    %p348 = scmp.eq.s32.totalorder %s28, 3
    %p349 = por %p347, %p348
    %p351 = scmp.ne.s32.totalorder %s336, %s350
    %p352 = scmp.eq.s32.totalorder %s28, 0
    %p353 = por %p351, %p352
    %s354 = ssub.s32 %s29, %s41
    %s355 = ssub.s32 %s30, %s37
    %s356 = sor.u32 %s354, %s355
    %p357 = scmp.eq.s32.totalorder %s356, 0
    %s359 = sadd.s32 %s358, 1
    %s360 = scalar_select %p357, %s358, %s359
    %p363 = pneg %p357
    %p364 = scmp.eq.s32.totalorder %s22, 3
    %p365 = por %p363, %p364
    %p366 = scmp.ne.s32.totalorder %s358, %s361
    %p367 = scmp.eq.s32.totalorder %s22, 0
    %p368 = por %p366, %p367
    %p369 = scmp.ne.s32.totalorder %s358, %s361
    %p370 = scmp.eq.s32.totalorder %s27, 3
    %p371 = por %p369, %p370
    %p372 = scmp.ne.s32.totalorder %s361, %s362
    %p373 = scmp.eq.s32.totalorder %s27, 0
    %p374 = por %p372, %p373
    %p375 = scmp.ne.s32.totalorder %s361, %s362
    %p376 = scmp.eq.s32.totalorder %s28, 3
    %p377 = por %p375, %p376
    %p379 = scmp.ne.s32.totalorder %s362, %s378
    %p380 = scmp.eq.s32.totalorder %s28, 0
    %p381 = por %p379, %p380
    %s382 = ssub.s32 %s29, %s41
    %s383 = ssub.s32 %s30, %s37
    %s384 = sor.u32 %s382, %s383
    %p385 = scmp.eq.s32.totalorder %s384, 0
    %s387 = sadd.s32 %s386, 1
    %s388 = scalar_select %p385, %s386, %s387
    %p391 = pneg %p385
    %p392 = scmp.eq.s32.totalorder %s22, 3
    %p393 = por %p391, %p392
    %p394 = scmp.ne.s32.totalorder %s386, %s389
    %p395 = scmp.eq.s32.totalorder %s22, 0
    %p396 = por %p394, %p395
    %p397 = scmp.ne.s32.totalorder %s386, %s389
    %p398 = scmp.eq.s32.totalorder %s27, 3
    %p399 = por %p397, %p398
    %p400 = scmp.ne.s32.totalorder %s389, %s390
    %p401 = scmp.eq.s32.totalorder %s27, 0
    %p402 = por %p400, %p401
    %p403 = scmp.ne.s32.totalorder %s389, %s390
    %p404 = scmp.eq.s32.totalorder %s28, 3
    %p405 = por %p403, %p404
    %p407 = scmp.ne.s32.totalorder %s390, %s406
    %p408 = scmp.eq.s32.totalorder %s28, 0
    %p409 = por %p407, %p408
    %p410 = scmp.le.s32.totalorder 1, %s22
    %p411 = scmp.lt.s32.totalorder %s22, 5
    %p412 = pnand %p410, %p411
    %p413 = pneg %p412
    // Predicated region
    $region9: #{db_head_forward.2} parent=5 // pred_check
      _
    $region10: #{db_head_forward.2} parent=5 // pred_check_branch
      %415 = sbr.rel (%p412) target = $region12
    $region11: #{db_head_forward.2} parent=5 // pred_region
      %s416 = ssub.s32 %s22, 1
      // Predicated region
      $region13: #{db_head_forward.2} parent=11 // pred_check
        %p417 = pneg %p115
      $region14: #{db_head_forward.2} parent=11 // pred_check_branch
        %419 = sbr.rel (%p417) target = $region16
      $region15: #{db_head_forward.2} parent=11 // pred_region
        _
      $region16: #{db_head_forward.2} parent=11 // pred_fallthru
        _
      // Predicated region
      $region17: #{db_head_forward.2} parent=11 // pred_check
        %p420 = pneg %p136
      $region18: #{db_head_forward.2} parent=11 // pred_check_branch
        %422 = sbr.rel (%p420) target = $region20
      $region19: #{db_head_forward.2} parent=11 // pred_region
        _
      $region20: #{db_head_forward.2} parent=11 // pred_fallthru
        _
      // Predicated region
      $region21: #{db_head_forward.2} parent=11 // pred_check
        %p423 = pneg %p157
      $region22: #{db_head_forward.2} parent=11 // pred_check_branch
        %425 = sbr.rel (%p423) target = $region24
      $region23: #{db_head_forward.2} parent=11 // pred_region
        _
      $region24: #{db_head_forward.2} parent=11 // pred_fallthru
        _
      // Predicated region
      $region25: #{db_head_forward.2} parent=11 // pred_check
        %p426 = pneg %p178
      $region26: #{db_head_forward.2} parent=11 // pred_check_branch
        %428 = sbr.rel (%p426) target = $region28
      $region27: #{db_head_forward.2} parent=11 // pred_region
        _
      $region28: #{db_head_forward.2} parent=11 // pred_fallthru
        _
      // Predicated region
      $region29: #{db_head_forward.2} parent=11 // pred_check
        %p429 = pneg %p199
      $region30: #{db_head_forward.2} parent=11 // pred_check_branch
        %431 = sbr.rel (%p429) target = $region32
      $region31: #{db_head_forward.2} parent=11 // pred_region
        _
      $region32: #{db_head_forward.2} parent=11 // pred_fallthru
        _
      // Predicated region
      $region33: #{db_head_forward.2} parent=11 // pred_check
        %p432 = pneg %p220
      $region34: #{db_head_forward.2} parent=11 // pred_check_branch
        %434 = sbr.rel (%p432) target = $region36
      $region35: #{db_head_forward.2} parent=11 // pred_region
        _
      $region36: #{db_head_forward.2} parent=11 // pred_fallthru
        _
      // Predicated region
      $region37: #{db_head_forward.2} parent=11 // pred_check
        %p435 = pneg %p241
      $region38: #{db_head_forward.2} parent=11 // pred_check_branch
        %437 = sbr.rel (%p435) target = $region40
      $region39: #{db_head_forward.2} parent=11 // pred_region
        _
      $region40: #{db_head_forward.2} parent=11 // pred_fallthru
        _
      // Predicated region
      $region41: #{db_head_forward.2} parent=11 // pred_check
        %p438 = pneg %p262
      $region42: #{db_head_forward.2} parent=11 // pred_check_branch
        %440 = sbr.rel (%p438) target = $region44
      $region43: #{db_head_forward.2} parent=11 // pred_region
        _
      $region44: #{db_head_forward.2} parent=11 // pred_fallthru
        _
      // Predicated region
      $region45: #{db_head_forward.2} parent=11 // pred_check
        %p441 = pneg %p283
      $region46: #{db_head_forward.2} parent=11 // pred_check_branch
        %443 = sbr.rel (%p441) target = $region48
      $region47: #{db_head_forward.2} parent=11 // pred_region
        _
      $region48: #{db_head_forward.2} parent=11 // pred_fallthru
        _
      // Predicated region
      $region49: #{db_head_forward.2} parent=11 // pred_check
        %p444 = pneg %p304
      $region50: #{db_head_forward.2} parent=11 // pred_check_branch
        %446 = sbr.rel (%p444) target = $region52
      $region51: #{db_head_forward.2} parent=11 // pred_region
        _
      $region52: #{db_head_forward.2} parent=11 // pred_fallthru
        _
      // Predicated region
      $region53: #{db_head_forward.2} parent=11 // pred_check
        %p447 = pneg %p325
      $region54: #{db_head_forward.2} parent=11 // pred_check_branch
        %449 = sbr.rel (%p447) target = $region56
      $region55: #{db_head_forward.2} parent=11 // pred_region
        _
      $region56: #{db_head_forward.2} parent=11 // pred_fallthru
        _
      // Predicated region
      $region57: #{db_head_forward.2} parent=11 // pred_check
        %p450 = pneg %p346
      $region58: #{db_head_forward.2} parent=11 // pred_check_branch
        %452 = sbr.rel (%p450) target = $region60
      $region59: #{db_head_forward.2} parent=11 // pred_region
        _
      $region60: #{db_head_forward.2} parent=11 // pred_fallthru
        _
    $region12: #{db_head_forward.2} parent=5 // pred_fallthru
      _
    %p453 = scmp.lt.s32.totalorder %s22, 4
    // Predicated region
    $region61: #{db_head_forward.2} parent=5 // pred_check
      %p454 = pneg %p453
    $region62: #{db_head_forward.2} parent=5 // pred_check_branch
      %456 = sbr.rel (%p454) target = $region64
    $region63: #{db_head_forward.2} parent=5 // pred_region
      // Predicated region
      $region65: #{db_head_forward.2} parent=63 // pred_check
        %p457 = pneg %p56
      $region66: #{db_head_forward.2} parent=63 // pred_check_branch
        %459 = sbr.rel (%p457) target = $region68
      $region67: #{db_head_forward.2} parent=63 // pred_region
        %s460 = smul.u32 8, %s30
        %s461 = ssub.s32 18, %s460
        %p462 = scmp.lt.s32.totalorder %s461, 8
        %s463 = scalar_select %p462, %s461, 8
        %s464 = smul.u32 64, %s463
        %s465 = smul.u32 %s464, 3
        %p466 = scmp.lt.s32.totalorder %s29, 1
        %s467 = scalar_select %p466, %s29, 1
        %p468 = scmp.lt.s32.totalorder %s460, 17
        %s469 = scalar_select %p468, %s460, 17
        %s470 = smul.addr %s469, 3
        %s471 = smul.addr %s467, 54
        %s472 = sadd.s32 %s470, %s471
        %s473 = smul.addr %s472, 4
        %s474 = scalar_lea.vmem %s0, %s473
        %s475 = smul.u32 8, %s30
        %s476 = ssub.s32 18, %s475
        %p477 = scmp.lt.s32.totalorder %s476, 8
        %s478 = scalar_select %p477, %s476, 8
        %s479 = smul.u32 64, %s478
        %s480 = smul.u32 %s479, 3
      $region68: #{db_head_forward.2} parent=63 // pred_fallthru
        _
      // Predicated region
      $region69: #{db_head_forward.2} parent=63 // pred_check
        %p481 = pneg %p88
      $region70: #{db_head_forward.2} parent=63 // pred_check_branch
        %483 = sbr.rel (%p481) target = $region72
      $region71: #{db_head_forward.2} parent=63 // pred_region
        %s484 = sadd.s32 %s30, 1
        %s485 = smul.u32 %s484, 4
        %s486 = smul.u32 2, %s485
        %p487 = scmp.lt.s32.totalorder %s29, 1
        %s488 = scalar_select %p487, %s29, 1
        %p489 = scmp.lt.s32.totalorder %s486, 17
        %s490 = scalar_select %p489, %s486, 17
        %s491 = smul.addr %s490, 3
        %s492 = smul.addr %s488, 54
        %s493 = sadd.s32 %s491, %s492
        %s494 = smul.addr %s493, 4
        %s495 = scalar_lea.vmem %s1, %s494
        %s496 = sadd.s32 %s30, 1
        %s497 = smul.u32 %s496, 4
        %s498 = smul.u32 2, %s497
      $region72: #{db_head_forward.2} parent=63 // pred_fallthru
        _
    $region64: #{db_head_forward.2} parent=5 // pred_fallthru
      _
    %p499 = scmp.le.s32.totalorder 1, %s22
    %p500 = scmp.lt.s32.totalorder %s22, 5
    %p501 = pnand %p499, %p500
    %p502 = pneg %p501
    // Predicated region
    $region73: #{db_head_forward.2} parent=5 // pred_check
      _
    $region74: #{db_head_forward.2} parent=5 // pred_check_branch
      %504 = sbr.rel (%p501) target = $region76
    $region75: #{db_head_forward.2} parent=5 // pred_region
      %s505 = ssub.s32 %s22, 1
      %s506 = smul.u32 8, %s32
      %s507 = ssub.s32 18, %s506
      %p508 = scmp.lt.s32.totalorder %s507, 8
      %s509 = scalar_select %p508, %s507, 8
      %s510 = smul.u32 64, %s509
      %s511 = smul.u32 %s510, 3
      %p512 = scmp.lt.s32.totalorder %s31, 1
      %s513 = scalar_select %p512, %s31, 1
      %p514 = scmp.lt.s32.totalorder %s506, 17
      %s515 = scalar_select %p514, %s506, 17
      %s516 = smul.addr %s515, 3
      %s517 = smul.addr %s513, 54
      %s518 = sadd.s32 %s516, %s517
      %s519 = smul.addr %s518, 4
      %s520 = scalar_lea.vmem %s0, %s519
      %p521 = pneg %p62
      %p522 = pneg %p59
      %s523 = sadd.s32 %s32, 1
      %s524 = smul.u32 %s523, 4
      %s525 = smul.u32 2, %s524
      %p526 = scmp.lt.s32.totalorder %s31, 1
      %s527 = scalar_select %p526, %s31, 1
      %p528 = scmp.lt.s32.totalorder %s525, 17
      %s529 = scalar_select %p528, %s525, 17
      %s530 = smul.addr %s529, 3
      %s531 = smul.addr %s527, 54
      %s532 = sadd.s32 %s530, %s531
      %s533 = smul.addr %s532, 4
      %s534 = scalar_lea.vmem %s1, %s533
      %p535 = pneg %p94
      %p536 = pneg %p91
      %p537 = pneg %p115
      %p538 = pneg %p112
      %p539 = pneg %p136
      %p540 = pneg %p133
      %p541 = pneg %p157
      %p542 = pneg %p154
      %p543 = pneg %p178
      %p544 = pneg %p175
      %p545 = pneg %p199
      %p546 = pneg %p196
      %p547 = pneg %p220
      %p548 = pneg %p217
      %p549 = pneg %p241
      %p550 = pneg %p238
      %p551 = pneg %p262
      %p552 = pneg %p259
      %p553 = pneg %p283
      %p554 = pneg %p280
      %p555 = pneg %p304
      %p556 = pneg %p301
      %p557 = pneg %p325
      %p558 = pneg %p322
      %p559 = pneg %p346
      %p560 = pneg %p343
      %p561 = pneg %p374
      %p562 = pneg %p371
      %s563 = smul.u32 8, %s32
      %p564 = scmp.lt.s32.totalorder %s31, 1
      %s565 = scalar_select %p564, %s31, 1
      %p566 = scmp.lt.s32.totalorder %s563, 15
      %s567 = scalar_select %p566, %s563, 15
      %s568 = smul.addr %s567, 2
      %s569 = smul.addr %s565, 32
      %s570 = sadd.s32 %s568, %s569
      %s571 = smul.addr %s570, 4
      %s572 = scalar_lea.vmem %s14, %s571
      %p573 = pneg %p402
      %p574 = pneg %p399
      %p575 = scmp.lt.s32.totalorder %s31, 1
      %s576 = scalar_select %p575, %s31, 1
      %p577 = scmp.lt.s32.totalorder %s32, 1
      %s578 = scalar_select %p577, %s32, 1
      %s579 = smul.addr %s576, 2
      %s580 = sadd.s32 %s578, %s579
      %s581 = scalar_lea.vmem %s15, %s580
      %s582 = smul.u32 8, %s32
      %s583 = ssub.s32 18, %s582
      %p584 = scmp.lt.s32.totalorder %s583, 8
      %s585 = scalar_select %p584, %s583, 8
      %s586 = smul.u32 64, %s585
      %s587 = smul.u32 %s586, 3
      %p588 = scmp.lt.s32.totalorder %s31, 1
      %s589 = scalar_select %p588, %s31, 1
      %p590 = scmp.lt.s32.totalorder %s582, 17
      %s591 = scalar_select %p590, %s582, 17
      %s592 = smul.addr %s591, 3
      %s593 = smul.addr %s589, 54
      %s594 = sadd.s32 %s592, %s593
      %s595 = smul.addr %s594, 4
      %s596 = scalar_lea.vmem %s0, %s595
      %s597 = smul.u32 8, %s32
      %s598 = ssub.s32 18, %s597
      %p599 = scmp.lt.s32.totalorder %s598, 8
      %s600 = scalar_select %p599, %s598, 8
      %s601 = smul.u32 64, %s600
      %s602 = smul.u32 %s601, 3
      %s603 = sadd.s32 %s32, 1
      %s604 = smul.u32 %s603, 4
      %s605 = smul.u32 2, %s604
      %p606 = scmp.lt.s32.totalorder %s31, 1
      %s607 = scalar_select %p606, %s31, 1
      %p608 = scmp.lt.s32.totalorder %s605, 17
      %s609 = scalar_select %p608, %s605, 17
      %s610 = smul.addr %s609, 3
      %s611 = smul.addr %s607, 54
      %s612 = sadd.s32 %s610, %s611
      %s613 = smul.addr %s612, 4
      %s614 = scalar_lea.vmem %s1, %s613
      %s615 = sadd.s32 %s32, 1
      %s616 = smul.u32 %s615, 4
      %s617 = smul.u32 2, %s616
      %s618 = smul.u32 8, %s32
      %p619 = scmp.lt.s32.totalorder %s31, 1
      %s620 = scalar_select %p619, %s31, 1
      %p621 = scmp.lt.s32.totalorder %s618, 15
      %s622 = scalar_select %p621, %s618, 15
      %s623 = smul.addr %s622, 2
      %s624 = smul.addr %s620, 32
      %s625 = sadd.s32 %s623, %s624
      %s626 = smul.addr %s625, 4
      %s627 = scalar_lea.vmem %s14, %s626
      %s628 = smul.u32 8, %s32
      %p629 = scmp.lt.s32.totalorder %s31, 1
      %s630 = scalar_select %p629, %s31, 1
      %p631 = scmp.lt.s32.totalorder %s32, 1
      %s632 = scalar_select %p631, %s32, 1
      %s633 = smul.addr %s630, 2
      %s634 = sadd.s32 %s632, %s633
      %s635 = scalar_lea.vmem %s15, %s634
      %v637 = vld [vmem:[%s596] sm:$0xf]
      %v638 = vld [vmem:[%s596 + $0x4] sm:$0xf]
      %v639 = vld [vmem:[%s596 + $0x8] sm:$0x1]
      %v640 = vld [vmem:[%s596 + $0xc] sm:$0xf]
      %v641 = vld [vmem:[%s596 + $0x10] sm:$0xf]
      %v642 = vld [vmem:[%s596 + $0x14] sm:$0x1]
      %v643 = vld [vmem:[%s596 + $0x18] sm:$0xf]
      %v644 = vld [vmem:[%s596 + $0x1c] sm:$0xf]
      %v645 = vld [vmem:[%s596 + $0x20] sm:$0x1]
      %v646 = vld [vmem:[%s596 + $0x24] sm:$0xf]
      %v647 = vld [vmem:[%s596 + $0x28] sm:$0xf]
      %v648 = vld [vmem:[%s596 + $0x2c] sm:$0x1]
      %v649 = vld [vmem:[%s596 + $0x30] sm:$0xf]
      %v650 = vld [vmem:[%s596 + $0x34] sm:$0xf]
      %v651 = vld [vmem:[%s596 + $0x38] sm:$0x1]
      %v652 = vld [vmem:[%s596 + $0x3c] sm:$0xf]
      %v653 = vld [vmem:[%s596 + $0x40] sm:$0xf]
      %v654 = vld [vmem:[%s596 + $0x44] sm:$0x1]
      %v655 = vld [vmem:[%s596 + $0x48] sm:$0xf]
      %v656 = vld [vmem:[%s596 + $0x4c] sm:$0xf]
      %v657 = vld [vmem:[%s596 + $0x50] sm:$0x1]
      %v658 = vld [vmem:[%s596 + $0x54] sm:$0xf]
      %v659 = vld [vmem:[%s596 + $0x58] sm:$0xf]
      %v660 = vld [vmem:[%s596 + $0x5c] sm:$0x1]
      %v661 = vld [vmem:[%s614] sm:$0xf]
      %v662 = vld [vmem:[%s614 + $0x4] sm:$0xf]
      %v663 = vld [vmem:[%s614 + $0x8] sm:$0x1]
      %v664 = vld [vmem:[%s614 + $0xc] sm:$0xf]
      %v665 = vld [vmem:[%s614 + $0x10] sm:$0xf]
      %v666 = vld [vmem:[%s614 + $0x14] sm:$0x1]
      %v667 = vld [vmem:[%s2] sm:$0xf]
      %v668 = vld [vmem:[%s2 + $0x4] sm:$0xf]
      %v669 = vld [vmem:[%s2 + $0x8] sm:$0xf]
      %v670 = vld [vmem:[%s2 + $0xc] sm:$0xf]
      %v671 = vld [vmem:[%s2 + $0x10] sm:$0xf]
      %v672 = vld [vmem:[%s2 + $0x14] sm:$0xf]
      %v673 = vld [vmem:[%s2 + $0x18] sm:$0xf]
      %v674 = vld [vmem:[%s2 + $0x1c] sm:$0xf]
      %v675 = vld [vmem:[%s2 + $0x20] sm:$0xf]
      %v676 = vld [vmem:[%s2 + $0x24] sm:$0xf]
      %v677 = vld [vmem:[%s2 + $0x28] sm:$0xf]
      %v678 = vld [vmem:[%s2 + $0x2c] sm:$0xf]
      %v679 = vld [vmem:[%s2 + $0x30] sm:$0xf]
      %v680 = vld [vmem:[%s2 + $0x34] sm:$0xf]
      %v681 = vld [vmem:[%s2 + $0x38] sm:$0xf]
      %v682 = vld [vmem:[%s2 + $0x3c] sm:$0xf]
      %v683 = vld [vmem:[%s2 + $0x40] sm:$0xf]
      %v684 = vld [vmem:[%s2 + $0x44] sm:$0xf]
      %vm685 = vsmask.f32 3328
      %vm686 = vsmask.f32 7440
      %vm687 = vmor %vm685, %vm686
      %v689 = vshrl.u32 %v637, 16
      %v691 = vrot.slane %v689, 4
      %v692 = vshll.u32 %v637, 16
      %v694 = vrot.slane %v692, 5
      %v695 = vor.u32 %v691, %v694
      %v696 = vrot.slane %v695, 4
      %v698 = vshll.u32 %v638, 16
      %v700 = vrot.slane %v698, 5
      %v701 = vsel %vm687, %v696, %v700
      %v702 = vshrl.u32 %v638, 16
      %v704 = vrot.slane %v702, 4
      %v705 = vor.u32 %v704, %v700
      %v706 = vrot.slane %v705, 4
      %v708 = vshll.u32 %v639, 16
      %v710 = vrot.slane %v708, 5
      %v711 = vsel %vm687, %v706, %v710
      %v713 = vshrl.u32 %v640, 16
      %v715 = vrot.slane %v713, 4
      %v716 = vshll.u32 %v640, 16
      %v718 = vrot.slane %v716, 5
      %v719 = vor.u32 %v715, %v718
      %v720 = vrot.slane %v719, 4
      %v722 = vshll.u32 %v641, 16
      %v724 = vrot.slane %v722, 5
      %v725 = vsel %vm687, %v720, %v724
      %v726 = vshrl.u32 %v641, 16
      %v728 = vrot.slane %v726, 4
      %v729 = vor.u32 %v728, %v724
      %v730 = vrot.slane %v729, 4
      %v732 = vshll.u32 %v642, 16
      %v734 = vrot.slane %v732, 5
      %v735 = vsel %vm687, %v730, %v734
      %v737 = vshrl.u32 %v643, 16
      %v739 = vrot.slane %v737, 4
      %v740 = vshll.u32 %v643, 16
      %v742 = vrot.slane %v740, 5
      %v743 = vor.u32 %v739, %v742
      %v744 = vrot.slane %v743, 4
      %v746 = vshll.u32 %v644, 16
      %v748 = vrot.slane %v746, 5
      %v749 = vsel %vm687, %v744, %v748
      %v750 = vshrl.u32 %v644, 16
      %v752 = vrot.slane %v750, 4
      %v753 = vor.u32 %v752, %v748
      %v754 = vrot.slane %v753, 4
      %v756 = vshll.u32 %v645, 16
      %v758 = vrot.slane %v756, 5
      %v759 = vsel %vm687, %v754, %v758
      %v761 = vshrl.u32 %v646, 16
      %v763 = vrot.slane %v761, 4
      %v764 = vshll.u32 %v646, 16
      %v766 = vrot.slane %v764, 5
      %v767 = vor.u32 %v763, %v766
      %v768 = vrot.slane %v767, 4
      %v770 = vshll.u32 %v647, 16
      %v772 = vrot.slane %v770, 5
      %v773 = vsel %vm687, %v768, %v772
      %v774 = vshrl.u32 %v647, 16
      %v776 = vrot.slane %v774, 4
      %v777 = vor.u32 %v776, %v772
      %v778 = vrot.slane %v777, 4
      %v780 = vshll.u32 %v648, 16
      %v782 = vrot.slane %v780, 5
      %v783 = vsel %vm687, %v778, %v782
      %v785 = vshrl.u32 %v649, 16
      %v787 = vrot.slane %v785, 4
      %v788 = vshll.u32 %v649, 16
      %v790 = vrot.slane %v788, 5
      %v791 = vor.u32 %v787, %v790
      %v792 = vrot.slane %v791, 4
      %v794 = vshll.u32 %v650, 16
      %v796 = vrot.slane %v794, 5
      %v797 = vsel %vm687, %v792, %v796
      %v798 = vshrl.u32 %v650, 16
      %v800 = vrot.slane %v798, 4
      %v801 = vor.u32 %v800, %v796
      %v802 = vrot.slane %v801, 4
      %v804 = vshll.u32 %v651, 16
      %v806 = vrot.slane %v804, 5
      %v807 = vsel %vm687, %v802, %v806
      %v809 = vshrl.u32 %v652, 16
      %v811 = vrot.slane %v809, 4
      %v812 = vshll.u32 %v652, 16
      %v814 = vrot.slane %v812, 5
      %v815 = vor.u32 %v811, %v814
      %v816 = vrot.slane %v815, 4
      %v818 = vshll.u32 %v653, 16
      %v820 = vrot.slane %v818, 5
      %v821 = vsel %vm687, %v816, %v820
      %v822 = vshrl.u32 %v653, 16
      %v824 = vrot.slane %v822, 4
      %v825 = vor.u32 %v824, %v820
      %v826 = vrot.slane %v825, 4
      %v828 = vshll.u32 %v654, 16
      %v830 = vrot.slane %v828, 5
      %v831 = vsel %vm687, %v826, %v830
      %v833 = vshrl.u32 %v655, 16
      %v835 = vrot.slane %v833, 4
      %v836 = vshll.u32 %v655, 16
      %v838 = vrot.slane %v836, 5
      %v839 = vor.u32 %v835, %v838
      %v840 = vrot.slane %v839, 4
      %v842 = vshll.u32 %v656, 16
      %v844 = vrot.slane %v842, 5
      %v845 = vsel %vm687, %v840, %v844
      %v846 = vshrl.u32 %v656, 16
      %v848 = vrot.slane %v846, 4
      %v849 = vor.u32 %v848, %v844
      %v850 = vrot.slane %v849, 4
      %v852 = vshll.u32 %v657, 16
      %v854 = vrot.slane %v852, 5
      %v855 = vsel %vm687, %v850, %v854
      %v857 = vshrl.u32 %v658, 16
      %v859 = vrot.slane %v857, 4
      %v860 = vshll.u32 %v658, 16
      %v862 = vrot.slane %v860, 5
      %v863 = vor.u32 %v859, %v862
      %v864 = vrot.slane %v863, 4
      %v866 = vshll.u32 %v659, 16
      %v868 = vrot.slane %v866, 5
      %v869 = vsel %vm687, %v864, %v868
      %v870 = vshrl.u32 %v659, 16
      %v872 = vrot.slane %v870, 4
      %v873 = vor.u32 %v872, %v868
      %v874 = vrot.slane %v873, 4
      %v876 = vshll.u32 %v660, 16
      %v878 = vrot.slane %v876, 5
      %v879 = vsel %vm687, %v874, %v878
      %v880 = vunpack.c.l.b16 %v701
      %v881 = vunpack.c.l.b16 %v711
      %v882 = vunpack.c.l.b16 %v725
      %v883 = vunpack.c.l.b16 %v735
      %v884 = vunpack.c.l.b16 %v749
      %v885 = vunpack.c.l.b16 %v759
      %v886 = vunpack.c.l.b16 %v773
      %v887 = vunpack.c.l.b16 %v783
      %v888 = vunpack.c.l.b16 %v797
      %v889 = vunpack.c.l.b16 %v807
      %v890 = vunpack.c.l.b16 %v821
      %v891 = vunpack.c.l.b16 %v831
      %v892 = vunpack.c.l.b16 %v845
      %v893 = vunpack.c.l.b16 %v855
      %v894 = vunpack.c.l.b16 %v869
      %v895 = vunpack.c.l.b16 %v879
      %v896 = vpack.c.b16 %v881, %v880
      %v897 = vpack.c.b16 %v883, %v882
      %v898 = vpack.c.b16 %v885, %v884
      %v899 = vpack.c.b16 %v887, %v886
      %v900 = vpack.c.b16 %v889, %v888
      %v901 = vpack.c.b16 %v891, %v890
      %v902 = vpack.c.b16 %v893, %v892
      %v903 = vpack.c.b16 %v895, %v894
      %v906 = vunpack.c.l.b16 %v669
      %v907 = vunpack.c.l.b16 %v670
      %v908 = vpack.c.b16 %v907, %v906
      %vm910 = vcmask 130048
      %v912 = vsel %vm910, %v896, 0
      %v915 = vsel %vm910, %v897, 0
      %v918 = vsel %vm910, %v898, 0
      %v921 = vsel %vm910, %v899, 0
      %v924 = vsel %vm910, %v900, 0
      %v927 = vsel %vm910, %v901, 0
      %v930 = vsel %vm910, %v902, 0
      %v933 = vsel %vm910, %v903, 0
      %935 = vmatprep.subr.bf16.mxu0 0
      %936 = vmatpush1.bf16.msra.mxu0 %v908
      %937 = vmatprep.subr.bf16.mxu0 0
      %938 = vmatpush1.bf16.msra.mxu0 0
      %939 = vmatprep.subr.bf16.mxu0 0
      %940 = vmatpush1.bf16.msra.mxu0 0
      %941 = vmatprep.subr.bf16.mxu0 0
      %942 = vmatpush1.bf16.msra.mxu0 0
      %943 = vmatprep.subr.bf16.mxu0 0
      %944 = vmatpush1.bf16.msra.mxu0 0
      %945 = vmatprep.subr.bf16.mxu0 0
      %946 = vmatpush1.bf16.msra.mxu0 0
      %947 = vmatprep.subr.bf16.mxu0 0
      %948 = vmatpush1.bf16.msra.mxu0 0
      %949 = vmatprep.subr.bf16.mxu0 0
      %950 = vmatpush1.bf16.msra.mxu0 0
      %951 = vmatprep.subr.bf16.mxu0 0
      %952 = vmatpush1.bf16.msra.mxu0 0
      %953 = vmatprep.subr.bf16.mxu0 0
      %954 = vmatpush1.bf16.msra.mxu0 0
      %955 = vmatprep.subr.bf16.mxu0 0
      %956 = vmatpush1.bf16.msra.mxu0 0
      %957 = vmatprep.subr.bf16.mxu0 0
      %958 = vmatpush1.bf16.msra.mxu0 0
      %959 = vmatprep.subr.bf16.mxu0 0
      %960 = vmatpush1.bf16.msra.mxu0 0
      %961 = vmatprep.subr.bf16.mxu0 0
      %962 = vmatpush1.bf16.msra.mxu0 0
      %963 = vmatprep.subr.bf16.mxu0 0
      %964 = vmatpush1.bf16.msra.mxu0 0
      %965 = vmatprep.subr.bf16.mxu0 0
      %966 = vmatpush1.bf16.msra.mxu0 0
      %967 = vmatprep.mubr.bf16.mxu0 0
      %968 = vmatmul.mubr.bf16.gmra.mrb[0].mxu0 %v912
      %v969 = vpop.f32.mrb[0].mxu0
      %v970 = vadd.f32 0.0, %v969
      %v971 = vpop.f32.mrb[0].mxu0
      %v972 = vpop.f32.mrb[0].mxu0
      %v973 = vadd.f32 0.0, %v972
      %v974 = vpop.f32.mrb[0].mxu0
      %975 = vmatprep.mubr.bf16.mxu0 0
      %976 = vmatmul.mubr.bf16.gmra.mrb[0].mxu0 %v915
      %v977 = vpop.f32.mrb[0].mxu0
      %v978 = vadd.f32 0.0, %v977
      %v979 = vpop.f32.mrb[0].mxu0
      %v980 = vpop.f32.mrb[0].mxu0
      %v981 = vadd.f32 0.0, %v980
      %v982 = vpop.f32.mrb[0].mxu0
      %983 = vmatprep.mubr.bf16.mxu0 0
      %984 = vmatmul.mubr.bf16.gmra.mrb[0].mxu0 %v918
      %v985 = vpop.f32.mrb[0].mxu0
      %v986 = vadd.f32 0.0, %v985
      %v987 = vpop.f32.mrb[0].mxu0
      %v988 = vpop.f32.mrb[0].mxu0
      %v989 = vadd.f32 0.0, %v988
      %v990 = vpop.f32.mrb[0].mxu0
      %991 = vmatprep.mubr.bf16.mxu0 0
      %992 = vmatmul.mubr.bf16.gmra.mrb[0].mxu0 %v921
      %v993 = vpop.f32.mrb[0].mxu0
      %v994 = vadd.f32 0.0, %v993
      %v995 = vpop.f32.mrb[0].mxu0
      %v996 = vpop.f32.mrb[0].mxu0
      %v997 = vadd.f32 0.0, %v996
      %v998 = vpop.f32.mrb[0].mxu0
      %999 = vmatprep.mubr.bf16.mxu0 0
      %1000 = vmatmul.mubr.bf16.gmra.mrb[0].mxu0 %v924
      %v1001 = vpop.f32.mrb[0].mxu0
      %v1002 = vadd.f32 0.0, %v1001
      %v1003 = vpop.f32.mrb[0].mxu0
      %v1004 = vpop.f32.mrb[0].mxu0
      %v1005 = vadd.f32 0.0, %v1004
      %v1006 = vpop.f32.mrb[0].mxu0
      %1007 = vmatprep.mubr.bf16.mxu0 0
      %1008 = vmatmul.mubr.bf16.gmra.mrb[0].mxu0 %v927
      %v1009 = vpop.f32.mrb[0].mxu0
      %v1010 = vadd.f32 0.0, %v1009
      %v1011 = vpop.f32.mrb[0].mxu0
      %v1012 = vpop.f32.mrb[0].mxu0
      %v1013 = vadd.f32 0.0, %v1012
      %v1014 = vpop.f32.mrb[0].mxu0
      %1015 = vmatprep.mubr.bf16.mxu0 0
      %1016 = vmatmul.mubr.bf16.gmra.mrb[0].mxu0 %v930
      %v1017 = vpop.f32.mrb[0].mxu0
      %v1018 = vadd.f32 0.0, %v1017
      %v1019 = vpop.f32.mrb[0].mxu0
      %v1020 = vpop.f32.mrb[0].mxu0
      %v1021 = vadd.f32 0.0, %v1020
      %v1022 = vpop.f32.mrb[0].mxu0
      %1023 = vmatprep.mubr.bf16.mxu0 0
      %1024 = vmatmul.mubr.bf16.gmra.mrb[0].mxu0 %v933
      %v1025 = vpop.f32.mrb[0].mxu0
      %v1026 = vadd.f32 0.0, %v1025
      %v1027 = vpop.f32.mrb[0].mxu0
      %v1028 = vpop.f32.mrb[0].mxu0
      %v1029 = vadd.f32 0.0, %v1028
      %v1030 = vpop.f32.mrb[0].mxu0
      %1031 = vdwg.mxu0
      %v1048 = vunpack.c.l.b16 %v637
      %v1049 = vunpack.c.l.b16 %v638
      %v1050 = vunpack.c.l.b16 %v640
      %v1051 = vunpack.c.l.b16 %v641
      %v1052 = vunpack.c.l.b16 %v643
      %v1053 = vunpack.c.l.b16 %v644
      %v1054 = vunpack.c.l.b16 %v646
      %v1055 = vunpack.c.l.b16 %v647
      %v1056 = vunpack.c.l.b16 %v649
      %v1057 = vunpack.c.l.b16 %v650
      %v1058 = vunpack.c.l.b16 %v652
      %v1059 = vunpack.c.l.b16 %v653
      %v1060 = vunpack.c.l.b16 %v655
      %v1061 = vunpack.c.l.b16 %v656
      %v1062 = vunpack.c.l.b16 %v658
      %v1063 = vunpack.c.l.b16 %v659
      %v1064 = vpack.c.b16 %v1049, %v1048
      %v1065 = vpack.c.b16 %v1051, %v1050
      %v1066 = vpack.c.b16 %v1053, %v1052
      %v1067 = vpack.c.b16 %v1055, %v1054
      %v1068 = vpack.c.b16 %v1057, %v1056
      %v1069 = vpack.c.b16 %v1059, %v1058
      %v1070 = vpack.c.b16 %v1061, %v1060
      %v1071 = vpack.c.b16 %v1063, %v1062
      %v1074 = vunpack.c.l.b16 %v667
      %v1075 = vunpack.c.l.b16 %v668
      %v1076 = vpack.c.b16 %v1075, %v1074
      %v1079 = vsel %vm910, %v1064, 0
      %v1082 = vsel %vm910, %v1065, 0
      %v1085 = vsel %vm910, %v1066, 0
      %v1088 = vsel %vm910, %v1067, 0
      %v1091 = vsel %vm910, %v1068, 0
      %v1094 = vsel %vm910, %v1069, 0
      %v1097 = vsel %vm910, %v1070, 0
      %v1100 = vsel %vm910, %v1071, 0
      %1102 = vmatprep.subr.bf16.mxu0 0
      %1103 = vmatpush1.bf16.msra.mxu0 %v1076
      %1104 = vmatprep.subr.bf16.mxu0 0
      %1105 = vmatpush1.bf16.msra.mxu0 0
      %1106 = vmatprep.subr.bf16.mxu0 0
      %1107 = vmatpush1.bf16.msra.mxu0 0
      %1108 = vmatprep.subr.bf16.mxu0 0
      %1109 = vmatpush1.bf16.msra.mxu0 0
      %1110 = vmatprep.subr.bf16.mxu0 0
      %1111 = vmatpush1.bf16.msra.mxu0 0
      %1112 = vmatprep.subr.bf16.mxu0 0
      %1113 = vmatpush1.bf16.msra.mxu0 0
      %1114 = vmatprep.subr.bf16.mxu0 0
      %1115 = vmatpush1.bf16.msra.mxu0 0
      %1116 = vmatprep.subr.bf16.mxu0 0
      %1117 = vmatpush1.bf16.msra.mxu0 0
      %1118 = vmatprep.subr.bf16.mxu0 0
      %1119 = vmatpush1.bf16.msra.mxu0 0
      %1120 = vmatprep.subr.bf16.mxu0 0
      %1121 = vmatpush1.bf16.msra.mxu0 0
      %1122 = vmatprep.subr.bf16.mxu0 0
      %1123 = vmatpush1.bf16.msra.mxu0 0
      %1124 = vmatprep.subr.bf16.mxu0 0
      %1125 = vmatpush1.bf16.msra.mxu0 0
      %1126 = vmatprep.subr.bf16.mxu0 0
      %1127 = vmatpush1.bf16.msra.mxu0 0
      %1128 = vmatprep.subr.bf16.mxu0 0
      %1129 = vmatpush1.bf16.msra.mxu0 0
      %1130 = vmatprep.subr.bf16.mxu0 0
      %1131 = vmatpush1.bf16.msra.mxu0 0
      %1132 = vmatprep.subr.bf16.mxu0 0
      %1133 = vmatpush1.bf16.msra.mxu0 0
      %1134 = vmatprep.mubr.bf16.mxu0 0
      %1135 = vmatmul.mubr.bf16.gmra.mrb[0].mxu0 %v1079
      %v1136 = vpop.f32.mrb[0].mxu0
      %v1137 = vadd.f32 %v970, %v1136
      %v1138 = vpop.f32.mrb[0].mxu0
      %v1139 = vpop.f32.mrb[0].mxu0
      %v1140 = vadd.f32 %v973, %v1139
      %v1141 = vpop.f32.mrb[0].mxu0
      %1142 = vmatprep.mubr.bf16.mxu0 0
      %1143 = vmatmul.mubr.bf16.gmra.mrb[0].mxu0 %v1082
      %v1144 = vpop.f32.mrb[0].mxu0
      %v1145 = vadd.f32 %v978, %v1144
      %v1146 = vpop.f32.mrb[0].mxu0
      %v1147 = vpop.f32.mrb[0].mxu0
      %v1148 = vadd.f32 %v981, %v1147
      %v1149 = vpop.f32.mrb[0].mxu0
      %1150 = vmatprep.mubr.bf16.mxu0 0
      %1151 = vmatmul.mubr.bf16.gmra.mrb[0].mxu0 %v1085
      %v1152 = vpop.f32.mrb[0].mxu0
      %v1153 = vadd.f32 %v986, %v1152
      %v1154 = vpop.f32.mrb[0].mxu0
      %v1155 = vpop.f32.mrb[0].mxu0
      %v1156 = vadd.f32 %v989, %v1155
      %v1157 = vpop.f32.mrb[0].mxu0
      %1158 = vmatprep.mubr.bf16.mxu0 0
      %1159 = vmatmul.mubr.bf16.gmra.mrb[0].mxu0 %v1088
      %v1160 = vpop.f32.mrb[0].mxu0
      %v1161 = vadd.f32 %v994, %v1160
      %v1162 = vpop.f32.mrb[0].mxu0
      %v1163 = vpop.f32.mrb[0].mxu0
      %v1164 = vadd.f32 %v997, %v1163
      %v1165 = vpop.f32.mrb[0].mxu0
      %1166 = vmatprep.mubr.bf16.mxu0 0
      %1167 = vmatmul.mubr.bf16.gmra.mrb[0].mxu0 %v1091
      %v1168 = vpop.f32.mrb[0].mxu0
      %v1169 = vadd.f32 %v1002, %v1168
      %v1170 = vpop.f32.mrb[0].mxu0
      %v1171 = vpop.f32.mrb[0].mxu0
      %v1172 = vadd.f32 %v1005, %v1171
      %v1173 = vpop.f32.mrb[0].mxu0
      %1174 = vmatprep.mubr.bf16.mxu0 0
      %1175 = vmatmul.mubr.bf16.gmra.mrb[0].mxu0 %v1094
      %v1176 = vpop.f32.mrb[0].mxu0
      %v1177 = vadd.f32 %v1010, %v1176
      %v1178 = vpop.f32.mrb[0].mxu0
      %v1179 = vpop.f32.mrb[0].mxu0
      %v1180 = vadd.f32 %v1013, %v1179
      %v1181 = vpop.f32.mrb[0].mxu0
      %1182 = vmatprep.mubr.bf16.mxu0 0
      %1183 = vmatmul.mubr.bf16.gmra.mrb[0].mxu0 %v1097
      %v1184 = vpop.f32.mrb[0].mxu0
      %v1185 = vadd.f32 %v1018, %v1184
      %v1186 = vpop.f32.mrb[0].mxu0
      %v1187 = vpop.f32.mrb[0].mxu0
      %v1188 = vadd.f32 %v1021, %v1187
      %v1189 = vpop.f32.mrb[0].mxu0
      %1190 = vmatprep.mubr.bf16.mxu0 0
      %1191 = vmatmul.mubr.bf16.gmra.mrb[0].mxu0 %v1100
      %v1192 = vpop.f32.mrb[0].mxu0
      %v1193 = vadd.f32 %v1026, %v1192
      %v1194 = vpop.f32.mrb[0].mxu0
      %v1195 = vpop.f32.mrb[0].mxu0
      %v1196 = vadd.f32 %v1029, %v1195
      %v1197 = vpop.f32.mrb[0].mxu0
      %1198 = vdwg.mxu0
      %vm1207 = vcmask 1042432
      %vm1208 = vcmask 1046532
      %vm1209 = vmor %vm1207, %vm1208
      %v1210 = vrot.slane %v637, 5
      %v1211 = vrot.slane %v1210, 4
      %v1212 = vrot.slane %v638, 5
      %v1213 = vsel %vm1209, %v1211, %v1212
      %v1214 = vrot.slane %v1212, 4
      %v1215 = vrot.slane %v639, 5
      %v1216 = vsel %vm1209, %v1214, %v1215
      %v1217 = vrot.slane %v640, 5
      %v1218 = vrot.slane %v1217, 4
      %v1219 = vrot.slane %v641, 5
      %v1220 = vsel %vm1209, %v1218, %v1219
      %v1221 = vrot.slane %v1219, 4
      %v1222 = vrot.slane %v642, 5
      %v1223 = vsel %vm1209, %v1221, %v1222
      %v1224 = vrot.slane %v643, 5
      %v1225 = vrot.slane %v1224, 4
      %v1226 = vrot.slane %v644, 5
      %v1227 = vsel %vm1209, %v1225, %v1226
      %v1228 = vrot.slane %v1226, 4
      %v1229 = vrot.slane %v645, 5
      %v1230 = vsel %vm1209, %v1228, %v1229
      %v1231 = vrot.slane %v646, 5
      %v1232 = vrot.slane %v1231, 4
      %v1233 = vrot.slane %v647, 5
      %v1234 = vsel %vm1209, %v1232, %v1233
      %v1235 = vrot.slane %v1233, 4
      %v1236 = vrot.slane %v648, 5
      %v1237 = vsel %vm1209, %v1235, %v1236
      %v1238 = vrot.slane %v649, 5
      %v1239 = vrot.slane %v1238, 4
      %v1240 = vrot.slane %v650, 5
      %v1241 = vsel %vm1209, %v1239, %v1240
      %v1242 = vrot.slane %v1240, 4
      %v1243 = vrot.slane %v651, 5
      %v1244 = vsel %vm1209, %v1242, %v1243
      %v1245 = vrot.slane %v652, 5
      %v1246 = vrot.slane %v1245, 4
      %v1247 = vrot.slane %v653, 5
      %v1248 = vsel %vm1209, %v1246, %v1247
      %v1249 = vrot.slane %v1247, 4
      %v1250 = vrot.slane %v654, 5
      %v1251 = vsel %vm1209, %v1249, %v1250
      %v1252 = vrot.slane %v655, 5
      %v1253 = vrot.slane %v1252, 4
      %v1254 = vrot.slane %v656, 5
      %v1255 = vsel %vm1209, %v1253, %v1254
      %v1256 = vrot.slane %v1254, 4
      %v1257 = vrot.slane %v657, 5
      %v1258 = vsel %vm1209, %v1256, %v1257
      %v1259 = vrot.slane %v658, 5
      %v1260 = vrot.slane %v1259, 4
      %v1261 = vrot.slane %v659, 5
      %v1262 = vsel %vm1209, %v1260, %v1261
      %v1263 = vrot.slane %v1261, 4
      %v1264 = vrot.slane %v660, 5
      %v1265 = vsel %vm1209, %v1263, %v1264
      %v1266 = vunpack.c.l.b16 %v1213
      %v1267 = vunpack.c.l.b16 %v1216
      %v1268 = vunpack.c.l.b16 %v1220
      %v1269 = vunpack.c.l.b16 %v1223
      %v1270 = vunpack.c.l.b16 %v1227
      %v1271 = vunpack.c.l.b16 %v1230
      %v1272 = vunpack.c.l.b16 %v1234
      %v1273 = vunpack.c.l.b16 %v1237
      %v1274 = vunpack.c.l.b16 %v1241
      %v1275 = vunpack.c.l.b16 %v1244
      %v1276 = vunpack.c.l.b16 %v1248
      %v1277 = vunpack.c.l.b16 %v1251
      %v1278 = vunpack.c.l.b16 %v1255
      %v1279 = vunpack.c.l.b16 %v1258
      %v1280 = vunpack.c.l.b16 %v1262
      %v1281 = vunpack.c.l.b16 %v1265
      %v1282 = vpack.c.b16 %v1267, %v1266
      %v1283 = vpack.c.b16 %v1269, %v1268
      %v1284 = vpack.c.b16 %v1271, %v1270
      %v1285 = vpack.c.b16 %v1273, %v1272
      %v1286 = vpack.c.b16 %v1275, %v1274
      %v1287 = vpack.c.b16 %v1277, %v1276
      %v1288 = vpack.c.b16 %v1279, %v1278
      %v1289 = vpack.c.b16 %v1281, %v1280
      %v1292 = vunpack.c.l.b16 %v671
      %v1293 = vunpack.c.l.b16 %v672
      %v1294 = vpack.c.b16 %v1293, %v1292
      %v1297 = vsel %vm910, %v1282, 0
      %v1300 = vsel %vm910, %v1283, 0
      %v1303 = vsel %vm910, %v1284, 0
      %v1306 = vsel %vm910, %v1285, 0
      %v1309 = vsel %vm910, %v1286, 0
      %v1312 = vsel %vm910, %v1287, 0
      %v1315 = vsel %vm910, %v1288, 0
      %v1318 = vsel %vm910, %v1289, 0
      %1320 = vmatprep.subr.bf16.mxu0 0
      %1321 = vmatpush1.bf16.msra.mxu0 %v1294
      %1322 = vmatprep.subr.bf16.mxu0 0
      %1323 = vmatpush1.bf16.msra.mxu0 0
      %1324 = vmatprep.subr.bf16.mxu0 0
      %1325 = vmatpush1.bf16.msra.mxu0 0
      %1326 = vmatprep.subr.bf16.mxu0 0
      %1327 = vmatpush1.bf16.msra.mxu0 0
      %1328 = vmatprep.subr.bf16.mxu0 0
      %1329 = vmatpush1.bf16.msra.mxu0 0
      %1330 = vmatprep.subr.bf16.mxu0 0
      %1331 = vmatpush1.bf16.msra.mxu0 0
      %1332 = vmatprep.subr.bf16.mxu0 0
      %1333 = vmatpush1.bf16.msra.mxu0 0
      %1334 = vmatprep.subr.bf16.mxu0 0
      %1335 = vmatpush1.bf16.msra.mxu0 0
      %1336 = vmatprep.subr.bf16.mxu0 0
      %1337 = vmatpush1.bf16.msra.mxu0 0
      %1338 = vmatprep.subr.bf16.mxu0 0
      %1339 = vmatpush1.bf16.msra.mxu0 0
      %1340 = vmatprep.subr.bf16.mxu0 0
      %1341 = vmatpush1.bf16.msra.mxu0 0
      %1342 = vmatprep.subr.bf16.mxu0 0
      %1343 = vmatpush1.bf16.msra.mxu0 0
      %1344 = vmatprep.subr.bf16.mxu0 0
      %1345 = vmatpush1.bf16.msra.mxu0 0
      %1346 = vmatprep.subr.bf16.mxu0 0
      %1347 = vmatpush1.bf16.msra.mxu0 0
      %1348 = vmatprep.subr.bf16.mxu0 0
      %1349 = vmatpush1.bf16.msra.mxu0 0
      %1350 = vmatprep.subr.bf16.mxu0 0
      %1351 = vmatpush1.bf16.msra.mxu0 0
      %1352 = vmatprep.mubr.bf16.mxu0 0
      %1353 = vmatmul.mubr.bf16.gmra.mrb[0].mxu0 %v1297
      %v1354 = vpop.f32.mrb[0].mxu0
      %v1355 = vadd.f32 0.0, %v1354
      %v1356 = vpop.f32.mrb[0].mxu0
      %v1357 = vpop.f32.mrb[0].mxu0
      %v1358 = vadd.f32 0.0, %v1357
      %v1359 = vpop.f32.mrb[0].mxu0
      %1360 = vmatprep.mubr.bf16.mxu0 0
      %1361 = vmatmul.mubr.bf16.gmra.mrb[0].mxu0 %v1300
      %v1362 = vpop.f32.mrb[0].mxu0
      %v1363 = vadd.f32 0.0, %v1362
      %v1364 = vpop.f32.mrb[0].mxu0
      %v1365 = vpop.f32.mrb[0].mxu0
      %v1366 = vadd.f32 0.0, %v1365
      %v1367 = vpop.f32.mrb[0].mxu0
      %1368 = vmatprep.mubr.bf16.mxu0 0
      %1369 = vmatmul.mubr.bf16.gmra.mrb[0].mxu0 %v1303
      %v1370 = vpop.f32.mrb[0].mxu0
      %v1371 = vadd.f32 0.0, %v1370
      %v1372 = vpop.f32.mrb[0].mxu0
      %v1373 = vpop.f32.mrb[0].mxu0
      %v1374 = vadd.f32 0.0, %v1373
      %v1375 = vpop.f32.mrb[0].mxu0
      %1376 = vmatprep.mubr.bf16.mxu0 0
      %1377 = vmatmul.mubr.bf16.gmra.mrb[0].mxu0 %v1306
      %v1378 = vpop.f32.mrb[0].mxu0
      %v1379 = vadd.f32 0.0, %v1378
      %v1380 = vpop.f32.mrb[0].mxu0
      %v1381 = vpop.f32.mrb[0].mxu0
      %v1382 = vadd.f32 0.0, %v1381
      %v1383 = vpop.f32.mrb[0].mxu0
      %1384 = vmatprep.mubr.bf16.mxu0 0
      %1385 = vmatmul.mubr.bf16.gmra.mrb[0].mxu0 %v1309
      %v1386 = vpop.f32.mrb[0].mxu0
      %v1387 = vadd.f32 0.0, %v1386
      %v1388 = vpop.f32.mrb[0].mxu0
      %v1389 = vpop.f32.mrb[0].mxu0
      %v1390 = vadd.f32 0.0, %v1389
      %v1391 = vpop.f32.mrb[0].mxu0
      %1392 = vmatprep.mubr.bf16.mxu0 0
      %1393 = vmatmul.mubr.bf16.gmra.mrb[0].mxu0 %v1312
      %v1394 = vpop.f32.mrb[0].mxu0
      %v1395 = vadd.f32 0.0, %v1394
      %v1396 = vpop.f32.mrb[0].mxu0
      %v1397 = vpop.f32.mrb[0].mxu0
      %v1398 = vadd.f32 0.0, %v1397
      %v1399 = vpop.f32.mrb[0].mxu0
      %1400 = vmatprep.mubr.bf16.mxu0 0
      %1401 = vmatmul.mubr.bf16.gmra.mrb[0].mxu0 %v1315
      %v1402 = vpop.f32.mrb[0].mxu0
      %v1403 = vadd.f32 0.0, %v1402
      %v1404 = vpop.f32.mrb[0].mxu0
      %v1405 = vpop.f32.mrb[0].mxu0
      %v1406 = vadd.f32 0.0, %v1405
      %v1407 = vpop.f32.mrb[0].mxu0
      %1408 = vmatprep.mubr.bf16.mxu0 0
      %1409 = vmatmul.mubr.bf16.gmra.mrb[0].mxu0 %v1318
      %v1410 = vpop.f32.mrb[0].mxu0
      %v1411 = vadd.f32 0.0, %v1410
      %v1412 = vpop.f32.mrb[0].mxu0
      %v1413 = vpop.f32.mrb[0].mxu0
      %v1414 = vadd.f32 0.0, %v1413
      %v1415 = vpop.f32.mrb[0].mxu0
      %1416 = vdwg.mxu0
      %v1417 = vadd.f32 %v1137, %v1355
      %v1418 = vadd.f32 %v1140, %v1358
      %v1419 = vadd.f32 %v1145, %v1363
      %v1420 = vadd.f32 %v1148, %v1366
      %v1421 = vadd.f32 %v1153, %v1371
      %v1422 = vadd.f32 %v1156, %v1374
      %v1423 = vadd.f32 %v1161, %v1379
      %v1424 = vadd.f32 %v1164, %v1382
      %v1425 = vadd.f32 %v1169, %v1387
      %v1426 = vadd.f32 %v1172, %v1390
      %v1427 = vadd.f32 %v1177, %v1395
      %v1428 = vadd.f32 %v1180, %v1398
      %v1429 = vadd.f32 %v1185, %v1403
      %v1430 = vadd.f32 %v1188, %v1406
      %v1431 = vadd.f32 %v1193, %v1411
      %v1432 = vadd.f32 %v1196, %v1414
      %v1435 = vunpack.c.l.b16 %v661
      %v1436 = vunpack.c.l.b16 %v662
      %v1437 = vpack.c.b16 %v1436, %v1435
      %v1440 = vunpack.c.l.b16 %v673
      %v1441 = vunpack.c.l.b16 %v674
      %v1442 = vpack.c.b16 %v1441, %v1440
      %v1445 = vsel %vm910, %v1437, 0
      %1447 = vmatprep.subr.bf16.mxu0 0
      %1448 = vmatpush1.bf16.msra.mxu0 %v1442
      %1449 = vmatprep.subr.bf16.mxu0 0
      %1450 = vmatpush1.bf16.msra.mxu0 0
      %1451 = vmatprep.subr.bf16.mxu0 0
      %1452 = vmatpush1.bf16.msra.mxu0 0
      %1453 = vmatprep.subr.bf16.mxu0 0
      %1454 = vmatpush1.bf16.msra.mxu0 0
      %1455 = vmatprep.subr.bf16.mxu0 0
      %1456 = vmatpush1.bf16.msra.mxu0 0
      %1457 = vmatprep.subr.bf16.mxu0 0
      %1458 = vmatpush1.bf16.msra.mxu0 0
      %1459 = vmatprep.subr.bf16.mxu0 0
      %1460 = vmatpush1.bf16.msra.mxu0 0
      %1461 = vmatprep.subr.bf16.mxu0 0
      %1462 = vmatpush1.bf16.msra.mxu0 0
      %1463 = vmatprep.subr.bf16.mxu0 0
      %1464 = vmatpush1.bf16.msra.mxu0 0
      %1465 = vmatprep.subr.bf16.mxu0 0
      %1466 = vmatpush1.bf16.msra.mxu0 0
      %1467 = vmatprep.subr.bf16.mxu0 0
      %1468 = vmatpush1.bf16.msra.mxu0 0
      %1469 = vmatprep.subr.bf16.mxu0 0
      %1470 = vmatpush1.bf16.msra.mxu0 0
      %1471 = vmatprep.subr.bf16.mxu0 0
      %1472 = vmatpush1.bf16.msra.mxu0 0
      %1473 = vmatprep.subr.bf16.mxu0 0
      %1474 = vmatpush1.bf16.msra.mxu0 0
      %1475 = vmatprep.subr.bf16.mxu0 0
      %1476 = vmatpush1.bf16.msra.mxu0 0
      %1477 = vmatprep.subr.bf16.mxu0 0
      %1478 = vmatpush1.bf16.msra.mxu0 0
      %1479 = vmatprep.mubr.bf16.mxu0 0
      %1480 = vmatmul.mubr.bf16.gmra.mrb[0].mxu0 %v1082
      %v1481 = vpop.f32.mrb[0].mxu0
      %v1482 = vadd.f32 0.0, %v1481
      %v1483 = vpop.f32.mrb[0].mxu0
      %v1484 = vpop.f32.mrb[0].mxu0
      %v1485 = vadd.f32 0.0, %v1484
      %v1486 = vpop.f32.mrb[0].mxu0
      %1487 = vmatprep.mubr.bf16.mxu0 0
      %1488 = vmatmul.mubr.bf16.gmra.mrb[0].mxu0 %v1085
      %v1489 = vpop.f32.mrb[0].mxu0
      %v1490 = vadd.f32 0.0, %v1489
      %v1491 = vpop.f32.mrb[0].mxu0
      %v1492 = vpop.f32.mrb[0].mxu0
      %v1493 = vadd.f32 0.0, %v1492
      %v1494 = vpop.f32.mrb[0].mxu0
      %1495 = vmatprep.mubr.bf16.mxu0 0
      %1496 = vmatmul.mubr.bf16.gmra.mrb[0].mxu0 %v1088
      %v1497 = vpop.f32.mrb[0].mxu0
      %v1498 = vadd.f32 0.0, %v1497
      %v1499 = vpop.f32.mrb[0].mxu0
      %v1500 = vpop.f32.mrb[0].mxu0
      %v1501 = vadd.f32 0.0, %v1500
      %v1502 = vpop.f32.mrb[0].mxu0
      %1503 = vmatprep.mubr.bf16.mxu0 0
      %1504 = vmatmul.mubr.bf16.gmra.mrb[0].mxu0 %v1091
      %v1505 = vpop.f32.mrb[0].mxu0
      %v1506 = vadd.f32 0.0, %v1505
      %v1507 = vpop.f32.mrb[0].mxu0
      %v1508 = vpop.f32.mrb[0].mxu0
      %v1509 = vadd.f32 0.0, %v1508
      %v1510 = vpop.f32.mrb[0].mxu0
      %1511 = vmatprep.mubr.bf16.mxu0 0
      %1512 = vmatmul.mubr.bf16.gmra.mrb[0].mxu0 %v1094
      %v1513 = vpop.f32.mrb[0].mxu0
      %v1514 = vadd.f32 0.0, %v1513
      %v1515 = vpop.f32.mrb[0].mxu0
      %v1516 = vpop.f32.mrb[0].mxu0
      %v1517 = vadd.f32 0.0, %v1516
      %v1518 = vpop.f32.mrb[0].mxu0
      %1519 = vmatprep.mubr.bf16.mxu0 0
      %1520 = vmatmul.mubr.bf16.gmra.mrb[0].mxu0 %v1097
      %v1521 = vpop.f32.mrb[0].mxu0
      %v1522 = vadd.f32 0.0, %v1521
      %v1523 = vpop.f32.mrb[0].mxu0
      %v1524 = vpop.f32.mrb[0].mxu0
      %v1525 = vadd.f32 0.0, %v1524
      %v1526 = vpop.f32.mrb[0].mxu0
      %1527 = vmatprep.mubr.bf16.mxu0 0
      %1528 = vmatmul.mubr.bf16.gmra.mrb[0].mxu0 %v1100
      %v1529 = vpop.f32.mrb[0].mxu0
      %v1530 = vadd.f32 0.0, %v1529
      %v1531 = vpop.f32.mrb[0].mxu0
      %v1532 = vpop.f32.mrb[0].mxu0
      %v1533 = vadd.f32 0.0, %v1532
      %v1534 = vpop.f32.mrb[0].mxu0
      %1535 = vmatprep.mubr.bf16.mxu0 0
      %1536 = vmatmul.mubr.bf16.gmra.mrb[0].mxu0 %v1445
      %v1537 = vpop.f32.mrb[0].mxu0
      %v1538 = vadd.f32 0.0, %v1537
      %v1539 = vpop.f32.mrb[0].mxu0
      %v1540 = vpop.f32.mrb[0].mxu0
      %v1541 = vadd.f32 0.0, %v1540
      %v1542 = vpop.f32.mrb[0].mxu0
      %1543 = vdwg.mxu0
      %v1544 = vadd.f32 %v1417, %v1482
      %v1545 = vadd.f32 %v1418, %v1485
      %v1546 = vadd.f32 %v1419, %v1490
      %v1547 = vadd.f32 %v1420, %v1493
      %v1548 = vadd.f32 %v1421, %v1498
      %v1549 = vadd.f32 %v1422, %v1501
      %v1550 = vadd.f32 %v1423, %v1506
      %v1551 = vadd.f32 %v1424, %v1509
      %v1552 = vadd.f32 %v1425, %v1514
      %v1553 = vadd.f32 %v1426, %v1517
      %v1554 = vadd.f32 %v1427, %v1522
      %v1555 = vadd.f32 %v1428, %v1525
      %v1556 = vadd.f32 %v1429, %v1530
      %v1557 = vadd.f32 %v1430, %v1533
      %v1558 = vadd.f32 %v1431, %v1538
      %v1559 = vadd.f32 %v1432, %v1541
      %v1561 = vshrl.u32 %v661, 16
      %v1563 = vrot.slane %v1561, 4
      %v1564 = vshll.u32 %v661, 16
      %v1566 = vrot.slane %v1564, 5
      %v1567 = vor.u32 %v1563, %v1566
      %v1568 = vrot.slane %v1567, 4
      %v1570 = vshll.u32 %v662, 16
      %v1572 = vrot.slane %v1570, 5
      %v1573 = vsel %vm687, %v1568, %v1572
      %v1574 = vshrl.u32 %v662, 16
      %v1576 = vrot.slane %v1574, 4
      %v1577 = vor.u32 %v1576, %v1572
      %v1578 = vrot.slane %v1577, 4
      %v1580 = vshll.u32 %v663, 16
      %v1582 = vrot.slane %v1580, 5
      %v1583 = vsel %vm687, %v1578, %v1582
      %v1584 = vunpack.c.l.b16 %v1573
      %v1585 = vunpack.c.l.b16 %v1583
      %v1586 = vpack.c.b16 %v1585, %v1584
      %v1589 = vunpack.c.l.b16 %v675
      %v1590 = vunpack.c.l.b16 %v676
      %v1591 = vpack.c.b16 %v1590, %v1589
      %v1594 = vsel %vm910, %v1586, 0
      %1596 = vmatprep.subr.bf16.mxu0 0
      %1597 = vmatpush1.bf16.msra.mxu0 %v1591
      %1598 = vmatprep.subr.bf16.mxu0 0
      %1599 = vmatpush1.bf16.msra.mxu0 0
      %1600 = vmatprep.subr.bf16.mxu0 0
      %1601 = vmatpush1.bf16.msra.mxu0 0
      %1602 = vmatprep.subr.bf16.mxu0 0
      %1603 = vmatpush1.bf16.msra.mxu0 0
      %1604 = vmatprep.subr.bf16.mxu0 0
      %1605 = vmatpush1.bf16.msra.mxu0 0
      %1606 = vmatprep.subr.bf16.mxu0 0
      %1607 = vmatpush1.bf16.msra.mxu0 0
      %1608 = vmatprep.subr.bf16.mxu0 0
      %1609 = vmatpush1.bf16.msra.mxu0 0
      %1610 = vmatprep.subr.bf16.mxu0 0
      %1611 = vmatpush1.bf16.msra.mxu0 0
      %1612 = vmatprep.subr.bf16.mxu0 0
      %1613 = vmatpush1.bf16.msra.mxu0 0
      %1614 = vmatprep.subr.bf16.mxu0 0
      %1615 = vmatpush1.bf16.msra.mxu0 0
      %1616 = vmatprep.subr.bf16.mxu0 0
      %1617 = vmatpush1.bf16.msra.mxu0 0
      %1618 = vmatprep.subr.bf16.mxu0 0
      %1619 = vmatpush1.bf16.msra.mxu0 0
      %1620 = vmatprep.subr.bf16.mxu0 0
      %1621 = vmatpush1.bf16.msra.mxu0 0
      %1622 = vmatprep.subr.bf16.mxu0 0
      %1623 = vmatpush1.bf16.msra.mxu0 0
      %1624 = vmatprep.subr.bf16.mxu0 0
      %1625 = vmatpush1.bf16.msra.mxu0 0
      %1626 = vmatprep.subr.bf16.mxu0 0
      %1627 = vmatpush1.bf16.msra.mxu0 0
      %1628 = vmatprep.mubr.bf16.mxu0 0
      %1629 = vmatmul.mubr.bf16.gmra.mrb[0].mxu0 %v915
      %v1630 = vpop.f32.mrb[0].mxu0
      %v1631 = vadd.f32 0.0, %v1630
      %v1632 = vpop.f32.mrb[0].mxu0
      %v1633 = vpop.f32.mrb[0].mxu0
      %v1634 = vadd.f32 0.0, %v1633
      %v1635 = vpop.f32.mrb[0].mxu0
      %1636 = vmatprep.mubr.bf16.mxu0 0
      %1637 = vmatmul.mubr.bf16.gmra.mrb[0].mxu0 %v918
      %v1638 = vpop.f32.mrb[0].mxu0
      %v1639 = vadd.f32 0.0, %v1638
      %v1640 = vpop.f32.mrb[0].mxu0
      %v1641 = vpop.f32.mrb[0].mxu0
      %v1642 = vadd.f32 0.0, %v1641
      %v1643 = vpop.f32.mrb[0].mxu0
      %1644 = vmatprep.mubr.bf16.mxu0 0
      %1645 = vmatmul.mubr.bf16.gmra.mrb[0].mxu0 %v921
      %v1646 = vpop.f32.mrb[0].mxu0
      %v1647 = vadd.f32 0.0, %v1646
      %v1648 = vpop.f32.mrb[0].mxu0
      %v1649 = vpop.f32.mrb[0].mxu0
      %v1650 = vadd.f32 0.0, %v1649
      %v1651 = vpop.f32.mrb[0].mxu0
      %1652 = vmatprep.mubr.bf16.mxu0 0
      %1653 = vmatmul.mubr.bf16.gmra.mrb[0].mxu0 %v924
      %v1654 = vpop.f32.mrb[0].mxu0
      %v1655 = vadd.f32 0.0, %v1654
      %v1656 = vpop.f32.mrb[0].mxu0
      %v1657 = vpop.f32.mrb[0].mxu0
      %v1658 = vadd.f32 0.0, %v1657
      %v1659 = vpop.f32.mrb[0].mxu0
      %1660 = vmatprep.mubr.bf16.mxu0 0
      %1661 = vmatmul.mubr.bf16.gmra.mrb[0].mxu0 %v927
      %v1662 = vpop.f32.mrb[0].mxu0
      %v1663 = vadd.f32 0.0, %v1662
      %v1664 = vpop.f32.mrb[0].mxu0
      %v1665 = vpop.f32.mrb[0].mxu0
      %v1666 = vadd.f32 0.0, %v1665
      %v1667 = vpop.f32.mrb[0].mxu0
      %1668 = vmatprep.mubr.bf16.mxu0 0
      %1669 = vmatmul.mubr.bf16.gmra.mrb[0].mxu0 %v930
      %v1670 = vpop.f32.mrb[0].mxu0
      %v1671 = vadd.f32 0.0, %v1670
      %v1672 = vpop.f32.mrb[0].mxu0
      %v1673 = vpop.f32.mrb[0].mxu0
      %v1674 = vadd.f32 0.0, %v1673
      %v1675 = vpop.f32.mrb[0].mxu0
      %1676 = vmatprep.mubr.bf16.mxu0 0
      %1677 = vmatmul.mubr.bf16.gmra.mrb[0].mxu0 %v933
      %v1678 = vpop.f32.mrb[0].mxu0
      %v1679 = vadd.f32 0.0, %v1678
      %v1680 = vpop.f32.mrb[0].mxu0
      %v1681 = vpop.f32.mrb[0].mxu0
      %v1682 = vadd.f32 0.0, %v1681
      %v1683 = vpop.f32.mrb[0].mxu0
      %1684 = vmatprep.mubr.bf16.mxu0 0
      %1685 = vmatmul.mubr.bf16.gmra.mrb[0].mxu0 %v1594
      %v1686 = vpop.f32.mrb[0].mxu0
      %v1687 = vadd.f32 0.0, %v1686
      %v1688 = vpop.f32.mrb[0].mxu0
      %v1689 = vpop.f32.mrb[0].mxu0
      %v1690 = vadd.f32 0.0, %v1689
      %v1691 = vpop.f32.mrb[0].mxu0
      %1692 = vdwg.mxu0
      %v1693 = vadd.f32 %v1544, %v1631
      %v1694 = vadd.f32 %v1545, %v1634
      %v1695 = vadd.f32 %v1546, %v1639
      %v1696 = vadd.f32 %v1547, %v1642
      %v1697 = vadd.f32 %v1548, %v1647
      %v1698 = vadd.f32 %v1549, %v1650
      %v1699 = vadd.f32 %v1550, %v1655
      %v1700 = vadd.f32 %v1551, %v1658
      %v1701 = vadd.f32 %v1552, %v1663
      %v1702 = vadd.f32 %v1553, %v1666
      %v1703 = vadd.f32 %v1554, %v1671
      %v1704 = vadd.f32 %v1555, %v1674
      %v1705 = vadd.f32 %v1556, %v1679
      %v1706 = vadd.f32 %v1557, %v1682
      %v1707 = vadd.f32 %v1558, %v1687
      %v1708 = vadd.f32 %v1559, %v1690
      %v1710 = vrot.slane %v661, 5
      %v1711 = vrot.slane %v1710, 4
      %v1712 = vrot.slane %v662, 5
      %v1713 = vsel %vm1209, %v1711, %v1712
      %v1714 = vrot.slane %v1712, 4
      %v1715 = vrot.slane %v663, 5
      %v1716 = vsel %vm1209, %v1714, %v1715
      %v1717 = vunpack.c.l.b16 %v1713
      %v1718 = vunpack.c.l.b16 %v1716
      %v1719 = vpack.c.b16 %v1718, %v1717
      %v1722 = vunpack.c.l.b16 %v677
      %v1723 = vunpack.c.l.b16 %v678
      %v1724 = vpack.c.b16 %v1723, %v1722
      %v1727 = vsel %vm910, %v1719, 0
      %1729 = vmatprep.subr.bf16.mxu0 0
      %1730 = vmatpush1.bf16.msra.mxu0 %v1724
      %1731 = vmatprep.subr.bf16.mxu0 0
      %1732 = vmatpush1.bf16.msra.mxu0 0
      %1733 = vmatprep.subr.bf16.mxu0 0
      %1734 = vmatpush1.bf16.msra.mxu0 0
      %1735 = vmatprep.subr.bf16.mxu0 0
      %1736 = vmatpush1.bf16.msra.mxu0 0
      %1737 = vmatprep.subr.bf16.mxu0 0
      %1738 = vmatpush1.bf16.msra.mxu0 0
      %1739 = vmatprep.subr.bf16.mxu0 0
      %1740 = vmatpush1.bf16.msra.mxu0 0
      %1741 = vmatprep.subr.bf16.mxu0 0
      %1742 = vmatpush1.bf16.msra.mxu0 0
      %1743 = vmatprep.subr.bf16.mxu0 0
      %1744 = vmatpush1.bf16.msra.mxu0 0
      %1745 = vmatprep.subr.bf16.mxu0 0
      %1746 = vmatpush1.bf16.msra.mxu0 0
      %1747 = vmatprep.subr.bf16.mxu0 0
      %1748 = vmatpush1.bf16.msra.mxu0 0
      %1749 = vmatprep.subr.bf16.mxu0 0
      %1750 = vmatpush1.bf16.msra.mxu0 0
      %1751 = vmatprep.subr.bf16.mxu0 0
      %1752 = vmatpush1.bf16.msra.mxu0 0
      %1753 = vmatprep.subr.bf16.mxu0 0
      %1754 = vmatpush1.bf16.msra.mxu0 0
      %1755 = vmatprep.subr.bf16.mxu0 0
      %1756 = vmatpush1.bf16.msra.mxu0 0
      %1757 = vmatprep.subr.bf16.mxu0 0
      %1758 = vmatpush1.bf16.msra.mxu0 0
      %1759 = vmatprep.subr.bf16.mxu0 0
      %1760 = vmatpush1.bf16.msra.mxu0 0
      %1761 = vmatprep.mubr.bf16.mxu0 0
      %1762 = vmatmul.mubr.bf16.gmra.mrb[0].mxu0 %v1300
      %v1763 = vpop.f32.mrb[0].mxu0
      %v1764 = vadd.f32 0.0, %v1763
      %v1765 = vpop.f32.mrb[0].mxu0
      %v1766 = vpop.f32.mrb[0].mxu0
      %v1767 = vadd.f32 0.0, %v1766
      %v1768 = vpop.f32.mrb[0].mxu0
      %1769 = vmatprep.mubr.bf16.mxu0 0
      %1770 = vmatmul.mubr.bf16.gmra.mrb[0].mxu0 %v1303
      %v1771 = vpop.f32.mrb[0].mxu0
      %v1772 = vadd.f32 0.0, %v1771
      %v1773 = vpop.f32.mrb[0].mxu0
      %v1774 = vpop.f32.mrb[0].mxu0
      %v1775 = vadd.f32 0.0, %v1774
      %v1776 = vpop.f32.mrb[0].mxu0
      %1777 = vmatprep.mubr.bf16.mxu0 0
      %1778 = vmatmul.mubr.bf16.gmra.mrb[0].mxu0 %v1306
      %v1779 = vpop.f32.mrb[0].mxu0
      %v1780 = vadd.f32 0.0, %v1779
      %v1781 = vpop.f32.mrb[0].mxu0
      %v1782 = vpop.f32.mrb[0].mxu0
      %v1783 = vadd.f32 0.0, %v1782
      %v1784 = vpop.f32.mrb[0].mxu0
      %1785 = vmatprep.mubr.bf16.mxu0 0
      %1786 = vmatmul.mubr.bf16.gmra.mrb[0].mxu0 %v1309
      %v1787 = vpop.f32.mrb[0].mxu0
      %v1788 = vadd.f32 0.0, %v1787
      %v1789 = vpop.f32.mrb[0].mxu0
      %v1790 = vpop.f32.mrb[0].mxu0
      %v1791 = vadd.f32 0.0, %v1790
      %v1792 = vpop.f32.mrb[0].mxu0
      %1793 = vmatprep.mubr.bf16.mxu0 0
      %1794 = vmatmul.mubr.bf16.gmra.mrb[0].mxu0 %v1312
      %v1795 = vpop.f32.mrb[0].mxu0
      %v1796 = vadd.f32 0.0, %v1795
      %v1797 = vpop.f32.mrb[0].mxu0
      %v1798 = vpop.f32.mrb[0].mxu0
      %v1799 = vadd.f32 0.0, %v1798
      %v1800 = vpop.f32.mrb[0].mxu0
      %1801 = vmatprep.mubr.bf16.mxu0 0
      %1802 = vmatmul.mubr.bf16.gmra.mrb[0].mxu0 %v1315
      %v1803 = vpop.f32.mrb[0].mxu0
      %v1804 = vadd.f32 0.0, %v1803
      %v1805 = vpop.f32.mrb[0].mxu0
      %v1806 = vpop.f32.mrb[0].mxu0
      %v1807 = vadd.f32 0.0, %v1806
      %v1808 = vpop.f32.mrb[0].mxu0
      %1809 = vmatprep.mubr.bf16.mxu0 0
      %1810 = vmatmul.mubr.bf16.gmra.mrb[0].mxu0 %v1318
      %v1811 = vpop.f32.mrb[0].mxu0
      %v1812 = vadd.f32 0.0, %v1811
      %v1813 = vpop.f32.mrb[0].mxu0
      %v1814 = vpop.f32.mrb[0].mxu0
      %v1815 = vadd.f32 0.0, %v1814
      %v1816 = vpop.f32.mrb[0].mxu0
      %1817 = vmatprep.mubr.bf16.mxu0 0
      %1818 = vmatmul.mubr.bf16.gmra.mrb[0].mxu0 %v1727
      %v1819 = vpop.f32.mrb[0].mxu0
      %v1820 = vadd.f32 0.0, %v1819
      %v1821 = vpop.f32.mrb[0].mxu0
      %v1822 = vpop.f32.mrb[0].mxu0
      %v1823 = vadd.f32 0.0, %v1822
      %v1824 = vpop.f32.mrb[0].mxu0
      %1825 = vdwg.mxu0
      %v1826 = vadd.f32 %v1693, %v1764
      %v1827 = vadd.f32 %v1694, %v1767
      %v1828 = vadd.f32 %v1695, %v1772
      %v1829 = vadd.f32 %v1696, %v1775
      %v1830 = vadd.f32 %v1697, %v1780
      %v1831 = vadd.f32 %v1698, %v1783
      %v1832 = vadd.f32 %v1699, %v1788
      %v1833 = vadd.f32 %v1700, %v1791
      %v1834 = vadd.f32 %v1701, %v1796
      %v1835 = vadd.f32 %v1702, %v1799
      %v1836 = vadd.f32 %v1703, %v1804
      %v1837 = vadd.f32 %v1704, %v1807
      %v1838 = vadd.f32 %v1705, %v1812
      %v1839 = vadd.f32 %v1706, %v1815
      %v1840 = vadd.f32 %v1707, %v1820
      %v1841 = vadd.f32 %v1708, %v1823
      %v1844 = vunpack.c.l.b16 %v664
      %v1845 = vunpack.c.l.b16 %v665
      %v1846 = vpack.c.b16 %v1845, %v1844
      %v1849 = vunpack.c.l.b16 %v679
      %v1850 = vunpack.c.l.b16 %v680
      %v1851 = vpack.c.b16 %v1850, %v1849
      %v1854 = vsel %vm910, %v1846, 0
      %1856 = vmatprep.subr.bf16.mxu0 0
      %1857 = vmatpush1.bf16.msra.mxu0 %v1851
      %1858 = vmatprep.subr.bf16.mxu0 0
      %1859 = vmatpush1.bf16.msra.mxu0 0
      %1860 = vmatprep.subr.bf16.mxu0 0
      %1861 = vmatpush1.bf16.msra.mxu0 0
      %1862 = vmatprep.subr.bf16.mxu0 0
      %1863 = vmatpush1.bf16.msra.mxu0 0
      %1864 = vmatprep.subr.bf16.mxu0 0
      %1865 = vmatpush1.bf16.msra.mxu0 0
      %1866 = vmatprep.subr.bf16.mxu0 0
      %1867 = vmatpush1.bf16.msra.mxu0 0
      %1868 = vmatprep.subr.bf16.mxu0 0
      %1869 = vmatpush1.bf16.msra.mxu0 0
      %1870 = vmatprep.subr.bf16.mxu0 0
      %1871 = vmatpush1.bf16.msra.mxu0 0
      %1872 = vmatprep.subr.bf16.mxu0 0
      %1873 = vmatpush1.bf16.msra.mxu0 0
      %1874 = vmatprep.subr.bf16.mxu0 0
      %1875 = vmatpush1.bf16.msra.mxu0 0
      %1876 = vmatprep.subr.bf16.mxu0 0
      %1877 = vmatpush1.bf16.msra.mxu0 0
      %1878 = vmatprep.subr.bf16.mxu0 0
      %1879 = vmatpush1.bf16.msra.mxu0 0
      %1880 = vmatprep.subr.bf16.mxu0 0
      %1881 = vmatpush1.bf16.msra.mxu0 0
      %1882 = vmatprep.subr.bf16.mxu0 0
      %1883 = vmatpush1.bf16.msra.mxu0 0
      %1884 = vmatprep.subr.bf16.mxu0 0
      %1885 = vmatpush1.bf16.msra.mxu0 0
      %1886 = vmatprep.subr.bf16.mxu0 0
      %1887 = vmatpush1.bf16.msra.mxu0 0
      %1888 = vmatprep.mubr.bf16.mxu0 0
      %1889 = vmatmul.mubr.bf16.gmra.mrb[0].mxu0 %v1085
      %v1890 = vpop.f32.mrb[0].mxu0
      %v1891 = vadd.f32 0.0, %v1890
      %v1892 = vpop.f32.mrb[0].mxu0
      %v1893 = vpop.f32.mrb[0].mxu0
      %v1894 = vadd.f32 0.0, %v1893
      %v1895 = vpop.f32.mrb[0].mxu0
      %1896 = vmatprep.mubr.bf16.mxu0 0
      %1897 = vmatmul.mubr.bf16.gmra.mrb[0].mxu0 %v1088
      %v1898 = vpop.f32.mrb[0].mxu0
      %v1899 = vadd.f32 0.0, %v1898
      %v1900 = vpop.f32.mrb[0].mxu0
      %v1901 = vpop.f32.mrb[0].mxu0
      %v1902 = vadd.f32 0.0, %v1901
      %v1903 = vpop.f32.mrb[0].mxu0
      %1904 = vmatprep.mubr.bf16.mxu0 0
      %1905 = vmatmul.mubr.bf16.gmra.mrb[0].mxu0 %v1091
      %v1906 = vpop.f32.mrb[0].mxu0
      %v1907 = vadd.f32 0.0, %v1906
      %v1908 = vpop.f32.mrb[0].mxu0
      %v1909 = vpop.f32.mrb[0].mxu0
      %v1910 = vadd.f32 0.0, %v1909
      %v1911 = vpop.f32.mrb[0].mxu0
      %1912 = vmatprep.mubr.bf16.mxu0 0
      %1913 = vmatmul.mubr.bf16.gmra.mrb[0].mxu0 %v1094
      %v1914 = vpop.f32.mrb[0].mxu0
      %v1915 = vadd.f32 0.0, %v1914
      %v1916 = vpop.f32.mrb[0].mxu0
      %v1917 = vpop.f32.mrb[0].mxu0
      %v1918 = vadd.f32 0.0, %v1917
      %v1919 = vpop.f32.mrb[0].mxu0
      %1920 = vmatprep.mubr.bf16.mxu0 0
      %1921 = vmatmul.mubr.bf16.gmra.mrb[0].mxu0 %v1097
      %v1922 = vpop.f32.mrb[0].mxu0
      %v1923 = vadd.f32 0.0, %v1922
      %v1924 = vpop.f32.mrb[0].mxu0
      %v1925 = vpop.f32.mrb[0].mxu0
      %v1926 = vadd.f32 0.0, %v1925
      %v1927 = vpop.f32.mrb[0].mxu0
      %1928 = vmatprep.mubr.bf16.mxu0 0
      %1929 = vmatmul.mubr.bf16.gmra.mrb[0].mxu0 %v1100
      %v1930 = vpop.f32.mrb[0].mxu0
      %v1931 = vadd.f32 0.0, %v1930
      %v1932 = vpop.f32.mrb[0].mxu0
      %v1933 = vpop.f32.mrb[0].mxu0
      %v1934 = vadd.f32 0.0, %v1933
      %v1935 = vpop.f32.mrb[0].mxu0
      %1936 = vmatprep.mubr.bf16.mxu0 0
      %1937 = vmatmul.mubr.bf16.gmra.mrb[0].mxu0 %v1445
      %v1938 = vpop.f32.mrb[0].mxu0
      %v1939 = vadd.f32 0.0, %v1938
      %v1940 = vpop.f32.mrb[0].mxu0
      %v1941 = vpop.f32.mrb[0].mxu0
      %v1942 = vadd.f32 0.0, %v1941
      %v1943 = vpop.f32.mrb[0].mxu0
      %1944 = vmatprep.mubr.bf16.mxu0 0
      %1945 = vmatmul.mubr.bf16.gmra.mrb[0].mxu0 %v1854
      %v1946 = vpop.f32.mrb[0].mxu0
      %v1947 = vadd.f32 0.0, %v1946
      %v1948 = vpop.f32.mrb[0].mxu0
      %v1949 = vpop.f32.mrb[0].mxu0
      %v1950 = vadd.f32 0.0, %v1949
      %v1951 = vpop.f32.mrb[0].mxu0
      %1952 = vdwg.mxu0
      %v1953 = vadd.f32 %v1826, %v1891
      %v1954 = vadd.f32 %v1827, %v1894
      %v1955 = vadd.f32 %v1828, %v1899
      %v1956 = vadd.f32 %v1829, %v1902
      %v1957 = vadd.f32 %v1830, %v1907
      %v1958 = vadd.f32 %v1831, %v1910
      %v1959 = vadd.f32 %v1832, %v1915
      %v1960 = vadd.f32 %v1833, %v1918
      %v1961 = vadd.f32 %v1834, %v1923
      %v1962 = vadd.f32 %v1835, %v1926
      %v1963 = vadd.f32 %v1836, %v1931
      %v1964 = vadd.f32 %v1837, %v1934
      %v1965 = vadd.f32 %v1838, %v1939
      %v1966 = vadd.f32 %v1839, %v1942
      %v1967 = vadd.f32 %v1840, %v1947
      %v1968 = vadd.f32 %v1841, %v1950
      %v1970 = vshrl.u32 %v664, 16
      %v1972 = vrot.slane %v1970, 4
      %v1973 = vshll.u32 %v664, 16
      %v1975 = vrot.slane %v1973, 5
      %v1976 = vor.u32 %v1972, %v1975
      %v1977 = vrot.slane %v1976, 4
      %v1979 = vshll.u32 %v665, 16
      %v1981 = vrot.slane %v1979, 5
      %v1982 = vsel %vm687, %v1977, %v1981
      %v1983 = vshrl.u32 %v665, 16
      %v1985 = vrot.slane %v1983, 4
      %v1986 = vor.u32 %v1985, %v1981
      %v1987 = vrot.slane %v1986, 4
      %v1989 = vshll.u32 %v666, 16
      %v1991 = vrot.slane %v1989, 5
      %v1992 = vsel %vm687, %v1987, %v1991
      %v1993 = vunpack.c.l.b16 %v1982
      %v1994 = vunpack.c.l.b16 %v1992
      %v1995 = vpack.c.b16 %v1994, %v1993
      %v1998 = vunpack.c.l.b16 %v681
      %v1999 = vunpack.c.l.b16 %v682
      %v2000 = vpack.c.b16 %v1999, %v1998
      %v2003 = vsel %vm910, %v1995, 0
      %2005 = vmatprep.subr.bf16.mxu0 0
      %2006 = vmatpush1.bf16.msra.mxu0 %v2000
      %2007 = vmatprep.subr.bf16.mxu0 0
      %2008 = vmatpush1.bf16.msra.mxu0 0
      %2009 = vmatprep.subr.bf16.mxu0 0
      %2010 = vmatpush1.bf16.msra.mxu0 0
      %2011 = vmatprep.subr.bf16.mxu0 0
      %2012 = vmatpush1.bf16.msra.mxu0 0
      %2013 = vmatprep.subr.bf16.mxu0 0
      %2014 = vmatpush1.bf16.msra.mxu0 0
      %2015 = vmatprep.subr.bf16.mxu0 0
      %2016 = vmatpush1.bf16.msra.mxu0 0
      %2017 = vmatprep.subr.bf16.mxu0 0
      %2018 = vmatpush1.bf16.msra.mxu0 0
      %2019 = vmatprep.subr.bf16.mxu0 0
      %2020 = vmatpush1.bf16.msra.mxu0 0
      %2021 = vmatprep.subr.bf16.mxu0 0
      %2022 = vmatpush1.bf16.msra.mxu0 0
      %2023 = vmatprep.subr.bf16.mxu0 0
      %2024 = vmatpush1.bf16.msra.mxu0 0
      %2025 = vmatprep.subr.bf16.mxu0 0
      %2026 = vmatpush1.bf16.msra.mxu0 0
      %2027 = vmatprep.subr.bf16.mxu0 0
      %2028 = vmatpush1.bf16.msra.mxu0 0
      %2029 = vmatprep.subr.bf16.mxu0 0
      %2030 = vmatpush1.bf16.msra.mxu0 0
      %2031 = vmatprep.subr.bf16.mxu0 0
      %2032 = vmatpush1.bf16.msra.mxu0 0
      %2033 = vmatprep.subr.bf16.mxu0 0
      %2034 = vmatpush1.bf16.msra.mxu0 0
      %2035 = vmatprep.subr.bf16.mxu0 0
      %2036 = vmatpush1.bf16.msra.mxu0 0
      %2037 = vmatprep.mubr.bf16.mxu0 0
      %2038 = vmatmul.mubr.bf16.gmra.mrb[0].mxu0 %v918
      %v2039 = vpop.f32.mrb[0].mxu0
      %v2040 = vadd.f32 0.0, %v2039
      %v2041 = vpop.f32.mrb[0].mxu0
      %v2042 = vpop.f32.mrb[0].mxu0
      %v2043 = vadd.f32 0.0, %v2042
      %v2044 = vpop.f32.mrb[0].mxu0
      %2045 = vmatprep.mubr.bf16.mxu0 0
      %2046 = vmatmul.mubr.bf16.gmra.mrb[0].mxu0 %v921
      %v2047 = vpop.f32.mrb[0].mxu0
      %v2048 = vadd.f32 0.0, %v2047
      %v2049 = vpop.f32.mrb[0].mxu0
      %v2050 = vpop.f32.mrb[0].mxu0
      %v2051 = vadd.f32 0.0, %v2050
      %v2052 = vpop.f32.mrb[0].mxu0
      %2053 = vmatprep.mubr.bf16.mxu0 0
      %2054 = vmatmul.mubr.bf16.gmra.mrb[0].mxu0 %v924
      %v2055 = vpop.f32.mrb[0].mxu0
      %v2056 = vadd.f32 0.0, %v2055
      %v2057 = vpop.f32.mrb[0].mxu0
      %v2058 = vpop.f32.mrb[0].mxu0
      %v2059 = vadd.f32 0.0, %v2058
      %v2060 = vpop.f32.mrb[0].mxu0
      %2061 = vmatprep.mubr.bf16.mxu0 0
      %2062 = vmatmul.mubr.bf16.gmra.mrb[0].mxu0 %v927
      %v2063 = vpop.f32.mrb[0].mxu0
      %v2064 = vadd.f32 0.0, %v2063
      %v2065 = vpop.f32.mrb[0].mxu0
      %v2066 = vpop.f32.mrb[0].mxu0
      %v2067 = vadd.f32 0.0, %v2066
      %v2068 = vpop.f32.mrb[0].mxu0
      %2069 = vmatprep.mubr.bf16.mxu0 0
      %2070 = vmatmul.mubr.bf16.gmra.mrb[0].mxu0 %v930
      %v2071 = vpop.f32.mrb[0].mxu0
      %v2072 = vadd.f32 0.0, %v2071
      %v2073 = vpop.f32.mrb[0].mxu0
      %v2074 = vpop.f32.mrb[0].mxu0
      %v2075 = vadd.f32 0.0, %v2074
      %v2076 = vpop.f32.mrb[0].mxu0
      %2077 = vmatprep.mubr.bf16.mxu0 0
      %2078 = vmatmul.mubr.bf16.gmra.mrb[0].mxu0 %v933
      %v2079 = vpop.f32.mrb[0].mxu0
      %v2080 = vadd.f32 0.0, %v2079
      %v2081 = vpop.f32.mrb[0].mxu0
      %v2082 = vpop.f32.mrb[0].mxu0
      %v2083 = vadd.f32 0.0, %v2082
      %v2084 = vpop.f32.mrb[0].mxu0
      %2085 = vmatprep.mubr.bf16.mxu0 0
      %2086 = vmatmul.mubr.bf16.gmra.mrb[0].mxu0 %v1594
      %v2087 = vpop.f32.mrb[0].mxu0
      %v2088 = vadd.f32 0.0, %v2087
      %v2089 = vpop.f32.mrb[0].mxu0
      %v2090 = vpop.f32.mrb[0].mxu0
      %v2091 = vadd.f32 0.0, %v2090
      %v2092 = vpop.f32.mrb[0].mxu0
      %2093 = vmatprep.mubr.bf16.mxu0 0
      %2094 = vmatmul.mubr.bf16.gmra.mrb[0].mxu0 %v2003
      %v2095 = vpop.f32.mrb[0].mxu0
      %v2096 = vadd.f32 0.0, %v2095
      %v2097 = vpop.f32.mrb[0].mxu0
      %v2098 = vpop.f32.mrb[0].mxu0
      %v2099 = vadd.f32 0.0, %v2098
      %v2100 = vpop.f32.mrb[0].mxu0
      %2101 = vdwg.mxu0
      %v2102 = vadd.f32 %v1953, %v2040
      %v2103 = vadd.f32 %v1954, %v2043
      %v2104 = vadd.f32 %v1955, %v2048
      %v2105 = vadd.f32 %v1956, %v2051
      %v2106 = vadd.f32 %v1957, %v2056
      %v2107 = vadd.f32 %v1958, %v2059
      %v2108 = vadd.f32 %v1959, %v2064
      %v2109 = vadd.f32 %v1960, %v2067
      %v2110 = vadd.f32 %v1961, %v2072
      %v2111 = vadd.f32 %v1962, %v2075
      %v2112 = vadd.f32 %v1963, %v2080
      %v2113 = vadd.f32 %v1964, %v2083
      %v2114 = vadd.f32 %v1965, %v2088
      %v2115 = vadd.f32 %v1966, %v2091
      %v2116 = vadd.f32 %v1967, %v2096
      %v2117 = vadd.f32 %v1968, %v2099
      %v2119 = vrot.slane %v664, 5
      %v2120 = vrot.slane %v2119, 4
      %v2121 = vrot.slane %v665, 5
      %v2122 = vsel %vm1209, %v2120, %v2121
      %v2123 = vrot.slane %v2121, 4
      %v2124 = vrot.slane %v666, 5
      %v2125 = vsel %vm1209, %v2123, %v2124
      %v2126 = vunpack.c.l.b16 %v2122
      %v2127 = vunpack.c.l.b16 %v2125
      %v2128 = vpack.c.b16 %v2127, %v2126
      %v2131 = vunpack.c.l.b16 %v683
      %v2132 = vunpack.c.l.b16 %v684
      %v2133 = vpack.c.b16 %v2132, %v2131
      %v2136 = vsel %vm910, %v2128, 0
      %2138 = vmatprep.subr.bf16.mxu0 0
      %2139 = vmatpush1.bf16.msra.mxu0 %v2133
      %2140 = vmatprep.subr.bf16.mxu0 0
      %2141 = vmatpush1.bf16.msra.mxu0 0
      %2142 = vmatprep.subr.bf16.mxu0 0
      %2143 = vmatpush1.bf16.msra.mxu0 0
      %2144 = vmatprep.subr.bf16.mxu0 0
      %2145 = vmatpush1.bf16.msra.mxu0 0
      %2146 = vmatprep.subr.bf16.mxu0 0
      %2147 = vmatpush1.bf16.msra.mxu0 0
      %2148 = vmatprep.subr.bf16.mxu0 0
      %2149 = vmatpush1.bf16.msra.mxu0 0
      %2150 = vmatprep.subr.bf16.mxu0 0
      %2151 = vmatpush1.bf16.msra.mxu0 0
      %2152 = vmatprep.subr.bf16.mxu0 0
      %2153 = vmatpush1.bf16.msra.mxu0 0
      %2154 = vmatprep.subr.bf16.mxu0 0
      %2155 = vmatpush1.bf16.msra.mxu0 0
      %2156 = vmatprep.subr.bf16.mxu0 0
      %2157 = vmatpush1.bf16.msra.mxu0 0
      %2158 = vmatprep.subr.bf16.mxu0 0
      %2159 = vmatpush1.bf16.msra.mxu0 0
      %2160 = vmatprep.subr.bf16.mxu0 0
      %2161 = vmatpush1.bf16.msra.mxu0 0
      %2162 = vmatprep.subr.bf16.mxu0 0
      %2163 = vmatpush1.bf16.msra.mxu0 0
      %2164 = vmatprep.subr.bf16.mxu0 0
      %2165 = vmatpush1.bf16.msra.mxu0 0
      %2166 = vmatprep.subr.bf16.mxu0 0
      %2167 = vmatpush1.bf16.msra.mxu0 0
      %2168 = vmatprep.subr.bf16.mxu0 0
      %2169 = vmatpush1.bf16.msra.mxu0 0
      %2170 = vmatprep.mubr.bf16.mxu0 0
      %2171 = vmatmul.mubr.bf16.gmra.mrb[0].mxu0 %v1303
      %v2172 = vpop.f32.mrb[0].mxu0
      %v2173 = vadd.f32 0.0, %v2172
      %v2174 = vpop.f32.mrb[0].mxu0
      %v2175 = vpop.f32.mrb[0].mxu0
      %v2176 = vadd.f32 0.0, %v2175
      %v2177 = vpop.f32.mrb[0].mxu0
      %2178 = vmatprep.mubr.bf16.mxu0 0
      %2179 = vmatmul.mubr.bf16.gmra.mrb[0].mxu0 %v1306
      %v2180 = vpop.f32.mrb[0].mxu0
      %v2181 = vadd.f32 0.0, %v2180
      %v2182 = vpop.f32.mrb[0].mxu0
      %v2183 = vpop.f32.mrb[0].mxu0
      %v2184 = vadd.f32 0.0, %v2183
      %v2185 = vpop.f32.mrb[0].mxu0
      %2186 = vmatprep.mubr.bf16.mxu0 0
      %2187 = vmatmul.mubr.bf16.gmra.mrb[0].mxu0 %v1309
      %v2188 = vpop.f32.mrb[0].mxu0
      %v2189 = vadd.f32 0.0, %v2188
      %v2190 = vpop.f32.mrb[0].mxu0
      %v2191 = vpop.f32.mrb[0].mxu0
      %v2192 = vadd.f32 0.0, %v2191
      %v2193 = vpop.f32.mrb[0].mxu0
      %2194 = vmatprep.mubr.bf16.mxu0 0
      %2195 = vmatmul.mubr.bf16.gmra.mrb[0].mxu0 %v1312
      %v2196 = vpop.f32.mrb[0].mxu0
      %v2197 = vadd.f32 0.0, %v2196
      %v2198 = vpop.f32.mrb[0].mxu0
      %v2199 = vpop.f32.mrb[0].mxu0
      %v2200 = vadd.f32 0.0, %v2199
      %v2201 = vpop.f32.mrb[0].mxu0
      %2202 = vmatprep.mubr.bf16.mxu0 0
      %2203 = vmatmul.mubr.bf16.gmra.mrb[0].mxu0 %v1315
      %v2204 = vpop.f32.mrb[0].mxu0
      %v2205 = vadd.f32 0.0, %v2204
      %v2206 = vpop.f32.mrb[0].mxu0
      %v2207 = vpop.f32.mrb[0].mxu0
      %v2208 = vadd.f32 0.0, %v2207
      %v2209 = vpop.f32.mrb[0].mxu0
      %2210 = vmatprep.mubr.bf16.mxu0 0
      %2211 = vmatmul.mubr.bf16.gmra.mrb[0].mxu0 %v1318
      %v2212 = vpop.f32.mrb[0].mxu0
      %v2213 = vadd.f32 0.0, %v2212
      %v2214 = vpop.f32.mrb[0].mxu0
      %v2215 = vpop.f32.mrb[0].mxu0
      %v2216 = vadd.f32 0.0, %v2215
      %v2217 = vpop.f32.mrb[0].mxu0
      %2218 = vmatprep.mubr.bf16.mxu0 0
      %2219 = vmatmul.mubr.bf16.gmra.mrb[0].mxu0 %v1727
      %v2220 = vpop.f32.mrb[0].mxu0
      %v2221 = vadd.f32 0.0, %v2220
      %v2222 = vpop.f32.mrb[0].mxu0
      %v2223 = vpop.f32.mrb[0].mxu0
      %v2224 = vadd.f32 0.0, %v2223
      %v2225 = vpop.f32.mrb[0].mxu0
      %2226 = vmatprep.mubr.bf16.mxu0 0
      %2227 = vmatmul.mubr.bf16.gmra.mrb[0].mxu0 %v2136
      %v2228 = vpop.f32.mrb[0].mxu0
      %v2229 = vadd.f32 0.0, %v2228
      %v2230 = vpop.f32.mrb[0].mxu0
      %v2231 = vpop.f32.mrb[0].mxu0
      %v2232 = vadd.f32 0.0, %v2231
      %v2233 = vpop.f32.mrb[0].mxu0
      %2234 = vdwg.mxu0
      %v2235 = vadd.f32 %v2102, %v2173
      %v2236 = vadd.f32 %v2103, %v2176
      %v2237 = vadd.f32 %v2104, %v2181
      %v2238 = vadd.f32 %v2105, %v2184
      %v2239 = vadd.f32 %v2106, %v2189
      %v2240 = vadd.f32 %v2107, %v2192
      %v2241 = vadd.f32 %v2108, %v2197
      %v2242 = vadd.f32 %v2109, %v2200
      %v2243 = vadd.f32 %v2110, %v2205
      %v2244 = vadd.f32 %v2111, %v2208
      %v2245 = vadd.f32 %v2112, %v2213
      %v2246 = vadd.f32 %v2113, %v2216
      %v2247 = vadd.f32 %v2114, %v2221
      %v2248 = vadd.f32 %v2115, %v2224
      %v2249 = vadd.f32 %v2116, %v2229
      %v2250 = vadd.f32 %v2117, %v2232
      %v2251 = vld [vmem:[%s3] sm:$0x1]
      %v2253 = vlaneseq
      %v2254 = vshrl.u32 %v2253, 7
      %v2255 = vsub.s32 0, %v2254
      %v2256 = vrot.slane %v2251, %v2255
      %v2258 = vmul.f32 %v2235, %v2256
      %v2259 = vmul.f32 %v2236, %v2256
      %v2260 = vmul.f32 %v2237, %v2256
      %v2261 = vmul.f32 %v2238, %v2256
      %v2262 = vmul.f32 %v2239, %v2256
      %v2263 = vmul.f32 %v2240, %v2256
      %v2264 = vmul.f32 %v2241, %v2256
      %v2265 = vmul.f32 %v2242, %v2256
      %v2266 = vmul.f32 %v2243, %v2256
      %v2267 = vmul.f32 %v2244, %v2256
      %v2268 = vmul.f32 %v2245, %v2256
      %v2269 = vmul.f32 %v2246, %v2256
      %v2270 = vmul.f32 %v2247, %v2256
      %v2271 = vmul.f32 %v2248, %v2256
      %v2272 = vmul.f32 %v2249, %v2256
      %v2273 = vmul.f32 %v2250, %v2256
      %v2274 = vld [vmem:[%s4] sm:$0x1]
      %v2276 = vlaneseq
      %v2277 = vshrl.u32 %v2276, 7
      %v2278 = vsub.s32 0, %v2277
      %v2279 = vrot.slane %v2274, %v2278
      %v2281 = vadd.f32 %v2258, %v2279
      %v2282 = vadd.f32 %v2259, %v2279
      %v2283 = vadd.f32 %v2260, %v2279
      %v2284 = vadd.f32 %v2261, %v2279
      %v2285 = vadd.f32 %v2262, %v2279
      %v2286 = vadd.f32 %v2263, %v2279
      %v2287 = vadd.f32 %v2264, %v2279
      %v2288 = vadd.f32 %v2265, %v2279
      %v2289 = vadd.f32 %v2266, %v2279
      %v2290 = vadd.f32 %v2267, %v2279
      %v2291 = vadd.f32 %v2268, %v2279
      %v2292 = vadd.f32 %v2269, %v2279
      %v2293 = vadd.f32 %v2270, %v2279
      %v2294 = vadd.f32 %v2271, %v2279
      %v2295 = vadd.f32 %v2272, %v2279
      %v2296 = vadd.f32 %v2273, %v2279
      %v2297 = vmax.f32 %v2281, 0.0
      %v2298 = vmax.f32 %v2282, 0.0
      %v2299 = vmax.f32 %v2283, 0.0
      %v2300 = vmax.f32 %v2284, 0.0
      %v2301 = vmax.f32 %v2285, 0.0
      %v2302 = vmax.f32 %v2286, 0.0
      %v2303 = vmax.f32 %v2287, 0.0
      %v2304 = vmax.f32 %v2288, 0.0
      %v2305 = vmax.f32 %v2289, 0.0
      %v2306 = vmax.f32 %v2290, 0.0
      %v2307 = vmax.f32 %v2291, 0.0
      %v2308 = vmax.f32 %v2292, 0.0
      %v2309 = vmax.f32 %v2293, 0.0
      %v2310 = vmax.f32 %v2294, 0.0
      %v2311 = vmax.f32 %v2295, 0.0
      %v2312 = vmax.f32 %v2296, 0.0
      %v2313 = vpack.c.bf16 %v2298, %v2297
      %v2314 = vpack.c.bf16 %v2300, %v2299
      %v2315 = vpack.c.bf16 %v2302, %v2301
      %v2316 = vpack.c.bf16 %v2304, %v2303
      %v2317 = vpack.c.bf16 %v2306, %v2305
      %v2318 = vpack.c.bf16 %v2308, %v2307
      %v2319 = vpack.c.bf16 %v2310, %v2309
      %v2320 = vpack.c.bf16 %v2312, %v2311
      %v2321 = vld [vmem:[%s5] sm:$0x3]
      %vm2322 = vcmask 31744
      %v2324 = vsel %vm2322, %v2313, 0
      %v2327 = vsel %vm2322, %v2314, 0
      %v2330 = vsel %vm2322, %v2315, 0
      %v2333 = vsel %vm2322, %v2316, 0
      %v2336 = vsel %vm2322, %v2317, 0
      %v2339 = vsel %vm2322, %v2318, 0
      %v2342 = vsel %vm2322, %v2319, 0
      %v2345 = vsel %vm2322, %v2320, 0
      %vm2347 = vcmask 1041408
      %v2349 = vsel %vm2347, %v2321, 0
      %2351 = vmatprep.subr.bf16.mxu0 0
      %2352 = vmatpush1.bf16.msra.mxu0 %v2349
      %2353 = vmatprep.subr.bf16.mxu0 0
      %2354 = vmatpush1.bf16.msra.mxu0 0
      %2355 = vmatprep.subr.bf16.mxu0 0
      %2356 = vmatpush1.bf16.msra.mxu0 0
      %2357 = vmatprep.subr.bf16.mxu0 0
      %2358 = vmatpush1.bf16.msra.mxu0 0
      %2359 = vmatprep.subr.bf16.mxu0 0
      %2360 = vmatpush1.bf16.msra.mxu0 0
      %2361 = vmatprep.subr.bf16.mxu0 0
      %2362 = vmatpush1.bf16.msra.mxu0 0
      %2363 = vmatprep.subr.bf16.mxu0 0
      %2364 = vmatpush1.bf16.msra.mxu0 0
      %2365 = vmatprep.subr.bf16.mxu0 0
      %2366 = vmatpush1.bf16.msra.mxu0 0
      %2367 = vmatprep.subr.bf16.mxu0 0
      %2368 = vmatpush1.bf16.msra.mxu0 0
      %2369 = vmatprep.subr.bf16.mxu0 0
      %2370 = vmatpush1.bf16.msra.mxu0 0
      %2371 = vmatprep.subr.bf16.mxu0 0
      %2372 = vmatpush1.bf16.msra.mxu0 0
      %2373 = vmatprep.subr.bf16.mxu0 0
      %2374 = vmatpush1.bf16.msra.mxu0 0
      %2375 = vmatprep.subr.bf16.mxu0 0
      %2376 = vmatpush1.bf16.msra.mxu0 0
      %2377 = vmatprep.subr.bf16.mxu0 0
      %2378 = vmatpush1.bf16.msra.mxu0 0
      %2379 = vmatprep.subr.bf16.mxu0 0
      %2380 = vmatpush1.bf16.msra.mxu0 0
      %2381 = vmatprep.subr.bf16.mxu0 0
      %2382 = vmatpush1.bf16.msra.mxu0 0
      %2383 = vmatprep.mubr.bf16.mxu0 0
      %2384 = vmatmul.mubr.bf16.gmra.mrb[0].mxu0 %v2324
      %v2385 = vpop.f32.mrb[0].mxu0
      %v2386 = vadd.f32 0.0, %v2385
      %v2387 = vpop.f32.mrb[0].mxu0
      %v2388 = vpop.f32.mrb[0].mxu0
      %v2389 = vadd.f32 0.0, %v2388
      %v2390 = vpop.f32.mrb[0].mxu0
      %2391 = vmatprep.mubr.bf16.mxu0 0
      %2392 = vmatmul.mubr.bf16.gmra.mrb[0].mxu0 %v2327
      %v2393 = vpop.f32.mrb[0].mxu0
      %v2394 = vadd.f32 0.0, %v2393
      %v2395 = vpop.f32.mrb[0].mxu0
      %v2396 = vpop.f32.mrb[0].mxu0
      %v2397 = vadd.f32 0.0, %v2396
      %v2398 = vpop.f32.mrb[0].mxu0
      %2399 = vmatprep.mubr.bf16.mxu0 0
      %2400 = vmatmul.mubr.bf16.gmra.mrb[0].mxu0 %v2330
      %v2401 = vpop.f32.mrb[0].mxu0
      %v2402 = vadd.f32 0.0, %v2401
      %v2403 = vpop.f32.mrb[0].mxu0
      %v2404 = vpop.f32.mrb[0].mxu0
      %v2405 = vadd.f32 0.0, %v2404
      %v2406 = vpop.f32.mrb[0].mxu0
      %2407 = vmatprep.mubr.bf16.mxu0 0
      %2408 = vmatmul.mubr.bf16.gmra.mrb[0].mxu0 %v2333
      %v2409 = vpop.f32.mrb[0].mxu0
      %v2410 = vadd.f32 0.0, %v2409
      %v2411 = vpop.f32.mrb[0].mxu0
      %v2412 = vpop.f32.mrb[0].mxu0
      %v2413 = vadd.f32 0.0, %v2412
      %v2414 = vpop.f32.mrb[0].mxu0
      %2415 = vmatprep.mubr.bf16.mxu0 0
      %2416 = vmatmul.mubr.bf16.gmra.mrb[0].mxu0 %v2336
      %v2417 = vpop.f32.mrb[0].mxu0
      %v2418 = vadd.f32 0.0, %v2417
      %v2419 = vpop.f32.mrb[0].mxu0
      %v2420 = vpop.f32.mrb[0].mxu0
      %v2421 = vadd.f32 0.0, %v2420
      %v2422 = vpop.f32.mrb[0].mxu0
      %2423 = vmatprep.mubr.bf16.mxu0 0
      %2424 = vmatmul.mubr.bf16.gmra.mrb[0].mxu0 %v2339
      %v2425 = vpop.f32.mrb[0].mxu0
      %v2426 = vadd.f32 0.0, %v2425
      %v2427 = vpop.f32.mrb[0].mxu0
      %v2428 = vpop.f32.mrb[0].mxu0
      %v2429 = vadd.f32 0.0, %v2428
      %v2430 = vpop.f32.mrb[0].mxu0
      %2431 = vmatprep.mubr.bf16.mxu0 0
      %2432 = vmatmul.mubr.bf16.gmra.mrb[0].mxu0 %v2342
      %v2433 = vpop.f32.mrb[0].mxu0
      %v2434 = vadd.f32 0.0, %v2433
      %v2435 = vpop.f32.mrb[0].mxu0
      %v2436 = vpop.f32.mrb[0].mxu0
      %v2437 = vadd.f32 0.0, %v2436
      %v2438 = vpop.f32.mrb[0].mxu0
      %2439 = vmatprep.mubr.bf16.mxu0 0
      %2440 = vmatmul.mubr.bf16.gmra.mrb[0].mxu0 %v2345
      %v2441 = vpop.f32.mrb[0].mxu0
      %v2442 = vadd.f32 0.0, %v2441
      %v2443 = vpop.f32.mrb[0].mxu0
      %v2444 = vpop.f32.mrb[0].mxu0
      %v2445 = vadd.f32 0.0, %v2444
      %v2446 = vpop.f32.mrb[0].mxu0
      %2447 = vdwg.mxu0
      %v2448 = vld [vmem:[%s6] sm:$0x1]
      %v2450 = vlaneseq
      %v2451 = vshrl.u32 %v2450, 7
      %v2452 = vsub.s32 0, %v2451
      %v2453 = vrot.slane %v2448, %v2452
      %v2455 = vmul.f32 %v2386, %v2453
      %v2456 = vmul.f32 %v2389, %v2453
      %v2457 = vmul.f32 %v2394, %v2453
      %v2458 = vmul.f32 %v2397, %v2453
      %v2459 = vmul.f32 %v2402, %v2453
      %v2460 = vmul.f32 %v2405, %v2453
      %v2461 = vmul.f32 %v2410, %v2453
      %v2462 = vmul.f32 %v2413, %v2453
      %v2463 = vmul.f32 %v2418, %v2453
      %v2464 = vmul.f32 %v2421, %v2453
      %v2465 = vmul.f32 %v2426, %v2453
      %v2466 = vmul.f32 %v2429, %v2453
      %v2467 = vmul.f32 %v2434, %v2453
      %v2468 = vmul.f32 %v2437, %v2453
      %v2469 = vmul.f32 %v2442, %v2453
      %v2470 = vmul.f32 %v2445, %v2453
      %v2471 = vld [vmem:[%s7] sm:$0x1]
      %v2473 = vlaneseq
      %v2474 = vshrl.u32 %v2473, 7
      %v2475 = vsub.s32 0, %v2474
      %v2476 = vrot.slane %v2471, %v2475
      %v2478 = vadd.f32 %v2455, %v2476
      %v2479 = vadd.f32 %v2456, %v2476
      %v2480 = vadd.f32 %v2457, %v2476
      %v2481 = vadd.f32 %v2458, %v2476
      %v2482 = vadd.f32 %v2459, %v2476
      %v2483 = vadd.f32 %v2460, %v2476
      %v2484 = vadd.f32 %v2461, %v2476
      %v2485 = vadd.f32 %v2462, %v2476
      %v2486 = vadd.f32 %v2463, %v2476
      %v2487 = vadd.f32 %v2464, %v2476
      %v2488 = vadd.f32 %v2465, %v2476
      %v2489 = vadd.f32 %v2466, %v2476
      %v2490 = vadd.f32 %v2467, %v2476
      %v2491 = vadd.f32 %v2468, %v2476
      %v2492 = vadd.f32 %v2469, %v2476
      %v2493 = vadd.f32 %v2470, %v2476
      %v2494 = vmax.f32 %v2478, 0.0
      %v2495 = vmax.f32 %v2479, 0.0
      %v2496 = vmax.f32 %v2480, 0.0
      %v2497 = vmax.f32 %v2481, 0.0
      %v2498 = vmax.f32 %v2482, 0.0
      %v2499 = vmax.f32 %v2483, 0.0
      %v2500 = vmax.f32 %v2484, 0.0
      %v2501 = vmax.f32 %v2485, 0.0
      %v2502 = vmax.f32 %v2486, 0.0
      %v2503 = vmax.f32 %v2487, 0.0
      %v2504 = vmax.f32 %v2488, 0.0
      %v2505 = vmax.f32 %v2489, 0.0
      %v2506 = vmax.f32 %v2490, 0.0
      %v2507 = vmax.f32 %v2491, 0.0
      %v2508 = vmax.f32 %v2492, 0.0
      %v2509 = vmax.f32 %v2493, 0.0
      %v2510 = vld [vmem:[%s8] sm:$0x3]
      %2519 = vrot.lane.b32.xlu0 %v2313, 124
      %v2520 = vpop.permute.xlu0 %2519
      %2521 = vrot.lane.b32.xlu0 %v2314, 124
      %v2522 = vpop.permute.xlu0 %2521
      %2523 = vrot.lane.b32.xlu0 %v2315, 124
      %v2524 = vpop.permute.xlu0 %2523
      %2525 = vrot.lane.b32.xlu0 %v2316, 124
      %v2526 = vpop.permute.xlu0 %2525
      %2527 = vrot.lane.b32.xlu0 %v2317, 124
      %v2528 = vpop.permute.xlu0 %2527
      %2529 = vrot.lane.b32.xlu0 %v2318, 124
      %v2530 = vpop.permute.xlu0 %2529
      %2531 = vrot.lane.b32.xlu0 %v2319, 124
      %v2532 = vpop.permute.xlu0 %2531
      %2533 = vrot.lane.b32.xlu0 %v2320, 124
      %v2534 = vpop.permute.xlu0 %2533
      %v2536 = vsel %vm2322, %v2520, 0
      %v2539 = vsel %vm2322, %v2522, 0
      %v2542 = vsel %vm2322, %v2524, 0
      %v2545 = vsel %vm2322, %v2526, 0
      %v2548 = vsel %vm2322, %v2528, 0
      %v2551 = vsel %vm2322, %v2530, 0
      %v2554 = vsel %vm2322, %v2532, 0
      %v2557 = vsel %vm2322, %v2534, 0
      %v2560 = vsel %vm2347, %v2510, 0
      %2562 = vmatprep.subr.bf16.mxu0 0
      %2563 = vmatpush1.bf16.msra.mxu0 %v2560
      %2564 = vmatprep.subr.bf16.mxu0 0
      %2565 = vmatpush1.bf16.msra.mxu0 0
      %2566 = vmatprep.subr.bf16.mxu0 0
      %2567 = vmatpush1.bf16.msra.mxu0 0
      %2568 = vmatprep.subr.bf16.mxu0 0
      %2569 = vmatpush1.bf16.msra.mxu0 0
      %2570 = vmatprep.subr.bf16.mxu0 0
      %2571 = vmatpush1.bf16.msra.mxu0 0
      %2572 = vmatprep.subr.bf16.mxu0 0
      %2573 = vmatpush1.bf16.msra.mxu0 0
      %2574 = vmatprep.subr.bf16.mxu0 0
      %2575 = vmatpush1.bf16.msra.mxu0 0
      %2576 = vmatprep.subr.bf16.mxu0 0
      %2577 = vmatpush1.bf16.msra.mxu0 0
      %2578 = vmatprep.subr.bf16.mxu0 0
      %2579 = vmatpush1.bf16.msra.mxu0 0
      %2580 = vmatprep.subr.bf16.mxu0 0
      %2581 = vmatpush1.bf16.msra.mxu0 0
      %2582 = vmatprep.subr.bf16.mxu0 0
      %2583 = vmatpush1.bf16.msra.mxu0 0
      %2584 = vmatprep.subr.bf16.mxu0 0
      %2585 = vmatpush1.bf16.msra.mxu0 0
      %2586 = vmatprep.subr.bf16.mxu0 0
      %2587 = vmatpush1.bf16.msra.mxu0 0
      %2588 = vmatprep.subr.bf16.mxu0 0
      %2589 = vmatpush1.bf16.msra.mxu0 0
      %2590 = vmatprep.subr.bf16.mxu0 0
      %2591 = vmatpush1.bf16.msra.mxu0 0
      %2592 = vmatprep.subr.bf16.mxu0 0
      %2593 = vmatpush1.bf16.msra.mxu0 0
      %2594 = vmatprep.mubr.bf16.mxu0 0
      %2595 = vmatmul.mubr.bf16.gmra.mrb[0].mxu0 %v2536
      %v2596 = vpop.f32.mrb[0].mxu0
      %v2597 = vadd.f32 0.0, %v2596
      %v2598 = vpop.f32.mrb[0].mxu0
      %v2599 = vpop.f32.mrb[0].mxu0
      %v2600 = vadd.f32 0.0, %v2599
      %v2601 = vpop.f32.mrb[0].mxu0
      %2602 = vmatprep.mubr.bf16.mxu0 0
      %2603 = vmatmul.mubr.bf16.gmra.mrb[0].mxu0 %v2539
      %v2604 = vpop.f32.mrb[0].mxu0
      %v2605 = vadd.f32 0.0, %v2604
      %v2606 = vpop.f32.mrb[0].mxu0
      %v2607 = vpop.f32.mrb[0].mxu0
      %v2608 = vadd.f32 0.0, %v2607
      %v2609 = vpop.f32.mrb[0].mxu0
      %2610 = vmatprep.mubr.bf16.mxu0 0
      %2611 = vmatmul.mubr.bf16.gmra.mrb[0].mxu0 %v2542
      %v2612 = vpop.f32.mrb[0].mxu0
      %v2613 = vadd.f32 0.0, %v2612
      %v2614 = vpop.f32.mrb[0].mxu0
      %v2615 = vpop.f32.mrb[0].mxu0
      %v2616 = vadd.f32 0.0, %v2615
      %v2617 = vpop.f32.mrb[0].mxu0
      %2618 = vmatprep.mubr.bf16.mxu0 0
      %2619 = vmatmul.mubr.bf16.gmra.mrb[0].mxu0 %v2545
      %v2620 = vpop.f32.mrb[0].mxu0
      %v2621 = vadd.f32 0.0, %v2620
      %v2622 = vpop.f32.mrb[0].mxu0
      %v2623 = vpop.f32.mrb[0].mxu0
      %v2624 = vadd.f32 0.0, %v2623
      %v2625 = vpop.f32.mrb[0].mxu0
      %2626 = vmatprep.mubr.bf16.mxu0 0
      %2627 = vmatmul.mubr.bf16.gmra.mrb[0].mxu0 %v2548
      %v2628 = vpop.f32.mrb[0].mxu0
      %v2629 = vadd.f32 0.0, %v2628
      %v2630 = vpop.f32.mrb[0].mxu0
      %v2631 = vpop.f32.mrb[0].mxu0
      %v2632 = vadd.f32 0.0, %v2631
      %v2633 = vpop.f32.mrb[0].mxu0
      %2634 = vmatprep.mubr.bf16.mxu0 0
      %2635 = vmatmul.mubr.bf16.gmra.mrb[0].mxu0 %v2551
      %v2636 = vpop.f32.mrb[0].mxu0
      %v2637 = vadd.f32 0.0, %v2636
      %v2638 = vpop.f32.mrb[0].mxu0
      %v2639 = vpop.f32.mrb[0].mxu0
      %v2640 = vadd.f32 0.0, %v2639
      %v2641 = vpop.f32.mrb[0].mxu0
      %2642 = vmatprep.mubr.bf16.mxu0 0
      %2643 = vmatmul.mubr.bf16.gmra.mrb[0].mxu0 %v2554
      %v2644 = vpop.f32.mrb[0].mxu0
      %v2645 = vadd.f32 0.0, %v2644
      %v2646 = vpop.f32.mrb[0].mxu0
      %v2647 = vpop.f32.mrb[0].mxu0
      %v2648 = vadd.f32 0.0, %v2647
      %v2649 = vpop.f32.mrb[0].mxu0
      %2650 = vmatprep.mubr.bf16.mxu0 0
      %2651 = vmatmul.mubr.bf16.gmra.mrb[0].mxu0 %v2557
      %v2652 = vpop.f32.mrb[0].mxu0
      %v2653 = vadd.f32 0.0, %v2652
      %v2654 = vpop.f32.mrb[0].mxu0
      %v2655 = vpop.f32.mrb[0].mxu0
      %v2656 = vadd.f32 0.0, %v2655
      %v2657 = vpop.f32.mrb[0].mxu0
      %2658 = vdwg.mxu0
      %v2659 = vld [vmem:[%s9] sm:$0x1]
      %v2661 = vlaneseq
      %v2662 = vshrl.u32 %v2661, 7
      %v2663 = vsub.s32 0, %v2662
      %v2664 = vrot.slane %v2659, %v2663
      %v2666 = vmul.f32 %v2597, %v2664
      %v2667 = vmul.f32 %v2600, %v2664
      %v2668 = vmul.f32 %v2605, %v2664
      %v2669 = vmul.f32 %v2608, %v2664
      %v2670 = vmul.f32 %v2613, %v2664
      %v2671 = vmul.f32 %v2616, %v2664
      %v2672 = vmul.f32 %v2621, %v2664
      %v2673 = vmul.f32 %v2624, %v2664
      %v2674 = vmul.f32 %v2629, %v2664
      %v2675 = vmul.f32 %v2632, %v2664
      %v2676 = vmul.f32 %v2637, %v2664
      %v2677 = vmul.f32 %v2640, %v2664
      %v2678 = vmul.f32 %v2645, %v2664
      %v2679 = vmul.f32 %v2648, %v2664
      %v2680 = vmul.f32 %v2653, %v2664
      %v2681 = vmul.f32 %v2656, %v2664
      %v2682 = vld [vmem:[%s10] sm:$0x1]
      %v2684 = vlaneseq
      %v2685 = vshrl.u32 %v2684, 7
      %v2686 = vsub.s32 0, %v2685
      %v2687 = vrot.slane %v2682, %v2686
      %v2689 = vadd.f32 %v2666, %v2687
      %v2690 = vadd.f32 %v2667, %v2687
      %v2691 = vadd.f32 %v2668, %v2687
      %v2692 = vadd.f32 %v2669, %v2687
      %v2693 = vadd.f32 %v2670, %v2687
      %v2694 = vadd.f32 %v2671, %v2687
      %v2695 = vadd.f32 %v2672, %v2687
      %v2696 = vadd.f32 %v2673, %v2687
      %v2697 = vadd.f32 %v2674, %v2687
      %v2698 = vadd.f32 %v2675, %v2687
      %v2699 = vadd.f32 %v2676, %v2687
      %v2700 = vadd.f32 %v2677, %v2687
      %v2701 = vadd.f32 %v2678, %v2687
      %v2702 = vadd.f32 %v2679, %v2687
      %v2703 = vadd.f32 %v2680, %v2687
      %v2704 = vadd.f32 %v2681, %v2687
      %v2705 = vmax.f32 %v2689, 0.0
      %v2706 = vmax.f32 %v2690, 0.0
      %v2707 = vmax.f32 %v2691, 0.0
      %v2708 = vmax.f32 %v2692, 0.0
      %v2709 = vmax.f32 %v2693, 0.0
      %v2710 = vmax.f32 %v2694, 0.0
      %v2711 = vmax.f32 %v2695, 0.0
      %v2712 = vmax.f32 %v2696, 0.0
      %v2713 = vmax.f32 %v2697, 0.0
      %v2714 = vmax.f32 %v2698, 0.0
      %v2715 = vmax.f32 %v2699, 0.0
      %v2716 = vmax.f32 %v2700, 0.0
      %v2717 = vmax.f32 %v2701, 0.0
      %v2718 = vmax.f32 %v2702, 0.0
      %v2719 = vmax.f32 %v2703, 0.0
      %v2720 = vmax.f32 %v2704, 0.0
      %v2721 = vpack.c.bf16 %v2495, %v2494
      %v2722 = vpack.c.bf16 %v2497, %v2496
      %v2723 = vpack.c.bf16 %v2499, %v2498
      %v2724 = vpack.c.bf16 %v2501, %v2500
      %v2725 = vpack.c.bf16 %v2503, %v2502
      %v2726 = vpack.c.bf16 %v2505, %v2504
      %v2727 = vpack.c.bf16 %v2507, %v2506
      %v2728 = vpack.c.bf16 %v2509, %v2508
      %v2729 = vld [vmem:[%s11] sm:$0xf]
      %v2730 = vld [vmem:[%s11 + $0x4] sm:$0xf]
      %v2731 = vld [vmem:[%s12] sm:$0x1]
      %v2733 = vlaneseq
      %v2734 = vshrl.u32 %v2733, 7
      %v2735 = vsub.s32 0, %v2734
      %v2736 = vrot.slane %v2731, %v2735
      %v2740 = vunpack.c.l.b16 %v2729
      %v2741 = vunpack.c.l.b16 %v2730
      %v2742 = vpack.c.b16 %v2741, %v2740
      %v2745 = vsel %vm910, %v2721, 0
      %v2748 = vsel %vm910, %v2722, 0
      %v2751 = vsel %vm910, %v2723, 0
      %v2754 = vsel %vm910, %v2724, 0
      %v2757 = vsel %vm910, %v2725, 0
      %v2760 = vsel %vm910, %v2726, 0
      %v2763 = vsel %vm910, %v2727, 0
      %v2766 = vsel %vm910, %v2728, 0
      %2768 = vmatprep.subr.bf16.mxu0 0
      %2769 = vmatpush1.bf16.msra.mxu0 %v2742
      %2770 = vmatprep.subr.bf16.mxu0 0
      %2771 = vmatpush1.bf16.msra.mxu0 0
      %2772 = vmatprep.subr.bf16.mxu0 0
      %2773 = vmatpush1.bf16.msra.mxu0 0
      %2774 = vmatprep.subr.bf16.mxu0 0
      %2775 = vmatpush1.bf16.msra.mxu0 0
      %2776 = vmatprep.subr.bf16.mxu0 0
      %2777 = vmatpush1.bf16.msra.mxu0 0
      %2778 = vmatprep.subr.bf16.mxu0 0
      %2779 = vmatpush1.bf16.msra.mxu0 0
      %2780 = vmatprep.subr.bf16.mxu0 0
      %2781 = vmatpush1.bf16.msra.mxu0 0
      %2782 = vmatprep.subr.bf16.mxu0 0
      %2783 = vmatpush1.bf16.msra.mxu0 0
      %2784 = vmatprep.subr.bf16.mxu0 0
      %2785 = vmatpush1.bf16.msra.mxu0 0
      %2786 = vmatprep.subr.bf16.mxu0 0
      %2787 = vmatpush1.bf16.msra.mxu0 0
      %2788 = vmatprep.subr.bf16.mxu0 0
      %2789 = vmatpush1.bf16.msra.mxu0 0
      %2790 = vmatprep.subr.bf16.mxu0 0
      %2791 = vmatpush1.bf16.msra.mxu0 0
      %2792 = vmatprep.subr.bf16.mxu0 0
      %2793 = vmatpush1.bf16.msra.mxu0 0
      %2794 = vmatprep.subr.bf16.mxu0 0
      %2795 = vmatpush1.bf16.msra.mxu0 0
      %2796 = vmatprep.subr.bf16.mxu0 0
      %2797 = vmatpush1.bf16.msra.mxu0 0
      %2798 = vmatprep.subr.bf16.mxu0 0
      %2799 = vmatpush1.bf16.msra.mxu0 0
      %2800 = vmatprep.mubr.bf16.mxu0 0
      %2801 = vmatmul.mubr.bf16.gmra.mrb[0].mxu0 %v2745
      %v2802 = vpop.f32.mrb[0].mxu0
      %v2803 = vadd.f32 %v2736, %v2802
      %v2804 = vpop.f32.mrb[0].mxu0
      %v2805 = vpop.f32.mrb[0].mxu0
      %v2806 = vadd.f32 %v2736, %v2805
      %v2807 = vpop.f32.mrb[0].mxu0
      %2808 = vmatprep.mubr.bf16.mxu0 0
      %2809 = vmatmul.mubr.bf16.gmra.mrb[0].mxu0 %v2748
      %v2810 = vpop.f32.mrb[0].mxu0
      %v2811 = vadd.f32 %v2736, %v2810
      %v2812 = vpop.f32.mrb[0].mxu0
      %v2813 = vpop.f32.mrb[0].mxu0
      %v2814 = vadd.f32 %v2736, %v2813
      %v2815 = vpop.f32.mrb[0].mxu0
      %2816 = vmatprep.mubr.bf16.mxu0 0
      %2817 = vmatmul.mubr.bf16.gmra.mrb[0].mxu0 %v2751
      %v2818 = vpop.f32.mrb[0].mxu0
      %v2819 = vadd.f32 %v2736, %v2818
      %v2820 = vpop.f32.mrb[0].mxu0
      %v2821 = vpop.f32.mrb[0].mxu0
      %v2822 = vadd.f32 %v2736, %v2821
      %v2823 = vpop.f32.mrb[0].mxu0
      %2824 = vmatprep.mubr.bf16.mxu0 0
      %2825 = vmatmul.mubr.bf16.gmra.mrb[0].mxu0 %v2754
      %v2826 = vpop.f32.mrb[0].mxu0
      %v2827 = vadd.f32 %v2736, %v2826
      %v2828 = vpop.f32.mrb[0].mxu0
      %v2829 = vpop.f32.mrb[0].mxu0
      %v2830 = vadd.f32 %v2736, %v2829
      %v2831 = vpop.f32.mrb[0].mxu0
      %2832 = vmatprep.mubr.bf16.mxu0 0
      %2833 = vmatmul.mubr.bf16.gmra.mrb[0].mxu0 %v2757
      %v2834 = vpop.f32.mrb[0].mxu0
      %v2835 = vadd.f32 %v2736, %v2834
      %v2836 = vpop.f32.mrb[0].mxu0
      %v2837 = vpop.f32.mrb[0].mxu0
      %v2838 = vadd.f32 %v2736, %v2837
      %v2839 = vpop.f32.mrb[0].mxu0
      %2840 = vmatprep.mubr.bf16.mxu0 0
      %2841 = vmatmul.mubr.bf16.gmra.mrb[0].mxu0 %v2760
      %v2842 = vpop.f32.mrb[0].mxu0
      %v2843 = vadd.f32 %v2736, %v2842
      %v2844 = vpop.f32.mrb[0].mxu0
      %v2845 = vpop.f32.mrb[0].mxu0
      %v2846 = vadd.f32 %v2736, %v2845
      %v2847 = vpop.f32.mrb[0].mxu0
      %2848 = vmatprep.mubr.bf16.mxu0 0
      %2849 = vmatmul.mubr.bf16.gmra.mrb[0].mxu0 %v2763
      %v2850 = vpop.f32.mrb[0].mxu0
      %v2851 = vadd.f32 %v2736, %v2850
      %v2852 = vpop.f32.mrb[0].mxu0
      %v2853 = vpop.f32.mrb[0].mxu0
      %v2854 = vadd.f32 %v2736, %v2853
      %v2855 = vpop.f32.mrb[0].mxu0
      %2856 = vmatprep.mubr.bf16.mxu0 0
      %2857 = vmatmul.mubr.bf16.gmra.mrb[0].mxu0 %v2766
      %v2858 = vpop.f32.mrb[0].mxu0
      %v2859 = vadd.f32 %v2736, %v2858
      %v2860 = vpop.f32.mrb[0].mxu0
      %v2861 = vpop.f32.mrb[0].mxu0
      %v2862 = vadd.f32 %v2736, %v2861
      %v2863 = vpop.f32.mrb[0].mxu0
      %2864 = vdwg.mxu0
      %v2865 = vxor.u32 %v2803, 2147483648
      %v2866 = vxor.u32 %v2806, 2147483648
      %v2867 = vxor.u32 %v2811, 2147483648
      %v2868 = vxor.u32 %v2814, 2147483648
      %v2869 = vxor.u32 %v2819, 2147483648
      %v2870 = vxor.u32 %v2822, 2147483648
      %v2871 = vxor.u32 %v2827, 2147483648
      %v2872 = vxor.u32 %v2830, 2147483648
      %v2873 = vxor.u32 %v2835, 2147483648
      %v2874 = vxor.u32 %v2838, 2147483648
      %v2875 = vxor.u32 %v2843, 2147483648
      %v2876 = vxor.u32 %v2846, 2147483648
      %v2877 = vxor.u32 %v2851, 2147483648
      %v2878 = vxor.u32 %v2854, 2147483648
      %v2879 = vxor.u32 %v2859, 2147483648
      %v2880 = vxor.u32 %v2862, 2147483648
      %v2881 = vmul.f32 %v2865, 1.442695
      %v2882 = vpow.pop %v2881
      %v2883 = vmul.f32 %v2866, 1.442695
      %v2884 = vpow.pop %v2883
      %v2885 = vmul.f32 %v2867, 1.442695
      %v2886 = vpow.pop %v2885
      %v2887 = vmul.f32 %v2868, 1.442695
      %v2888 = vpow.pop %v2887
      %v2889 = vmul.f32 %v2869, 1.442695
      %v2890 = vpow.pop %v2889
      %v2891 = vmul.f32 %v2870, 1.442695
      %v2892 = vpow.pop %v2891
      %v2893 = vmul.f32 %v2871, 1.442695
      %v2894 = vpow.pop %v2893
      %v2895 = vmul.f32 %v2872, 1.442695
      %v2896 = vpow.pop %v2895
      %v2897 = vmul.f32 %v2873, 1.442695
      %v2898 = vpow.pop %v2897
      %v2899 = vmul.f32 %v2874, 1.442695
      %v2900 = vpow.pop %v2899
      %v2901 = vmul.f32 %v2875, 1.442695
      %v2902 = vpow.pop %v2901
      %v2903 = vmul.f32 %v2876, 1.442695
      %v2904 = vpow.pop %v2903
      %v2905 = vmul.f32 %v2877, 1.442695
      %v2906 = vpow.pop %v2905
      %v2907 = vmul.f32 %v2878, 1.442695
      %v2908 = vpow.pop %v2907
      %v2909 = vmul.f32 %v2879, 1.442695
      %v2910 = vpow.pop %v2909
      %v2911 = vmul.f32 %v2880, 1.442695
      %v2912 = vpow.pop %v2911
      %v2913 = vadd.f32 %v2882, 1.0
      %v2914 = vadd.f32 %v2884, 1.0
      %v2915 = vadd.f32 %v2886, 1.0
      %v2916 = vadd.f32 %v2888, 1.0
      %v2917 = vadd.f32 %v2890, 1.0
      %v2918 = vadd.f32 %v2892, 1.0
      %v2919 = vadd.f32 %v2894, 1.0
      %v2920 = vadd.f32 %v2896, 1.0
      %v2921 = vadd.f32 %v2898, 1.0
      %v2922 = vadd.f32 %v2900, 1.0
      %v2923 = vadd.f32 %v2902, 1.0
      %v2924 = vadd.f32 %v2904, 1.0
      %v2925 = vadd.f32 %v2906, 1.0
      %v2926 = vadd.f32 %v2908, 1.0
      %v2927 = vadd.f32 %v2910, 1.0
      %v2928 = vadd.f32 %v2912, 1.0
      %v2929 = vrcp.pop %v2913
      %v2930 = vmul.f32 1.0, %v2929
      %v2931 = vrcp.pop %v2914
      %v2932 = vmul.f32 1.0, %v2931
      %v2933 = vrcp.pop %v2915
      %v2934 = vmul.f32 1.0, %v2933
      %v2935 = vrcp.pop %v2916
      %v2936 = vmul.f32 1.0, %v2935
      %v2937 = vrcp.pop %v2917
      %v2938 = vmul.f32 1.0, %v2937
      %v2939 = vrcp.pop %v2918
      %v2940 = vmul.f32 1.0, %v2939
      %v2941 = vrcp.pop %v2919
      %v2942 = vmul.f32 1.0, %v2941
      %v2943 = vrcp.pop %v2920
      %v2944 = vmul.f32 1.0, %v2943
      %v2945 = vrcp.pop %v2921
      %v2946 = vmul.f32 1.0, %v2945
      %v2947 = vrcp.pop %v2922
      %v2948 = vmul.f32 1.0, %v2947
      %v2949 = vrcp.pop %v2923
      %v2950 = vmul.f32 1.0, %v2949
      %v2951 = vrcp.pop %v2924
      %v2952 = vmul.f32 1.0, %v2951
      %v2953 = vrcp.pop %v2925
      %v2954 = vmul.f32 1.0, %v2953
      %v2955 = vrcp.pop %v2926
      %v2956 = vmul.f32 1.0, %v2955
      %v2957 = vrcp.pop %v2927
      %v2958 = vmul.f32 1.0, %v2957
      %v2959 = vrcp.pop %v2928
      %v2960 = vmul.f32 1.0, %v2959
      %2961 = vxpose.xlu0.b32.start [1/16] %v2930, 128
      %2962 = vxpose.xlu0.b32.cont [2/16] %v2932, 128
      %2963 = vxpose.xlu0.b32.cont [3/16] %v2934, 128
      %2964 = vxpose.xlu0.b32.cont [4/16] %v2936, 128
      %2965 = vxpose.xlu0.b32.cont [5/16] %v2938, 128
      %2966 = vxpose.xlu0.b32.cont [6/16] %v2940, 128
      %2967 = vxpose.xlu0.b32.cont [7/16] %v2942, 128
      %2968 = vxpose.xlu0.b32.cont [8/16] %v2944, 128
      %2969 = vxpose.xlu0.b32.cont [9/16] %v2946, 128
      %2970 = vxpose.xlu0.b32.cont [10/16] %v2948, 128
      %2971 = vxpose.xlu0.b32.cont [11/16] %v2950, 128
      %2972 = vxpose.xlu0.b32.cont [12/16] %v2952, 128
      %2973 = vxpose.xlu0.b32.cont [13/16] %v2954, 128
      %2974 = vxpose.xlu0.b32.cont [14/16] %v2956, 128
      %2975 = vxpose.xlu0.b32.cont [15/16] %v2958, 128
      %2976 = vxpose.xlu0.b32.end [16/16] %v2960, 128
      %v2977 = vpop.trf.xlu0
      %v2978 = vpop.trf.xlu0
      %v2979 = vpop.trf.xlu0
      %v2980 = vpop.trf.xlu0
      %v2981 = vpop.trf.xlu0
      %v2982 = vpop.trf.xlu0
      %v2983 = vpop.trf.xlu0
      %v2984 = vpop.trf.xlu0
      %v2985 = vpop.trf.xlu0
      %v2986 = vpop.trf.xlu0
      %v2987 = vpop.trf.xlu0
      %v2988 = vpop.trf.xlu0
      %v2989 = vpop.trf.xlu0
      %v2990 = vpop.trf.xlu0
      %v2991 = vpop.trf.xlu0
      %v2992 = vpop.trf.xlu0
      %v2993 = vpack.c.bf16 %v2978, %v2977
      %v2995 = vunpack.c.l.b16 %v2993
      %v2996 = vunpack.c.h.b16 %v2993
      %v2997 = vpack.c.b16 %v2995, %v2995
      %v2998 = vpack.c.b16 %v2996, %v2996
      %vm3001 = vcmask 125952
      %3002 = vst.msk [vmem:[%s627] sm:$0xf] %vm3001, %v2997
      %3003 = vst.msk [vmem:[%s627 + $0x4] sm:$0xf] %vm3001, %v2998
      %3004 = vrot.lane.b32.xlu0 %v2997, 112
      %v3005 = vpop.permute.xlu0 %3004
      %3006 = vrot.lane.b32.xlu0 %v2998, 112
      %v3007 = vpop.permute.xlu0 %3006
      %s3010 = scalar_lea.vmem %s627, 8
      %3011 = vst.msk [vmem:[%s3010] sm:$0xf] %vm3001, %v3005
      %3012 = vst.msk [vmem:[%s3010 + $0x4] sm:$0xf] %vm3001, %v3007
      %3013 = vrot.lane.b32.xlu0 %v2997, 96
      %v3014 = vpop.permute.xlu0 %3013
      %3015 = vrot.lane.b32.xlu0 %v2998, 96
      %v3016 = vpop.permute.xlu0 %3015
      %s3019 = scalar_lea.vmem %s627, 16
      %3020 = vst.msk [vmem:[%s3019] sm:$0xf] %vm3001, %v3014
      %3021 = vst.msk [vmem:[%s3019 + $0x4] sm:$0xf] %vm3001, %v3016
      %3022 = vrot.lane.b32.xlu0 %v2997, 80
      %v3023 = vpop.permute.xlu0 %3022
      %3024 = vrot.lane.b32.xlu0 %v2998, 80
      %v3025 = vpop.permute.xlu0 %3024
      %s3028 = scalar_lea.vmem %s627, 24
      %3029 = vst.msk [vmem:[%s3028] sm:$0xf] %vm3001, %v3023
      %3030 = vst.msk [vmem:[%s3028 + $0x4] sm:$0xf] %vm3001, %v3025
      %3031 = vrot.lane.b32.xlu0 %v2997, 64
      %v3032 = vpop.permute.xlu0 %3031
      %3033 = vrot.lane.b32.xlu0 %v2998, 64
      %v3034 = vpop.permute.xlu0 %3033
      %s3037 = scalar_lea.vmem %s627, 32
      %3038 = vst.msk [vmem:[%s3037] sm:$0xf] %vm3001, %v3032
      %3039 = vst.msk [vmem:[%s3037 + $0x4] sm:$0xf] %vm3001, %v3034
      %3040 = vrot.lane.b32.xlu0 %v2997, 48
      %v3041 = vpop.permute.xlu0 %3040
      %3042 = vrot.lane.b32.xlu0 %v2998, 48
      %v3043 = vpop.permute.xlu0 %3042
      %s3046 = scalar_lea.vmem %s627, 40
      %3047 = vst.msk [vmem:[%s3046] sm:$0xf] %vm3001, %v3041
      %3048 = vst.msk [vmem:[%s3046 + $0x4] sm:$0xf] %vm3001, %v3043
      %3049 = vrot.lane.b32.xlu0 %v2997, 32
      %v3050 = vpop.permute.xlu0 %3049
      %3051 = vrot.lane.b32.xlu0 %v2998, 32
      %v3052 = vpop.permute.xlu0 %3051
      %s3055 = scalar_lea.vmem %s627, 48
      %3056 = vst.msk [vmem:[%s3055] sm:$0xf] %vm3001, %v3050
      %3057 = vst.msk [vmem:[%s3055 + $0x4] sm:$0xf] %vm3001, %v3052
      %3058 = vrot.lane.b32.xlu0 %v2997, 16
      %v3059 = vpop.permute.xlu0 %3058
      %3060 = vrot.lane.b32.xlu0 %v2998, 16
      %v3061 = vpop.permute.xlu0 %3060
      %s3064 = scalar_lea.vmem %s627, 56
      %3065 = vst.msk [vmem:[%s3064] sm:$0xf] %vm3001, %v3059
      %3066 = vst.msk [vmem:[%s3064 + $0x4] sm:$0xf] %vm3001, %v3061
      %v3067 = vld [vmem:[%s13] sm:$0x1]
      %v3069 = vlaneseq
      %v3070 = vshrl.u32 %v3069, 7
      %v3071 = vsub.s32 0, %v3070
      %v3072 = vrot.slane %v3067, %v3071
      %v3074 = vmul.f32 %v2705, %v3072
      %v3075 = vmul.f32 %v2706, %v3072
      %v3076 = vmul.f32 %v2707, %v3072
      %v3077 = vmul.f32 %v2708, %v3072
      %v3078 = vmul.f32 %v2709, %v3072
      %v3079 = vmul.f32 %v2710, %v3072
      %v3080 = vmul.f32 %v2711, %v3072
      %v3081 = vmul.f32 %v2712, %v3072
      %v3082 = vmul.f32 %v2713, %v3072
      %v3083 = vmul.f32 %v2714, %v3072
      %v3084 = vmul.f32 %v2715, %v3072
      %v3085 = vmul.f32 %v2716, %v3072
      %v3086 = vmul.f32 %v2717, %v3072
      %v3087 = vmul.f32 %v2718, %v3072
      %v3088 = vmul.f32 %v2719, %v3072
      %v3089 = vmul.f32 %v2720, %v3072
      %v3090 = vsel %vm910, %v3074, 0.0
      %v3091 = vsel %vm910, %v3075, 0.0
      %v3092 = vadd.f32 %v3090, %v3091
      %v3093 = vsel %vm910, %v3076, 0.0
      %v3094 = vadd.f32 %v3092, %v3093
      %v3095 = vsel %vm910, %v3077, 0.0
      %v3096 = vadd.f32 %v3094, %v3095
      %v3097 = vsel %vm910, %v3078, 0.0
      %v3098 = vadd.f32 %v3096, %v3097
      %v3099 = vsel %vm910, %v3079, 0.0
      %v3100 = vadd.f32 %v3098, %v3099
      %v3101 = vsel %vm910, %v3080, 0.0
      %v3102 = vadd.f32 %v3100, %v3101
      %v3103 = vsel %vm910, %v3081, 0.0
      %v3104 = vadd.f32 %v3102, %v3103
      %v3105 = vsel %vm910, %v3082, 0.0
      %v3106 = vadd.f32 %v3104, %v3105
      %v3107 = vsel %vm910, %v3083, 0.0
      %v3108 = vadd.f32 %v3106, %v3107
      %v3109 = vsel %vm910, %v3084, 0.0
      %v3110 = vadd.f32 %v3108, %v3109
      %v3111 = vsel %vm910, %v3085, 0.0
      %v3112 = vadd.f32 %v3110, %v3111
      %v3113 = vsel %vm910, %v3086, 0.0
      %v3114 = vadd.f32 %v3112, %v3113
      %v3115 = vsel %vm910, %v3087, 0.0
      %v3116 = vadd.f32 %v3114, %v3115
      %v3117 = vsel %vm910, %v3088, 0.0
      %v3118 = vadd.f32 %v3116, %v3117
      %v3119 = vsel %vm910, %v3089, 0.0
      %v3120 = vadd.f32 %v3118, %v3119
      %3121 = vadd.xlane.f32.xlu0 %v3120
      %v3122 = vpop.xlane.xlu0 %3121
      %v3123 = vrot.slane %v3122, 4
      %v3124 = vadd.f32 %v3122, %v3123
      %v3125 = vrot.slane %v3124, 2
      %v3126 = vadd.f32 %v3124, %v3125
      %v3127 = vrot.slane %v3126, 1
      %v3128 = vadd.f32 %v3126, %v3127
      %s3129 = vtos %v3128
      %v3130 = vstv %s3129
      %vm3131 = vcmask 0
      %3132 = vst.msk [vmem:[%s635] sm:$0x1] %vm3131, %v3130
      %s3133 = smul.u32 8, %s32
      %p3134 = scmp.lt.s32.totalorder %s31, 1
      %s3135 = scalar_select %p3134, %s31, 1
      %p3136 = scmp.lt.s32.totalorder %s3133, 15
      %s3137 = scalar_select %p3136, %s3133, 15
      %s3138 = smul.addr %s3137, 2
      %s3139 = smul.addr %s3135, 32
      %s3140 = sadd.s32 %s3138, %s3139
      %s3141 = smul.addr %s3140, 4
      %s3142 = scalar_lea.vmem %s14, %s3141
      %p3143 = scmp.lt.s32.totalorder %s31, 1
      %s3144 = scalar_select %p3143, %s31, 1
      %p3145 = scmp.lt.s32.totalorder %s32, 1
      %s3146 = scalar_select %p3145, %s32, 1
      %s3147 = smul.addr %s3144, 2
      %s3148 = sadd.s32 %s3146, %s3147
      %s3149 = scalar_lea.vmem %s15, %s3148
      // Predicated region
      $region77: #{db_head_forward.2} parent=75 // pred_check
        %p3150 = pneg %p371
      $region78: #{db_head_forward.2} parent=75 // pred_check_branch
        %3152 = sbr.rel (%p3150) target = $region80
      $region79: #{db_head_forward.2} parent=75 // pred_region
        %s3153 = smul.u32 8, %s32
      $region80: #{db_head_forward.2} parent=75 // pred_fallthru
        _
      // Predicated region
      $region81: #{db_head_forward.2} parent=75 // pred_check
        %p3154 = pneg %p399
      $region82: #{db_head_forward.2} parent=75 // pred_check_branch
        %3156 = sbr.rel (%p3154) target = $region84
      $region83: #{db_head_forward.2} parent=75 // pred_region
        _
      $region84: #{db_head_forward.2} parent=75 // pred_fallthru
        _
    $region76: #{db_head_forward.2} parent=5 // pred_fallthru
      _
    %p3157 = scmp.le.s32.totalorder 2, %s22
    // Predicated region
    $region85: #{db_head_forward.2} parent=5 // pred_check
      %p3158 = pneg %p3157
    $region86: #{db_head_forward.2} parent=5 // pred_check_branch
      %3160 = sbr.rel (%p3158) target = $region88
    $region87: #{db_head_forward.2} parent=5 // pred_region
      %s3161 = ssub.s32 %s22, 2
      // Predicated region
      $region89: #{db_head_forward.2} parent=87 // pred_check
        %p3162 = pneg %p377
      $region90: #{db_head_forward.2} parent=87 // pred_check_branch
        %3164 = sbr.rel (%p3162) target = $region92
      $region91: #{db_head_forward.2} parent=87 // pred_region
        %s3165 = smul.u32 8, %s34
        %p3166 = scmp.lt.s32.totalorder %s33, 1
        %s3167 = scalar_select %p3166, %s33, 1
        %p3168 = scmp.lt.s32.totalorder %s3165, 15
        %s3169 = scalar_select %p3168, %s3165, 15
        %s3170 = smul.addr %s3169, 2
        %s3171 = smul.addr %s3167, 32
        %s3172 = sadd.s32 %s3170, %s3171
        %s3173 = smul.addr %s3172, 4
        %s3174 = scalar_lea.vmem %s14, %s3173
      $region92: #{db_head_forward.2} parent=87 // pred_fallthru
        _
      // Predicated region
      $region93: #{db_head_forward.2} parent=87 // pred_check
        %p3175 = pneg %p405
      $region94: #{db_head_forward.2} parent=87 // pred_check_branch
        %3177 = sbr.rel (%p3175) target = $region96
      $region95: #{db_head_forward.2} parent=87 // pred_region
        %p3178 = scmp.lt.s32.totalorder %s33, 1
        %s3179 = scalar_select %p3178, %s33, 1
        %p3180 = scmp.lt.s32.totalorder %s34, 1
        %s3181 = scalar_select %p3180, %s34, 1
        %s3182 = smul.addr %s3179, 2
        %s3183 = sadd.s32 %s3181, %s3182
        %s3184 = scalar_lea.vmem %s15, %s3183
      $region96: #{db_head_forward.2} parent=87 // pred_fallthru
        _
    $region88: #{db_head_forward.2} parent=5 // pred_fallthru
      _
  $region6: #{db_head_forward.2} parent=0 // loop_footer
    %s26 = sadd.s32 1, %s22
  $region7: #{db_head_forward.2} parent=0 // loop_footer_branch
    %21 = sbr.rel target = $region3
  $region8: #{db_head_forward.2} parent=0 // loop_exit
    _

</llo_original>
